<compile_context>
chip_gen: v5e
topology: v5e:2x2
jax: 0.10.0
libtpu: 0.0.40
codegen_flags: <defaults>
</compile_context>

<pallas_src>
import math
import functools

import jax
import jax.numpy as jnp
from jax.experimental import pallas as pl
from jax.experimental.pallas import tpu as pltpu


# ----------------------------- packed-slab layouts -----------------------------

def _slab_layouts(nl, H, PF, out_pad):
    """Static column layouts of the packed weight / bias slabs (used by both
    init_params packing and the kernel unpacking, so they cannot diverge)."""
    w_global, w_layers = {}, []
    c = 0
    w_global["ea_wkv_all"] = (c, nl * 2 * H); c += nl * 2 * H     # hoisted enc K/V, all layers
    for _ in range(nl):
        d = {}
        for name, size in (("sa_wqkv", 3 * H), ("ea_wq", H), ("w1", PF),
                           ("sa_wo", H), ("ea_wo", H)):
            d[name] = (c, size); c += size
        w_layers.append(d)
    w_global["w_out"] = (c, out_pad); c += out_pad                # lane-dense fc_out
    w_global["total"] = c

    b_global, b_layers = {}, []
    c = 0
    b_global["ea_bkv_all"] = (c, nl * 2 * H); c += nl * 2 * H
    for _ in range(nl):
        d = {}
        for name, size in (("sa_bqkv", 3 * H), ("ea_bq", H), ("b1", PF),
                           ("sa_bo", H), ("ea_bo", H), ("b2", H),
                           ("ln_g", H), ("ln_b", H)):
            d[name] = (c, size); c += size
        b_layers.append(d)
    b_global["b_out"] = (c, out_pad); c += out_pad
    b_global["total"] = c
    return w_global, w_layers, b_global, b_layers


# ----------------------------- in-kernel helpers -----------------------------

def _erf(z):
    # TODO(synk): Mosaic has no guaranteed erf lowering; Abramowitz&Stegun 7.1.26
    # rational approximation (|err| <= 1.5e-7) built from EUP exp + approx recip.
    a1, a2, a3, a4, a5 = 0.254829592, -0.284496736, 1.421413741, -1.453152027, 1.061405429
    p = 0.3275911
    s = jnp.where(z >= 0.0, 1.0, -1.0)
    x = z * s                                   # |z|
    t = pl.reciprocal(1.0 + p * x, approx=True)
    poly = ((((a5 * t + a4) * t + a3) * t + a2) * t + a1) * t
    return s * (1.0 - poly * jnp.exp(-x * x))


def _gelu(x):
    # gelu(x) = x * 0.5 * (1 + erf(x / sqrt(2)))  (module's exact form)
    return x * 0.5 * (1.0 + _erf(x * (1.0 / math.sqrt(2.0))))


def _layer_norm(y, g, b, eps=1e-5):
    # nn.LayerNorm over last dim: biased variance, eps=1e-5.
    mu = jnp.mean(y, axis=-1, keepdims=True)
    var = jnp.mean(jnp.square(y - mu), axis=-1, keepdims=True)
    return (y - mu) * jax.lax.rsqrt(var + eps) * g + b


def _mha_core(q2, k2, v2, mask_bias, wo, bo, B, Lq, Lk, n_heads, attn_ref=None):
    """Multi-head attention on already-projected (and pre-scaled) Q/K/V.

    q2/k2/v2 are (B*L, H).  mask_bias is an additive (0 / -1e10) bias of shape
    (B, Lq, Lk) or (B, 1, Lk), shared by all heads.  The output projection is
    folded per head so no head concat/transpose is ever materialized.
    All per-head score matmuls are issued before the softmaxes so the
    independent MXU pushes can pipeline.
    """
    H = q2.shape[-1]
    hd = H // n_heads
    q3 = q2.reshape(B, Lq, H)
    k3 = k2.reshape(B, Lk, H)
    v3 = v2.reshape(B, Lk, H)

    energies = []
    for h in range(n_heads):
        lo, hi = h * hd, (h + 1) * hd
        e = jnp.einsum("bqd,bkd->bqk", q3[:, :, lo:hi], k3[:, :, lo:hi],
                       preferred_element_type=jnp.float32)
        energies.append(e + mask_bias)          # additive mask, broadcast over heads

    out = bo                                    # (1, H) bias, broadcasts on first add
    for h in range(n_heads):
        lo, hi = h * hd, (h + 1) * hd
        e = energies[h]
        m = jnp.max(e, axis=-1, keepdims=True)
        p = jnp.exp(e - m)
        p = p * pl.reciprocal(jnp.sum(p, axis=-1, keepdims=True), approx=True)
        if attn_ref is not None:
            attn_ref[:, h, :, :] = p            # direct (B, n_heads, L, S) layout
        ctx = jnp.einsum("bqk,bkd->bqd", p, v3[:, :, lo:hi],
                         preferred_element_type=jnp.float32).reshape(B * Lq, hd)
        out = out + jnp.dot(ctx, wo[lo:hi, :], preferred_element_type=jnp.float32)
    return out


# ----------------------------- fused decoder kernel -----------------------------

def _decoder_kernel(xe_ref, tbias_ref, sbias_ref, wh_ref, w2_ref, bias_ref,
                    out_ref, attn_ref,
                    *, n_layers, n_heads, B, L, S, H, PF, OUT_PAD):
    wg, wl_all, bg, bl_all = _slab_layouts(n_layers, H, PF, OUT_PAD)

    def W(spec):
        lo, n = spec
        return wh_ref[:, lo:lo + n]

    def Bi(spec):
        lo, n = spec
        return bias_ref[:, lo:lo + n]

    NX = B * L
    x = xe_ref[0:NX, :]                 # (B*L, H)  target activations (VMEM-resident)
    enc = xe_ref[NX:NX + B * S, :]      # (B*S, H)  encoder output
    tbias = tbias_ref[...]              # (B, L, L) additive causal-mask bias
    sbias = sbias_ref[...]              # (B, 1, S) additive source-mask bias

    # loop-invariant encoder K/V projection for ALL layers: one lane-dense matmul
    kv_all = jnp.dot(enc, W(wg["ea_wkv_all"]),
                     preferred_element_type=jnp.float32) + Bi(bg["ea_bkv_all"])

    for li in range(n_layers):
        wl, bl = wl_all[li], bl_all[li]
        g, bt = Bi(bl["ln_g"]), Bi(bl["ln_b"])   # ONE LayerNorm per layer, reused 3x (spec)

        # ---- self attention: fused QKV projection, 1/sqrt(hd) pre-folded into Q ----
        qkv = jnp.dot(x, W(wl["sa_wqkv"]),
                      preferred_element_type=jnp.float32) + Bi(bl["sa_bqkv"])
        sa = _mha_core(qkv[:, :H], qkv[:, H:2 * H], qkv[:, 2 * H:],
                       tbias, W(wl["sa_wo"]), Bi(bl["sa_bo"]),
                       B, L, L, n_heads)
        x = _layer_norm(x + sa, g, bt)

        # ---- encoder attention: Q from x (scale folded), K/V hoisted above ----
        q = jnp.dot(x, W(wl["ea_wq"]),
                    preferred_element_type=jnp.float32) + Bi(bl["ea_bq"])
        kv = kv_all[:, li * 2 * H:(li + 1) * 2 * H]
        ea = _mha_core(q, kv[:, :H], kv[:, H:],
                       sbias, W(wl["ea_wo"]), Bi(bl["ea_bo"]),
                       B, L, S, n_heads,
                       attn_ref=attn_ref if li == n_layers - 1 else None)
        x = _layer_norm(x + ea, g, bt)

        # ---- positionwise feed-forward (RELU_FLAG=False -> exact-gelu path) ----
        h1 = _gelu(jnp.dot(x, W(wl["w1"]),
                           preferred_element_type=jnp.float32) + Bi(bl["b1"]))
        ff = jnp.dot(h1, w2_ref[:, li * H:(li + 1) * H],
                     preferred_element_type=jnp.float32) + Bi(bl["b2"])
        x = _layer_norm(x + ff, g, bt)

    # lane-dense (padded-to-OUT_PAD) fc_out: unmasked full-lane store
    out_ref[...] = jnp.dot(x, W(wg["w_out"]),
                           preferred_element_type=jnp.float32) + Bi(bg["b_out"])


# ----------------------------- wrapper -----------------------------

def decoder_forward(params, trg_tokens, enc_src, trg_mask, src_mask,
                    *, n_heads, n_layers, out_dim, out_pad=128):
    B, L = trg_tokens.shape
    S = enc_src.shape[1]
    H = params["tok_emb"].shape[1]
    PF = params["w2s"].shape[0]

    # embeddings (gather is glue), dropout = identity (eval mode)
    pos = jnp.arange(L)
    tok = jnp.take(params["tok_emb"], trg_tokens, axis=0)          # (B, L, H)
    pe = jnp.take(params["pos_emb"], pos, axis=0)[None, :, :]      # (1, L, H)
    x0 = (tok * math.sqrt(H) + pe).reshape(B * L, H)

    # one activation blob: [target activations ; encoder output]
    xe = jnp.concatenate([x0, enc_src.reshape(B * S, H)], axis=0)  # (B*L+B*S, H)

    # additive mask biases (computed once; heads broadcast in-kernel)
    tbias = jnp.where(trg_mask == 0, jnp.float32(-1e10),
                      jnp.float32(0.0)).reshape(B, L, L)
    Lm = src_mask.shape[2]                                          # 1 (or L)
    sbias = jnp.where(src_mask == 0, jnp.float32(-1e10),
                      jnp.float32(0.0)).reshape(B, Lm, S)

    kernel = functools.partial(_decoder_kernel, n_layers=n_layers, n_heads=n_heads,
                               B=B, L=L, S=S, H=H, PF=PF, OUT_PAD=out_pad)
    vmem = pl.BlockSpec(memory_space=pltpu.MemorySpace.VMEM)

    # advisory cost estimate so XLA schedules the gather/mask prep around the call
    flops = n_layers * (2 * B * L * H * 3 * H + 2 * B * L * H * H
                        + 4 * B * L * L * H + 4 * B * L * S * H
                        + 4 * B * L * H * H + 4 * B * L * H * PF
                        + 4 * B * S * H * H) + 2 * B * L * H * out_pad
    transcendentals = n_layers * (B * L * L * n_heads + B * L * S * n_heads
                                  + 2 * B * L * PF)
    operands = (xe, tbias, sbias, params["wh"], params["w2s"], params["bias"])
    bytes_accessed = sum(int(a.size) * 4 for a in operands) \
        + B * L * out_pad * 4 + B * n_heads * L * S * 4

    out_padded, attn = pl.pallas_call(
        kernel,
        out_shape=(jax.ShapeDtypeStruct((B * L, out_pad), jnp.float32),
                   jax.ShapeDtypeStruct((B, n_heads, L, S), jnp.float32)),
        in_specs=[vmem] * 6,
        out_specs=(vmem, vmem),
        cost_estimate=pl.CostEstimate(flops=flops,
                                      transcendentals=transcendentals,
                                      bytes_accessed=bytes_accessed),
    )(*operands)

    out = out_padded[:, :out_dim].reshape(B, L, out_dim)
    return out, attn


# ----------------------------- pure-JAX reference -----------------------------

def _ref_ln(y, g, b, eps=1e-5):
    mu = y.mean(-1, keepdims=True)
    var = ((y - mu) ** 2).mean(-1, keepdims=True)
    return (y - mu) / jnp.sqrt(var + eps) * g + b


def _ref_attention(Q, K, V, mask, wo, bo, n_heads):
    B, Lq, H = Q.shape
    Lk = K.shape[1]
    hd = H // n_heads
    sp = lambda t, Lt: t.reshape(B, Lt, n_heads, hd).transpose(0, 2, 1, 3)
    Qh, Kh, Vh = sp(Q, Lq), sp(K, Lk), sp(V, Lk)
    e = jnp.einsum("bhqd,bhkd->bhqk", Qh, Kh) / math.sqrt(hd)
    e = jnp.where(mask == 0.0, -1e10, e)
    a = jax.nn.softmax(e, axis=-1)
    ctx = jnp.einsum("bhqk,bhkd->bhqd", a, Vh).transpose(0, 2, 1, 3).reshape(B, Lq, H)
    return ctx @ wo + bo, a


def decoder_forward_ref(ref_params, trg_tokens, enc_src, trg_mask, src_mask, n_heads):
    B, L = trg_tokens.shape
    H = ref_params["tok_emb"].shape[1]
    pos = jnp.arange(L)
    x = jnp.take(ref_params["tok_emb"], trg_tokens, axis=0) * math.sqrt(H) \
        + jnp.take(ref_params["pos_emb"], pos, axis=0)[None]
    attn = None
    for lp in ref_params["layers"]:
        g, bt = lp["ln_g"], lp["ln_b"]
        sa, _ = _ref_attention(x @ lp["sa_wq"] + lp["sa_bq"],
                               x @ lp["sa_wk"] + lp["sa_bk"],
                               x @ lp["sa_wv"] + lp["sa_bv"],
                               trg_mask, lp["sa_wo"], lp["sa_bo"], n_heads)
        x = _ref_ln(x + sa, g, bt)
        ea, attn = _ref_attention(x @ lp["ea_wq"] + lp["ea_bq"],
                                  enc_src @ lp["ea_wk"] + lp["ea_bk"],
                                  enc_src @ lp["ea_wv"] + lp["ea_bv"],
                                  src_mask, lp["ea_wo"], lp["ea_bo"], n_heads)
        x = _ref_ln(x + ea, g, bt)
        h1 = x @ lp["w1"] + lp["b1"]
        h1 = h1 * 0.5 * (1.0 + jax.scipy.special.erf(h1 / math.sqrt(2.0)))
        x = _ref_ln(x + (h1 @ lp["w2"] + lp["b2"]), g, bt)
    out = x @ ref_params["w_out"] + ref_params["b_out"]
    return out, attn


# ----------------------------- parameter init / packing -----------------------------

def _dense(key, fan_in, fan_out):
    k1, k2 = jax.random.split(key)
    w = jax.random.normal(k1, (fan_in, fan_out), jnp.float32) * 0.02
    b = jax.random.normal(k2, (fan_out,), jnp.float32) * 0.02
    return w, b


def init_params(key, output_dim, hid_dim, n_layers, n_heads, pf_dim,
                max_length=80, out_pad=128):
    assert n_layers >= 1 and hid_dim % n_heads == 0 and output_dim <= out_pad
    H, PF, nl = hid_dim, pf_dim, n_layers
    inv_scale = 1.0 / math.sqrt(H // n_heads)   # folded into Q weights/biases

    keys = jax.random.split(key, 3 + nl)
    tok_emb = jax.random.normal(keys[0], (output_dim, H), jnp.float32) * 0.02
    pos_emb = jax.random.normal(keys[1], (max_length, H), jnp.float32) * 0.02
    w_out, b_out = _dense(keys[2], H, output_dim)

    ref = {"tok_emb": tok_emb, "pos_emb": pos_emb,
           "w_out": w_out, "b_out": b_out, "layers": []}

    wg, wl_all, bg, bl_all = _slab_layouts(nl, H, PF, out_pad)
    wh = jnp.zeros((H, wg["total"]), jnp.float32)
    bs = jnp.zeros((1, bg["total"]), jnp.float32)
    w2s = jnp.zeros((PF, nl * H), jnp.float32)

    def put_w(slab, spec, arr):
        lo, n = spec
        return slab.at[:, lo:lo + n].set(arr)

    def put_b(slab, spec, arr):
        lo, n = spec
        return slab.at[:, lo:lo + n].set(arr.reshape(1, n))

    for li in range(nl):
        lk = jax.random.split(keys[3 + li], 10)
        wq, bq = _dense(lk[0], H, H); wk, bk = _dense(lk[1], H, H)
        wv, bv = _dense(lk[2], H, H); wo, bo = _dense(lk[3], H, H)
        ewq, ebq = _dense(lk[4], H, H); ewk, ebk = _dense(lk[5], H, H)
        ewv, ebv = _dense(lk[6], H, H); ewo, ebo = _dense(lk[7], H, H)
        w1, b1 = _dense(lk[8], H, PF); w2, b2 = _dense(lk[9], PF, H)
        ln_g = jnp.ones((H,), jnp.float32); ln_b = jnp.zeros((H,), jnp.float32)

        ref["layers"].append(dict(
            sa_wq=wq, sa_bq=bq, sa_wk=wk, sa_bk=bk, sa_wv=wv, sa_bv=bv,
            sa_wo=wo, sa_bo=bo,
            ea_wq=ewq, ea_bq=ebq, ea_wk=ewk, ea_bk=ebk, ea_wv=ewv, ea_bv=ebv,
            ea_wo=ewo, ea_bo=ebo,
            w1=w1, b1=b1, w2=w2, b2=b2, ln_g=ln_g, ln_b=ln_b))

        wl, bl = wl_all[li], bl_all[li]
        # self attention (fused QKV, 1/sqrt(hd) folded into the Q block)
        wh = put_w(wh, wl["sa_wqkv"], jnp.concatenate([wq * inv_scale, wk, wv], axis=1))
        bs = put_b(bs, bl["sa_bqkv"], jnp.concatenate([bq * inv_scale, bk, bv]))
        wh = put_w(wh, wl["sa_wo"], wo); bs = put_b(bs, bl["sa_bo"], bo)
        # encoder attention: Q (scale folded); K/V go into the hoisted contiguous block
        wh = put_w(wh, wl["ea_wq"], ewq * inv_scale)
        bs = put_b(bs, bl["ea_bq"], ebq * inv_scale)
        kvlo = wg["ea_wkv_all"][0]
        wh = wh.at[:, kvlo + li * 2 * H: kvlo + (li + 1) * 2 * H].set(
            jnp.concatenate([ewk, ewv], axis=1))
        bkvlo = bg["ea_bkv_all"][0]
        bs = bs.at[:, bkvlo + li * 2 * H: bkvlo + (li + 1) * 2 * H].set(
            jnp.concatenate([ebk, ebv]).reshape(1, 2 * H))
        wh = put_w(wh, wl["ea_wo"], ewo); bs = put_b(bs, bl["ea_bo"], ebo)
        # feed-forward + shared LayerNorm
        wh = put_w(wh, wl["w1"], w1); bs = put_b(bs, bl["b1"], b1)
        w2s = w2s.at[:, li * H:(li + 1) * H].set(w2)
        bs = put_b(bs, bl["b2"], b2)
        bs = put_b(bs, bl["ln_g"], ln_g); bs = put_b(bs, bl["ln_b"], ln_b)

    # lane-dense fc_out: zero-padded to out_pad columns
    wh = wh.at[:, wg["w_out"][0]: wg["w_out"][0] + output_dim].set(w_out)
    bs = bs.at[:, bg["b_out"][0]: bg["b_out"][0] + output_dim].set(
        b_out.reshape(1, output_dim))

    kernel_params = {"tok_emb": tok_emb, "pos_emb": pos_emb,
                     "wh": wh, "w2s": w2s, "bias": bs}
    return kernel_params, ref


# ----------------------------- main -----------------------------

if __name__ == "__main__":
    OUTPUT_DIM = 12
    HID_DIM = 32
    N_LAYERS = 2
    N_HEADS = 4
    PF_DIM = 64
    MAX_LEN = 80

    B = 2
    TRG_LEN = 8
    SRC_LEN = 10

    root = jax.random.PRNGKey(0)
    k_par, k_trg, k_enc = jax.random.split(root, 3)

    kparams, ref_params = init_params(k_par, OUTPUT_DIM, HID_DIM, N_LAYERS,
                                      N_HEADS, PF_DIM, MAX_LEN)

    trg = jax.random.randint(k_trg, (B, TRG_LEN), 0, OUTPUT_DIM, dtype=jnp.int32)
    enc_src = jax.random.normal(k_enc, (B, SRC_LEN, HID_DIM), jnp.float32)

    # masks: causal target mask (B,1,L,L), all-ones source mask (B,1,1,S)
    trg_mask = jnp.tril(jnp.ones((TRG_LEN, TRG_LEN), jnp.float32))[None, None, :, :]
    trg_mask = jnp.broadcast_to(trg_mask, (B, 1, TRG_LEN, TRG_LEN))
    src_mask = jnp.ones((B, 1, 1, SRC_LEN), jnp.float32)

    fwd = jax.jit(decoder_forward, static_argnames=("n_heads", "n_layers", "out_dim"))
    out, attn = fwd(kparams, trg, enc_src, trg_mask, src_mask,
                    n_heads=N_HEADS, n_layers=N_LAYERS, out_dim=OUTPUT_DIM)
    out = jax.block_until_ready(out)
    attn = jax.block_until_ready(attn)

    assert out.shape == (B, TRG_LEN, OUTPUT_DIM)
    assert attn.shape == (B, N_HEADS, TRG_LEN, SRC_LEN)

    # correctness check against a pure-JAX reference of the PyTorch module
    out_ref, attn_ref = decoder_forward_ref(ref_params, trg, enc_src,
                                            trg_mask, src_mask, N_HEADS)
    assert jnp.allclose(out, out_ref, atol=5e-3, rtol=5e-2), \
        float(jnp.max(jnp.abs(out - out_ref)))
    assert jnp.allclose(attn, attn_ref, atol=5e-3, rtol=5e-2), \
        float(jnp.max(jnp.abs(attn - attn_ref)))

    print("KERNEL_OK")
</pallas_src>

<mosaic_0001>
module attributes {stable_mosaic.version = 11 : i64} {
  func.func @_decoder_kernel(%arg0: memref<36x32xf32, #tpu.memory_space<vmem>>, %arg1: memref<2x8x8xf32, #tpu.memory_space<vmem>>, %arg2: memref<2x1x10xf32, #tpu.memory_space<vmem>>, %arg3: memref<32x768xf32, #tpu.memory_space<vmem>>, %arg4: memref<64x64xf32, #tpu.memory_space<vmem>>, %arg5: memref<1x960xf32, #tpu.memory_space<vmem>>, %arg6: memref<16x128xf32, #tpu.memory_space<vmem>>, %arg7: memref<2x4x8x10xf32, #tpu.memory_space<vmem>>) attributes {dimension_semantics = [], scalar_prefetch = 0 : i64, scratch_operands = 0 : i64, tpu.core_type = #tpu.core_type<tc>} {
    %c0 = arith.constant 0 : index
    %c0_0 = arith.constant 0 : index
    %0 = vector.load %arg0[%c0, %c0_0] : memref<36x32xf32, #tpu.memory_space<vmem>>, vector<16x32xf32>
    %c16 = arith.constant 16 : index
    %c0_1 = arith.constant 0 : index
    %1 = vector.load %arg0[%c16, %c0_1] : memref<36x32xf32, #tpu.memory_space<vmem>>, vector<20x32xf32>
    %c0_2 = arith.constant 0 : index
    %c0_3 = arith.constant 0 : index
    %c0_4 = arith.constant 0 : index
    %2 = vector.load %arg1[%c0_2, %c0_3, %c0_4] : memref<2x8x8xf32, #tpu.memory_space<vmem>>, vector<2x8x8xf32>
    %c0_5 = arith.constant 0 : index
    %c0_6 = arith.constant 0 : index
    %c0_7 = arith.constant 0 : index
    %3 = vector.load %arg2[%c0_5, %c0_6, %c0_7] : memref<2x1x10xf32, #tpu.memory_space<vmem>>, vector<2x1x10xf32>
    %c0_8 = arith.constant 0 : index
    %c0_9 = arith.constant 0 : index
    %4 = vector.load %arg3[%c0_8, %c0_9] : memref<32x768xf32, #tpu.memory_space<vmem>>, vector<32x128xf32>
    %cst = arith.constant dense<0.000000e+00> : vector<20x128xf32>
    %5 = tpu.matmul %1, %4, %cst {dimension_numbers = #tpu.dot_dimension_numbers<[1], [0], [0], [1], [0, 0, 1, 1], [], []>} : vector<20x32xf32>, vector<32x128xf32>, vector<20x128xf32> -> vector<20x128xf32>
    %c0_10 = arith.constant 0 : index
    %c0_11 = arith.constant 0 : index
    %6 = vector.load %arg5[%c0_10, %c0_11] : memref<1x960xf32, #tpu.memory_space<vmem>>, vector<1x128xf32>
    %7 = vector.broadcast %6 : vector<1x128xf32> to vector<20x128xf32>
    %8 = arith.addf %5, %7 : vector<20x128xf32>
    %c0_12 = arith.constant 0 : index
    %c416 = arith.constant 416 : index
    %9 = vector.load %arg5[%c0_12, %c416] : memref<1x960xf32, #tpu.memory_space<vmem>>, vector<1x32xf32>
    %c0_13 = arith.constant 0 : index
    %c448 = arith.constant 448 : index
    %10 = vector.load %arg5[%c0_13, %c448] : memref<1x960xf32, #tpu.memory_space<vmem>>, vector<1x32xf32>
    %c0_14 = arith.constant 0 : index
    %c128 = arith.constant 128 : index
    %11 = vector.load %arg3[%c0_14, %c128] : memref<32x768xf32, #tpu.memory_space<vmem>>, vector<32x96xf32>
    %cst_15 = arith.constant dense<0.000000e+00> : vector<16x96xf32>
    %12 = tpu.matmul %0, %11, %cst_15 {dimension_numbers = #tpu.dot_dimension_numbers<[1], [0], [0], [1], [0, 0, 1, 1], [], []>} : vector<16x32xf32>, vector<32x96xf32>, vector<16x96xf32> -> vector<16x96xf32>
    %c0_16 = arith.constant 0 : index
    %c128_17 = arith.constant 128 : index
    %13 = vector.load %arg5[%c0_16, %c128_17] : memref<1x960xf32, #tpu.memory_space<vmem>>, vector<1x96xf32>
    %14 = vector.broadcast %13 : vector<1x96xf32> to vector<16x96xf32>
    %15 = arith.addf %12, %14 : vector<16x96xf32>
    %16 = vector.extract_strided_slice %15 {offsets = [0, 0], sizes = [16, 32], strides = [1, 1]} : vector<16x96xf32> to vector<16x32xf32>
    %17 = vector.extract_strided_slice %15 {offsets = [0, 32], sizes = [16, 32], strides = [1, 1]} : vector<16x96xf32> to vector<16x32xf32>
    %18 = vector.extract_strided_slice %15 {offsets = [0, 64], sizes = [16, 32], strides = [1, 1]} : vector<16x96xf32> to vector<16x32xf32>
    %c0_18 = arith.constant 0 : index
    %c320 = arith.constant 320 : index
    %19 = vector.load %arg3[%c0_18, %c320] : memref<32x768xf32, #tpu.memory_space<vmem>>, vector<32x32xf32>
    %c0_19 = arith.constant 0 : index
    %c320_20 = arith.constant 320 : index
    %20 = vector.load %arg5[%c0_19, %c320_20] : memref<1x960xf32, #tpu.memory_space<vmem>>, vector<1x32xf32>
    %21 = vector.shape_cast %16 : vector<16x32xf32> to vector<2x8x32xf32>
    %22 = vector.shape_cast %17 : vector<16x32xf32> to vector<2x8x32xf32>
    %23 = vector.shape_cast %18 : vector<16x32xf32> to vector<2x8x32xf32>
    %24 = vector.extract_strided_slice %21 {offsets = [0, 0, 0], sizes = [2, 8, 8], strides = [1, 1, 1]} : vector<2x8x32xf32> to vector<2x8x8xf32>
    %25 = vector.extract_strided_slice %22 {offsets = [0, 0, 0], sizes = [2, 8, 8], strides = [1, 1, 1]} : vector<2x8x32xf32> to vector<2x8x8xf32>
    "tpu.trace_start"() <{level = 10 : i32, message = "bqd,bkd->bqk"}> : () -> ()
    %cst_21 = arith.constant dense<0.000000e+00> : vector<2x8x8xf32>
    %26 = tpu.matmul %24, %25, %cst_21 {dimension_numbers = #tpu.dot_dimension_numbers<[2], [2], [1], [1], [0, 0, 0, 1, 1, 1], [0], [0]>} : vector<2x8x8xf32>, vector<2x8x8xf32>, vector<2x8x8xf32> -> vector<2x8x8xf32>
    "tpu.trace_stop"() : () -> ()
    %27 = arith.addf %26, %2 : vector<2x8x8xf32>
    %28 = vector.extract_strided_slice %21 {offsets = [0, 0, 8], sizes = [2, 8, 8], strides = [1, 1, 1]} : vector<2x8x32xf32> to vector<2x8x8xf32>
    %29 = vector.extract_strided_slice %22 {offsets = [0, 0, 8], sizes = [2, 8, 8], strides = [1, 1, 1]} : vector<2x8x32xf32> to vector<2x8x8xf32>
    "tpu.trace_start"() <{level = 10 : i32, message = "bqd,bkd->bqk"}> : () -> ()
    %cst_22 = arith.constant dense<0.000000e+00> : vector<2x8x8xf32>
    %30 = tpu.matmul %28, %29, %cst_22 {dimension_numbers = #tpu.dot_dimension_numbers<[2], [2], [1], [1], [0, 0, 0, 1, 1, 1], [0], [0]>} : vector<2x8x8xf32>, vector<2x8x8xf32>, vector<2x8x8xf32> -> vector<2x8x8xf32>
    "tpu.trace_stop"() : () -> ()
    %31 = arith.addf %30, %2 : vector<2x8x8xf32>
    %32 = vector.extract_strided_slice %21 {offsets = [0, 0, 16], sizes = [2, 8, 8], strides = [1, 1, 1]} : vector<2x8x32xf32> to vector<2x8x8xf32>
    %33 = vector.extract_strided_slice %22 {offsets = [0, 0, 16], sizes = [2, 8, 8], strides = [1, 1, 1]} : vector<2x8x32xf32> to vector<2x8x8xf32>
    "tpu.trace_start"() <{level = 10 : i32, message = "bqd,bkd->bqk"}> : () -> ()
    %cst_23 = arith.constant dense<0.000000e+00> : vector<2x8x8xf32>
    %34 = tpu.matmul %32, %33, %cst_23 {dimension_numbers = #tpu.dot_dimension_numbers<[2], [2], [1], [1], [0, 0, 0, 1, 1, 1], [0], [0]>} : vector<2x8x8xf32>, vector<2x8x8xf32>, vector<2x8x8xf32> -> vector<2x8x8xf32>
    "tpu.trace_stop"() : () -> ()
    %35 = arith.addf %34, %2 : vector<2x8x8xf32>
    %36 = vector.extract_strided_slice %21 {offsets = [0, 0, 24], sizes = [2, 8, 8], strides = [1, 1, 1]} : vector<2x8x32xf32> to vector<2x8x8xf32>
    %37 = vector.extract_strided_slice %22 {offsets = [0, 0, 24], sizes = [2, 8, 8], strides = [1, 1, 1]} : vector<2x8x32xf32> to vector<2x8x8xf32>
    "tpu.trace_start"() <{level = 10 : i32, message = "bqd,bkd->bqk"}> : () -> ()
    %cst_24 = arith.constant dense<0.000000e+00> : vector<2x8x8xf32>
    %38 = tpu.matmul %36, %37, %cst_24 {dimension_numbers = #tpu.dot_dimension_numbers<[2], [2], [1], [1], [0, 0, 0, 1, 1, 1], [0], [0]>} : vector<2x8x8xf32>, vector<2x8x8xf32>, vector<2x8x8xf32> -> vector<2x8x8xf32>
    "tpu.trace_stop"() : () -> ()
    %39 = arith.addf %38, %2 : vector<2x8x8xf32>
    %cst_25 = arith.constant dense<0xFF800000> : vector<2x8xf32>
    %40 = vector.multi_reduction <maximumf>, %27, %cst_25 [2] : vector<2x8x8xf32> to vector<2x8xf32>
    %41 = vector.shape_cast %40 : vector<2x8xf32> to vector<2x8x1xf32>
    %42 = vector.broadcast %41 : vector<2x8x1xf32> to vector<2x8x8xf32>
    %43 = arith.subf %27, %42 : vector<2x8x8xf32>
    %44 = math.exp %43 : vector<2x8x8xf32>
    %cst_26 = arith.constant dense<0.000000e+00> : vector<2x8xf32>
    %45 = vector.multi_reduction <add>, %44, %cst_26 [2] : vector<2x8x8xf32> to vector<2x8xf32>
    %46 = vector.shape_cast %45 : vector<2x8xf32> to vector<2x8x1xf32>
    %47 = tpu.reciprocal %46 {approx = true} : vector<2x8x1xf32> -> vector<2x8x1xf32>
    %48 = vector.broadcast %47 : vector<2x8x1xf32> to vector<2x8x8xf32>
    %49 = arith.mulf %44, %48 : vector<2x8x8xf32>
    %50 = vector.extract_strided_slice %23 {offsets = [0, 0, 0], sizes = [2, 8, 8], strides = [1, 1, 1]} : vector<2x8x32xf32> to vector<2x8x8xf32>
    "tpu.trace_start"() <{level = 10 : i32, message = "bqk,bkd->bqd"}> : () -> ()
    %cst_27 = arith.constant dense<0.000000e+00> : vector<2x8x8xf32>
    %51 = tpu.matmul %49, %50, %cst_27 {dimension_numbers = #tpu.dot_dimension_numbers<[2], [1], [1], [2], [0, 0, 0, 1, 1, 2], [0], [0]>} : vector<2x8x8xf32>, vector<2x8x8xf32>, vector<2x8x8xf32> -> vector<2x8x8xf32>
    "tpu.trace_stop"() : () -> ()
    %52 = vector.shape_cast %51 : vector<2x8x8xf32> to vector<16x8xf32>
    %53 = vector.extract_strided_slice %19 {offsets = [0, 0], sizes = [8, 32], strides = [1, 1]} : vector<32x32xf32> to vector<8x32xf32>
    %cst_28 = arith.constant dense<0.000000e+00> : vector<16x32xf32>
    %54 = tpu.matmul %52, %53, %cst_28 {dimension_numbers = #tpu.dot_dimension_numbers<[1], [0], [0], [1], [0, 0, 1, 1], [], []>} : vector<16x8xf32>, vector<8x32xf32>, vector<16x32xf32> -> vector<16x32xf32>
    %55 = vector.broadcast %20 : vector<1x32xf32> to vector<16x32xf32>
    %56 = arith.addf %55, %54 : vector<16x32xf32>
    %cst_29 = arith.constant dense<0xFF800000> : vector<2x8xf32>
    %57 = vector.multi_reduction <maximumf>, %31, %cst_29 [2] : vector<2x8x8xf32> to vector<2x8xf32>
    %58 = vector.shape_cast %57 : vector<2x8xf32> to vector<2x8x1xf32>
    %59 = vector.broadcast %58 : vector<2x8x1xf32> to vector<2x8x8xf32>
    %60 = arith.subf %31, %59 : vector<2x8x8xf32>
    %61 = math.exp %60 : vector<2x8x8xf32>
    %cst_30 = arith.constant dense<0.000000e+00> : vector<2x8xf32>
    %62 = vector.multi_reduction <add>, %61, %cst_30 [2] : vector<2x8x8xf32> to vector<2x8xf32>
    %63 = vector.shape_cast %62 : vector<2x8xf32> to vector<2x8x1xf32>
    %64 = tpu.reciprocal %63 {approx = true} : vector<2x8x1xf32> -> vector<2x8x1xf32>
    %65 = vector.broadcast %64 : vector<2x8x1xf32> to vector<2x8x8xf32>
    %66 = arith.mulf %61, %65 : vector<2x8x8xf32>
    %67 = vector.extract_strided_slice %23 {offsets = [0, 0, 8], sizes = [2, 8, 8], strides = [1, 1, 1]} : vector<2x8x32xf32> to vector<2x8x8xf32>
    "tpu.trace_start"() <{level = 10 : i32, message = "bqk,bkd->bqd"}> : () -> ()
    %cst_31 = arith.constant dense<0.000000e+00> : vector<2x8x8xf32>
    %68 = tpu.matmul %66, %67, %cst_31 {dimension_numbers = #tpu.dot_dimension_numbers<[2], [1], [1], [2], [0, 0, 0, 1, 1, 2], [0], [0]>} : vector<2x8x8xf32>, vector<2x8x8xf32>, vector<2x8x8xf32> -> vector<2x8x8xf32>
    "tpu.trace_stop"() : () -> ()
    %69 = vector.shape_cast %68 : vector<2x8x8xf32> to vector<16x8xf32>
    %70 = vector.extract_strided_slice %19 {offsets = [8, 0], sizes = [8, 32], strides = [1, 1]} : vector<32x32xf32> to vector<8x32xf32>
    %cst_32 = arith.constant dense<0.000000e+00> : vector<16x32xf32>
    %71 = tpu.matmul %69, %70, %cst_32 {dimension_numbers = #tpu.dot_dimension_numbers<[1], [0], [0], [1], [0, 0, 1, 1], [], []>} : vector<16x8xf32>, vector<8x32xf32>, vector<16x32xf32> -> vector<16x32xf32>
    %72 = arith.addf %56, %71 : vector<16x32xf32>
    %cst_33 = arith.constant dense<0xFF800000> : vector<2x8xf32>
    %73 = vector.multi_reduction <maximumf>, %35, %cst_33 [2] : vector<2x8x8xf32> to vector<2x8xf32>
    %74 = vector.shape_cast %73 : vector<2x8xf32> to vector<2x8x1xf32>
    %75 = vector.broadcast %74 : vector<2x8x1xf32> to vector<2x8x8xf32>
    %76 = arith.subf %35, %75 : vector<2x8x8xf32>
    %77 = math.exp %76 : vector<2x8x8xf32>
    %cst_34 = arith.constant dense<0.000000e+00> : vector<2x8xf32>
    %78 = vector.multi_reduction <add>, %77, %cst_34 [2] : vector<2x8x8xf32> to vector<2x8xf32>
    %79 = vector.shape_cast %78 : vector<2x8xf32> to vector<2x8x1xf32>
    %80 = tpu.reciprocal %79 {approx = true} : vector<2x8x1xf32> -> vector<2x8x1xf32>
    %81 = vector.broadcast %80 : vector<2x8x1xf32> to vector<2x8x8xf32>
    %82 = arith.mulf %77, %81 : vector<2x8x8xf32>
    %83 = vector.extract_strided_slice %23 {offsets = [0, 0, 16], sizes = [2, 8, 8], strides = [1, 1, 1]} : vector<2x8x32xf32> to vector<2x8x8xf32>
    "tpu.trace_start"() <{level = 10 : i32, message = "bqk,bkd->bqd"}> : () -> ()
    %cst_35 = arith.constant dense<0.000000e+00> : vector<2x8x8xf32>
    %84 = tpu.matmul %82, %83, %cst_35 {dimension_numbers = #tpu.dot_dimension_numbers<[2], [1], [1], [2], [0, 0, 0, 1, 1, 2], [0], [0]>} : vector<2x8x8xf32>, vector<2x8x8xf32>, vector<2x8x8xf32> -> vector<2x8x8xf32>
    "tpu.trace_stop"() : () -> ()
    %85 = vector.shape_cast %84 : vector<2x8x8xf32> to vector<16x8xf32>
    %86 = vector.extract_strided_slice %19 {offsets = [16, 0], sizes = [8, 32], strides = [1, 1]} : vector<32x32xf32> to vector<8x32xf32>
    %cst_36 = arith.constant dense<0.000000e+00> : vector<16x32xf32>
    %87 = tpu.matmul %85, %86, %cst_36 {dimension_numbers = #tpu.dot_dimension_numbers<[1], [0], [0], [1], [0, 0, 1, 1], [], []>} : vector<16x8xf32>, vector<8x32xf32>, vector<16x32xf32> -> vector<16x32xf32>
    %88 = arith.addf %72, %87 : vector<16x32xf32>
    %cst_37 = arith.constant dense<0xFF800000> : vector<2x8xf32>
    %89 = vector.multi_reduction <maximumf>, %39, %cst_37 [2] : vector<2x8x8xf32> to vector<2x8xf32>
    %90 = vector.shape_cast %89 : vector<2x8xf32> to vector<2x8x1xf32>
    %91 = vector.broadcast %90 : vector<2x8x1xf32> to vector<2x8x8xf32>
    %92 = arith.subf %39, %91 : vector<2x8x8xf32>
    %93 = math.exp %92 : vector<2x8x8xf32>
    %cst_38 = arith.constant dense<0.000000e+00> : vector<2x8xf32>
    %94 = vector.multi_reduction <add>, %93, %cst_38 [2] : vector<2x8x8xf32> to vector<2x8xf32>
    %95 = vector.shape_cast %94 : vector<2x8xf32> to vector<2x8x1xf32>
    %96 = tpu.reciprocal %95 {approx = true} : vector<2x8x1xf32> -> vector<2x8x1xf32>
    %97 = vector.broadcast %96 : vector<2x8x1xf32> to vector<2x8x8xf32>
    %98 = arith.mulf %93, %97 : vector<2x8x8xf32>
    %99 = vector.extract_strided_slice %23 {offsets = [0, 0, 24], sizes = [2, 8, 8], strides = [1, 1, 1]} : vector<2x8x32xf32> to vector<2x8x8xf32>
    "tpu.trace_start"() <{level = 10 : i32, message = "bqk,bkd->bqd"}> : () -> ()
    %cst_39 = arith.constant dense<0.000000e+00> : vector<2x8x8xf32>
    %100 = tpu.matmul %98, %99, %cst_39 {dimension_numbers = #tpu.dot_dimension_numbers<[2], [1], [1], [2], [0, 0, 0, 1, 1, 2], [0], [0]>} : vector<2x8x8xf32>, vector<2x8x8xf32>, vector<2x8x8xf32> -> vector<2x8x8xf32>
    "tpu.trace_stop"() : () -> ()
    %101 = vector.shape_cast %100 : vector<2x8x8xf32> to vector<16x8xf32>
    %102 = vector.extract_strided_slice %19 {offsets = [24, 0], sizes = [8, 32], strides = [1, 1]} : vector<32x32xf32> to vector<8x32xf32>
    %cst_40 = arith.constant dense<0.000000e+00> : vector<16x32xf32>
    %103 = tpu.matmul %101, %102, %cst_40 {dimension_numbers = #tpu.dot_dimension_numbers<[1], [0], [0], [1], [0, 0, 1, 1], [], []>} : vector<16x8xf32>, vector<8x32xf32>, vector<16x32xf32> -> vector<16x32xf32>
    %104 = arith.addf %88, %103 : vector<16x32xf32>
    %105 = arith.addf %0, %104 : vector<16x32xf32>
    %cst_41 = arith.constant dense<0.000000e+00> : vector<16xf32>
    %106 = vector.multi_reduction <add>, %105, %cst_41 [1] : vector<16x32xf32> to vector<16xf32>
    %107 = vector.shape_cast %106 : vector<16xf32> to vector<16x1xf32>
    %cst_42 = arith.constant 3.200000e+01 : f32
    %108 = vector.broadcast %cst_42 : f32 to vector<16x1xf32>
    %109 = arith.divf %107, %108 : vector<16x1xf32>
    %110 = vector.broadcast %109 : vector<16x1xf32> to vector<16x32xf32>
    %111 = arith.subf %105, %110 : vector<16x32xf32>
    %112 = arith.mulf %111, %111 : vector<16x32xf32>
    %cst_43 = arith.constant dense<0.000000e+00> : vector<16xf32>
    %113 = vector.multi_reduction <add>, %112, %cst_43 [1] : vector<16x32xf32> to vector<16xf32>
    %114 = vector.shape_cast %113 : vector<16xf32> to vector<16x1xf32>
    %cst_44 = arith.constant 3.200000e+01 : f32
    %115 = vector.broadcast %cst_44 : f32 to vector<16x1xf32>
    %116 = arith.divf %114, %115 : vector<16x1xf32>
    %117 = vector.broadcast %109 : vector<16x1xf32> to vector<16x32xf32>
    %118 = arith.subf %105, %117 : vector<16x32xf32>
    %cst_45 = arith.constant 9.99999974E-6 : f32
    %119 = vector.broadcast %cst_45 : f32 to vector<16x1xf32>
    %120 = arith.addf %116, %119 : vector<16x1xf32>
    %121 = math.rsqrt %120 : vector<16x1xf32>
    %122 = vector.broadcast %121 : vector<16x1xf32> to vector<16x32xf32>
    %123 = arith.mulf %118, %122 : vector<16x32xf32>
    %124 = vector.broadcast %9 : vector<1x32xf32> to vector<16x32xf32>
    %125 = arith.mulf %123, %124 : vector<16x32xf32>
    %126 = vector.broadcast %10 : vector<1x32xf32> to vector<16x32xf32>
    %127 = arith.addf %125, %126 : vector<16x32xf32>
    %c0_46 = arith.constant 0 : index
    %c224 = arith.constant 224 : index
    %128 = vector.load %arg3[%c0_46, %c224] : memref<32x768xf32, #tpu.memory_space<vmem>>, vector<32x32xf32>
    %cst_47 = arith.constant dense<0.000000e+00> : vector<16x32xf32>
    %129 = tpu.matmul %127, %128, %cst_47 {dimension_numbers = #tpu.dot_dimension_numbers<[1], [0], [0], [1], [0, 0, 1, 1], [], []>} : vector<16x32xf32>, vector<32x32xf32>, vector<16x32xf32> -> vector<16x32xf32>
    %c0_48 = arith.constant 0 : index
    %c224_49 = arith.constant 224 : index
    %130 = vector.load %arg5[%c0_48, %c224_49] : memref<1x960xf32, #tpu.memory_space<vmem>>, vector<1x32xf32>
    %131 = vector.broadcast %130 : vector<1x32xf32> to vector<16x32xf32>
    %132 = arith.addf %129, %131 : vector<16x32xf32>
    %133 = vector.extract_strided_slice %8 {offsets = [0, 0], sizes = [20, 64], strides = [1, 1]} : vector<20x128xf32> to vector<20x64xf32>
    %134 = vector.extract_strided_slice %133 {offsets = [0, 0], sizes = [20, 32], strides = [1, 1]} : vector<20x64xf32> to vector<20x32xf32>
    %135 = vector.extract_strided_slice %133 {offsets = [0, 32], sizes = [20, 32], strides = [1, 1]} : vector<20x64xf32> to vector<20x32xf32>
    %c0_50 = arith.constant 0 : index
    %c352 = arith.constant 352 : index
    %136 = vector.load %arg3[%c0_50, %c352] : memref<32x768xf32, #tpu.memory_space<vmem>>, vector<32x32xf32>
    %c0_51 = arith.constant 0 : index
    %c352_52 = arith.constant 352 : index
    %137 = vector.load %arg5[%c0_51, %c352_52] : memref<1x960xf32, #tpu.memory_space<vmem>>, vector<1x32xf32>
    %138 = vector.shape_cast %132 : vector<16x32xf32> to vector<2x8x32xf32>
    %139 = vector.shape_cast %134 : vector<20x32xf32> to vector<2x10x32xf32>
    %140 = vector.shape_cast %135 : vector<20x32xf32> to vector<2x10x32xf32>
    %141 = vector.extract_strided_slice %138 {offsets = [0, 0, 0], sizes = [2, 8, 8], strides = [1, 1, 1]} : vector<2x8x32xf32> to vector<2x8x8xf32>
    %142 = vector.extract_strided_slice %139 {offsets = [0, 0, 0], sizes = [2, 10, 8], strides = [1, 1, 1]} : vector<2x10x32xf32> to vector<2x10x8xf32>
    "tpu.trace_start"() <{level = 10 : i32, message = "bqd,bkd->bqk"}> : () -> ()
    %cst_53 = arith.constant dense<0.000000e+00> : vector<2x8x10xf32>
    %143 = tpu.matmul %141, %142, %cst_53 {dimension_numbers = #tpu.dot_dimension_numbers<[2], [2], [1], [1], [0, 0, 0, 1, 1, 1], [0], [0]>} : vector<2x8x8xf32>, vector<2x10x8xf32>, vector<2x8x10xf32> -> vector<2x8x10xf32>
    "tpu.trace_stop"() : () -> ()
    %144 = vector.broadcast %3 : vector<2x1x10xf32> to vector<2x8x10xf32>
    %145 = arith.addf %143, %144 : vector<2x8x10xf32>
    %146 = vector.extract_strided_slice %138 {offsets = [0, 0, 8], sizes = [2, 8, 8], strides = [1, 1, 1]} : vector<2x8x32xf32> to vector<2x8x8xf32>
    %147 = vector.extract_strided_slice %139 {offsets = [0, 0, 8], sizes = [2, 10, 8], strides = [1, 1, 1]} : vector<2x10x32xf32> to vector<2x10x8xf32>
    "tpu.trace_start"() <{level = 10 : i32, message = "bqd,bkd->bqk"}> : () -> ()
    %cst_54 = arith.constant dense<0.000000e+00> : vector<2x8x10xf32>
    %148 = tpu.matmul %146, %147, %cst_54 {dimension_numbers = #tpu.dot_dimension_numbers<[2], [2], [1], [1], [0, 0, 0, 1, 1, 1], [0], [0]>} : vector<2x8x8xf32>, vector<2x10x8xf32>, vector<2x8x10xf32> -> vector<2x8x10xf32>
    "tpu.trace_stop"() : () -> ()
    %149 = vector.broadcast %3 : vector<2x1x10xf32> to vector<2x8x10xf32>
    %150 = arith.addf %148, %149 : vector<2x8x10xf32>
    %151 = vector.extract_strided_slice %138 {offsets = [0, 0, 16], sizes = [2, 8, 8], strides = [1, 1, 1]} : vector<2x8x32xf32> to vector<2x8x8xf32>
    %152 = vector.extract_strided_slice %139 {offsets = [0, 0, 16], sizes = [2, 10, 8], strides = [1, 1, 1]} : vector<2x10x32xf32> to vector<2x10x8xf32>
    "tpu.trace_start"() <{level = 10 : i32, message = "bqd,bkd->bqk"}> : () -> ()
    %cst_55 = arith.constant dense<0.000000e+00> : vector<2x8x10xf32>
    %153 = tpu.matmul %151, %152, %cst_55 {dimension_numbers = #tpu.dot_dimension_numbers<[2], [2], [1], [1], [0, 0, 0, 1, 1, 1], [0], [0]>} : vector<2x8x8xf32>, vector<2x10x8xf32>, vector<2x8x10xf32> -> vector<2x8x10xf32>
    "tpu.trace_stop"() : () -> ()
    %154 = vector.broadcast %3 : vector<2x1x10xf32> to vector<2x8x10xf32>
    %155 = arith.addf %153, %154 : vector<2x8x10xf32>
    %156 = vector.extract_strided_slice %138 {offsets = [0, 0, 24], sizes = [2, 8, 8], strides = [1, 1, 1]} : vector<2x8x32xf32> to vector<2x8x8xf32>
    %157 = vector.extract_strided_slice %139 {offsets = [0, 0, 24], sizes = [2, 10, 8], strides = [1, 1, 1]} : vector<2x10x32xf32> to vector<2x10x8xf32>
    "tpu.trace_start"() <{level = 10 : i32, message = "bqd,bkd->bqk"}> : () -> ()
    %cst_56 = arith.constant dense<0.000000e+00> : vector<2x8x10xf32>
    %158 = tpu.matmul %156, %157, %cst_56 {dimension_numbers = #tpu.dot_dimension_numbers<[2], [2], [1], [1], [0, 0, 0, 1, 1, 1], [0], [0]>} : vector<2x8x8xf32>, vector<2x10x8xf32>, vector<2x8x10xf32> -> vector<2x8x10xf32>
    "tpu.trace_stop"() : () -> ()
    %159 = vector.broadcast %3 : vector<2x1x10xf32> to vector<2x8x10xf32>
    %160 = arith.addf %158, %159 : vector<2x8x10xf32>
    %cst_57 = arith.constant dense<0xFF800000> : vector<2x8xf32>
    %161 = vector.multi_reduction <maximumf>, %145, %cst_57 [2] : vector<2x8x10xf32> to vector<2x8xf32>
    %162 = vector.shape_cast %161 : vector<2x8xf32> to vector<2x8x1xf32>
    %163 = vector.broadcast %162 : vector<2x8x1xf32> to vector<2x8x10xf32>
    %164 = arith.subf %145, %163 : vector<2x8x10xf32>
    %165 = math.exp %164 : vector<2x8x10xf32>
    %cst_58 = arith.constant dense<0.000000e+00> : vector<2x8xf32>
    %166 = vector.multi_reduction <add>, %165, %cst_58 [2] : vector<2x8x10xf32> to vector<2x8xf32>
    %167 = vector.shape_cast %166 : vector<2x8xf32> to vector<2x8x1xf32>
    %168 = tpu.reciprocal %167 {approx = true} : vector<2x8x1xf32> -> vector<2x8x1xf32>
    %169 = vector.broadcast %168 : vector<2x8x1xf32> to vector<2x8x10xf32>
    %170 = arith.mulf %165, %169 : vector<2x8x10xf32>
    %171 = vector.extract_strided_slice %140 {offsets = [0, 0, 0], sizes = [2, 10, 8], strides = [1, 1, 1]} : vector<2x10x32xf32> to vector<2x10x8xf32>
    "tpu.trace_start"() <{level = 10 : i32, message = "bqk,bkd->bqd"}> : () -> ()
    %cst_59 = arith.constant dense<0.000000e+00> : vector<2x8x8xf32>
    %172 = tpu.matmul %170, %171, %cst_59 {dimension_numbers = #tpu.dot_dimension_numbers<[2], [1], [1], [2], [0, 0, 0, 1, 1, 2], [0], [0]>} : vector<2x8x10xf32>, vector<2x10x8xf32>, vector<2x8x8xf32> -> vector<2x8x8xf32>
    "tpu.trace_stop"() : () -> ()
    %173 = vector.shape_cast %172 : vector<2x8x8xf32> to vector<16x8xf32>
    %174 = vector.extract_strided_slice %136 {offsets = [0, 0], sizes = [8, 32], strides = [1, 1]} : vector<32x32xf32> to vector<8x32xf32>
    %cst_60 = arith.constant dense<0.000000e+00> : vector<16x32xf32>
    %175 = tpu.matmul %173, %174, %cst_60 {dimension_numbers = #tpu.dot_dimension_numbers<[1], [0], [0], [1], [0, 0, 1, 1], [], []>} : vector<16x8xf32>, vector<8x32xf32>, vector<16x32xf32> -> vector<16x32xf32>
    %176 = vector.broadcast %137 : vector<1x32xf32> to vector<16x32xf32>
    %177 = arith.addf %176, %175 : vector<16x32xf32>
    %cst_61 = arith.constant dense<0xFF800000> : vector<2x8xf32>
    %178 = vector.multi_reduction <maximumf>, %150, %cst_61 [2] : vector<2x8x10xf32> to vector<2x8xf32>
    %179 = vector.shape_cast %178 : vector<2x8xf32> to vector<2x8x1xf32>
    %180 = vector.broadcast %179 : vector<2x8x1xf32> to vector<2x8x10xf32>
    %181 = arith.subf %150, %180 : vector<2x8x10xf32>
    %182 = math.exp %181 : vector<2x8x10xf32>
    %cst_62 = arith.constant dense<0.000000e+00> : vector<2x8xf32>
    %183 = vector.multi_reduction <add>, %182, %cst_62 [2] : vector<2x8x10xf32> to vector<2x8xf32>
    %184 = vector.shape_cast %183 : vector<2x8xf32> to vector<2x8x1xf32>
    %185 = tpu.reciprocal %184 {approx = true} : vector<2x8x1xf32> -> vector<2x8x1xf32>
    %186 = vector.broadcast %185 : vector<2x8x1xf32> to vector<2x8x10xf32>
    %187 = arith.mulf %182, %186 : vector<2x8x10xf32>
    %188 = vector.extract_strided_slice %140 {offsets = [0, 0, 8], sizes = [2, 10, 8], strides = [1, 1, 1]} : vector<2x10x32xf32> to vector<2x10x8xf32>
    "tpu.trace_start"() <{level = 10 : i32, message = "bqk,bkd->bqd"}> : () -> ()
    %cst_63 = arith.constant dense<0.000000e+00> : vector<2x8x8xf32>
    %189 = tpu.matmul %187, %188, %cst_63 {dimension_numbers = #tpu.dot_dimension_numbers<[2], [1], [1], [2], [0, 0, 0, 1, 1, 2], [0], [0]>} : vector<2x8x10xf32>, vector<2x10x8xf32>, vector<2x8x8xf32> -> vector<2x8x8xf32>
    "tpu.trace_stop"() : () -> ()
    %190 = vector.shape_cast %189 : vector<2x8x8xf32> to vector<16x8xf32>
    %191 = vector.extract_strided_slice %136 {offsets = [8, 0], sizes = [8, 32], strides = [1, 1]} : vector<32x32xf32> to vector<8x32xf32>
    %cst_64 = arith.constant dense<0.000000e+00> : vector<16x32xf32>
    %192 = tpu.matmul %190, %191, %cst_64 {dimension_numbers = #tpu.dot_dimension_numbers<[1], [0], [0], [1], [0, 0, 1, 1], [], []>} : vector<16x8xf32>, vector<8x32xf32>, vector<16x32xf32> -> vector<16x32xf32>
    %193 = arith.addf %177, %192 : vector<16x32xf32>
    %cst_65 = arith.constant dense<0xFF800000> : vector<2x8xf32>
    %194 = vector.multi_reduction <maximumf>, %155, %cst_65 [2] : vector<2x8x10xf32> to vector<2x8xf32>
    %195 = vector.shape_cast %194 : vector<2x8xf32> to vector<2x8x1xf32>
    %196 = vector.broadcast %195 : vector<2x8x1xf32> to vector<2x8x10xf32>
    %197 = arith.subf %155, %196 : vector<2x8x10xf32>
    %198 = math.exp %197 : vector<2x8x10xf32>
    %cst_66 = arith.constant dense<0.000000e+00> : vector<2x8xf32>
    %199 = vector.multi_reduction <add>, %198, %cst_66 [2] : vector<2x8x10xf32> to vector<2x8xf32>
    %200 = vector.shape_cast %199 : vector<2x8xf32> to vector<2x8x1xf32>
    %201 = tpu.reciprocal %200 {approx = true} : vector<2x8x1xf32> -> vector<2x8x1xf32>
    %202 = vector.broadcast %201 : vector<2x8x1xf32> to vector<2x8x10xf32>
    %203 = arith.mulf %198, %202 : vector<2x8x10xf32>
    %204 = vector.extract_strided_slice %140 {offsets = [0, 0, 16], sizes = [2, 10, 8], strides = [1, 1, 1]} : vector<2x10x32xf32> to vector<2x10x8xf32>
    "tpu.trace_start"() <{level = 10 : i32, message = "bqk,bkd->bqd"}> : () -> ()
    %cst_67 = arith.constant dense<0.000000e+00> : vector<2x8x8xf32>
    %205 = tpu.matmul %203, %204, %cst_67 {dimension_numbers = #tpu.dot_dimension_numbers<[2], [1], [1], [2], [0, 0, 0, 1, 1, 2], [0], [0]>} : vector<2x8x10xf32>, vector<2x10x8xf32>, vector<2x8x8xf32> -> vector<2x8x8xf32>
    "tpu.trace_stop"() : () -> ()
    %206 = vector.shape_cast %205 : vector<2x8x8xf32> to vector<16x8xf32>
    %207 = vector.extract_strided_slice %136 {offsets = [16, 0], sizes = [8, 32], strides = [1, 1]} : vector<32x32xf32> to vector<8x32xf32>
    %cst_68 = arith.constant dense<0.000000e+00> : vector<16x32xf32>
    %208 = tpu.matmul %206, %207, %cst_68 {dimension_numbers = #tpu.dot_dimension_numbers<[1], [0], [0], [1], [0, 0, 1, 1], [], []>} : vector<16x8xf32>, vector<8x32xf32>, vector<16x32xf32> -> vector<16x32xf32>
    %209 = arith.addf %193, %208 : vector<16x32xf32>
    %cst_69 = arith.constant dense<0xFF800000> : vector<2x8xf32>
    %210 = vector.multi_reduction <maximumf>, %160, %cst_69 [2] : vector<2x8x10xf32> to vector<2x8xf32>
    %211 = vector.shape_cast %210 : vector<2x8xf32> to vector<2x8x1xf32>
    %212 = vector.broadcast %211 : vector<2x8x1xf32> to vector<2x8x10xf32>
    %213 = arith.subf %160, %212 : vector<2x8x10xf32>
    %214 = math.exp %213 : vector<2x8x10xf32>
    %cst_70 = arith.constant dense<0.000000e+00> : vector<2x8xf32>
    %215 = vector.multi_reduction <add>, %214, %cst_70 [2] : vector<2x8x10xf32> to vector<2x8xf32>
    %216 = vector.shape_cast %215 : vector<2x8xf32> to vector<2x8x1xf32>
    %217 = tpu.reciprocal %216 {approx = true} : vector<2x8x1xf32> -> vector<2x8x1xf32>
    %218 = vector.broadcast %217 : vector<2x8x1xf32> to vector<2x8x10xf32>
    %219 = arith.mulf %214, %218 : vector<2x8x10xf32>
    %220 = vector.extract_strided_slice %140 {offsets = [0, 0, 24], sizes = [2, 10, 8], strides = [1, 1, 1]} : vector<2x10x32xf32> to vector<2x10x8xf32>
    "tpu.trace_start"() <{level = 10 : i32, message = "bqk,bkd->bqd"}> : () -> ()
    %cst_71 = arith.constant dense<0.000000e+00> : vector<2x8x8xf32>
    %221 = tpu.matmul %219, %220, %cst_71 {dimension_numbers = #tpu.dot_dimension_numbers<[2], [1], [1], [2], [0, 0, 0, 1, 1, 2], [0], [0]>} : vector<2x8x10xf32>, vector<2x10x8xf32>, vector<2x8x8xf32> -> vector<2x8x8xf32>
    "tpu.trace_stop"() : () -> ()
    %222 = vector.shape_cast %221 : vector<2x8x8xf32> to vector<16x8xf32>
    %223 = vector.extract_strided_slice %136 {offsets = [24, 0], sizes = [8, 32], strides = [1, 1]} : vector<32x32xf32> to vector<8x32xf32>
    %cst_72 = arith.constant dense<0.000000e+00> : vector<16x32xf32>
    %224 = tpu.matmul %222, %223, %cst_72 {dimension_numbers = #tpu.dot_dimension_numbers<[1], [0], [0], [1], [0, 0, 1, 1], [], []>} : vector<16x8xf32>, vector<8x32xf32>, vector<16x32xf32> -> vector<16x32xf32>
    %225 = arith.addf %209, %224 : vector<16x32xf32>
    %226 = arith.addf %127, %225 : vector<16x32xf32>
    %cst_73 = arith.constant dense<0.000000e+00> : vector<16xf32>
    %227 = vector.multi_reduction <add>, %226, %cst_73 [1] : vector<16x32xf32> to vector<16xf32>
    %228 = vector.shape_cast %227 : vector<16xf32> to vector<16x1xf32>
    %cst_74 = arith.constant 3.200000e+01 : f32
    %229 = vector.broadcast %cst_74 : f32 to vector<16x1xf32>
    %230 = arith.divf %228, %229 : vector<16x1xf32>
    %231 = vector.broadcast %230 : vector<16x1xf32> to vector<16x32xf32>
    %232 = arith.subf %226, %231 : vector<16x32xf32>
    %233 = arith.mulf %232, %232 : vector<16x32xf32>
    %cst_75 = arith.constant dense<0.000000e+00> : vector<16xf32>
    %234 = vector.multi_reduction <add>, %233, %cst_75 [1] : vector<16x32xf32> to vector<16xf32>
    %235 = vector.shape_cast %234 : vector<16xf32> to vector<16x1xf32>
    %cst_76 = arith.constant 3.200000e+01 : f32
    %236 = vector.broadcast %cst_76 : f32 to vector<16x1xf32>
    %237 = arith.divf %235, %236 : vector<16x1xf32>
    %238 = vector.broadcast %230 : vector<16x1xf32> to vector<16x32xf32>
    %239 = arith.subf %226, %238 : vector<16x32xf32>
    %cst_77 = arith.constant 9.99999974E-6 : f32
    %240 = vector.broadcast %cst_77 : f32 to vector<16x1xf32>
    %241 = arith.addf %237, %240 : vector<16x1xf32>
    %242 = math.rsqrt %241 : vector<16x1xf32>
    %243 = vector.broadcast %242 : vector<16x1xf32> to vector<16x32xf32>
    %244 = arith.mulf %239, %243 : vector<16x32xf32>
    %245 = vector.broadcast %9 : vector<1x32xf32> to vector<16x32xf32>
    %246 = arith.mulf %244, %245 : vector<16x32xf32>
    %247 = vector.broadcast %10 : vector<1x32xf32> to vector<16x32xf32>
    %248 = arith.addf %246, %247 : vector<16x32xf32>
    %c0_78 = arith.constant 0 : index
    %c256 = arith.constant 256 : index
    %249 = vector.load %arg3[%c0_78, %c256] : memref<32x768xf32, #tpu.memory_space<vmem>>, vector<32x64xf32>
    %cst_79 = arith.constant dense<0.000000e+00> : vector<16x64xf32>
    %250 = tpu.matmul %248, %249, %cst_79 {dimension_numbers = #tpu.dot_dimension_numbers<[1], [0], [0], [1], [0, 0, 1, 1], [], []>} : vector<16x32xf32>, vector<32x64xf32>, vector<16x64xf32> -> vector<16x64xf32>
    %c0_80 = arith.constant 0 : index
    %c256_81 = arith.constant 256 : index
    %251 = vector.load %arg5[%c0_80, %c256_81] : memref<1x960xf32, #tpu.memory_space<vmem>>, vector<1x64xf32>
    %252 = vector.broadcast %251 : vector<1x64xf32> to vector<16x64xf32>
    %253 = arith.addf %250, %252 : vector<16x64xf32>
    %cst_82 = arith.constant 5.000000e-01 : f32
    %254 = vector.broadcast %cst_82 : f32 to vector<16x64xf32>
    %255 = arith.mulf %253, %254 : vector<16x64xf32>
    %cst_83 = arith.constant 0.707106769 : f32
    %256 = vector.broadcast %cst_83 : f32 to vector<16x64xf32>
    %257 = arith.mulf %253, %256 : vector<16x64xf32>
    %cst_84 = arith.constant 0.000000e+00 : f32
    %258 = vector.broadcast %cst_84 : f32 to vector<16x64xf32>
    %259 = arith.cmpf oge, %257, %258 : vector<16x64xf32>
    %cst_85 = arith.constant 1.000000e+00 : f32
    %cst_86 = arith.constant -1.000000e+00 : f32
    %260 = vector.broadcast %cst_85 : f32 to vector<16x64xf32>
    %261 = vector.broadcast %cst_86 : f32 to vector<16x64xf32>
    %262 = arith.select %259, %260, %261 : vector<16x64xi1>, vector<16x64xf32>
    %263 = arith.mulf %257, %262 : vector<16x64xf32>
    %cst_87 = arith.constant 0.327591091 : f32
    %264 = vector.broadcast %cst_87 : f32 to vector<16x64xf32>
    %265 = arith.mulf %264, %263 : vector<16x64xf32>
    %cst_88 = arith.constant 1.000000e+00 : f32
    %266 = vector.broadcast %cst_88 : f32 to vector<16x64xf32>
    %267 = arith.addf %266, %265 : vector<16x64xf32>
    %268 = tpu.reciprocal %267 {approx = true} : vector<16x64xf32> -> vector<16x64xf32>
    %cst_89 = arith.constant 1.06140542 : f32
    %269 = vector.broadcast %cst_89 : f32 to vector<16x64xf32>
    %270 = arith.mulf %269, %268 : vector<16x64xf32>
    %cst_90 = arith.constant -1.45315206 : f32
    %271 = vector.broadcast %cst_90 : f32 to vector<16x64xf32>
    %272 = arith.addf %270, %271 : vector<16x64xf32>
    %273 = arith.mulf %272, %268 : vector<16x64xf32>
    %cst_91 = arith.constant 1.42141378 : f32
    %274 = vector.broadcast %cst_91 : f32 to vector<16x64xf32>
    %275 = arith.addf %273, %274 : vector<16x64xf32>
    %276 = arith.mulf %275, %268 : vector<16x64xf32>
    %cst_92 = arith.constant -0.284496725 : f32
    %277 = vector.broadcast %cst_92 : f32 to vector<16x64xf32>
    %278 = arith.addf %276, %277 : vector<16x64xf32>
    %279 = arith.mulf %278, %268 : vector<16x64xf32>
    %cst_93 = arith.constant 0.254829586 : f32
    %280 = vector.broadcast %cst_93 : f32 to vector<16x64xf32>
    %281 = arith.addf %279, %280 : vector<16x64xf32>
    %282 = arith.mulf %281, %268 : vector<16x64xf32>
    %cst_94 = arith.constant 0.000000e+00 : f32
    %283 = vector.broadcast %cst_94 : f32 to vector<16x64xf32>
    %284 = arith.subf %283, %263 : vector<16x64xf32>
    %285 = arith.mulf %284, %263 : vector<16x64xf32>
    %286 = math.exp %285 : vector<16x64xf32>
    %287 = arith.mulf %282, %286 : vector<16x64xf32>
    %cst_95 = arith.constant 1.000000e+00 : f32
    %288 = vector.broadcast %cst_95 : f32 to vector<16x64xf32>
    %289 = arith.subf %288, %287 : vector<16x64xf32>
    %290 = arith.mulf %262, %289 : vector<16x64xf32>
    %cst_96 = arith.constant 1.000000e+00 : f32
    %291 = vector.broadcast %cst_96 : f32 to vector<16x64xf32>
    %292 = arith.addf %291, %290 : vector<16x64xf32>
    %293 = arith.mulf %255, %292 : vector<16x64xf32>
    %c0_97 = arith.constant 0 : index
    %c0_98 = arith.constant 0 : index
    %294 = vector.load %arg4[%c0_97, %c0_98] : memref<64x64xf32, #tpu.memory_space<vmem>>, vector<64x32xf32>
    %cst_99 = arith.constant dense<0.000000e+00> : vector<16x32xf32>
    %295 = tpu.matmul %293, %294, %cst_99 {dimension_numbers = #tpu.dot_dimension_numbers<[1], [0], [0], [1], [0, 0, 1, 1], [], []>} : vector<16x64xf32>, vector<64x32xf32>, vector<16x32xf32> -> vector<16x32xf32>
    %c0_100 = arith.constant 0 : index
    %c384 = arith.constant 384 : index
    %296 = vector.load %arg5[%c0_100, %c384] : memref<1x960xf32, #tpu.memory_space<vmem>>, vector<1x32xf32>
    %297 = vector.broadcast %296 : vector<1x32xf32> to vector<16x32xf32>
    %298 = arith.addf %295, %297 : vector<16x32xf32>
    %299 = arith.addf %248, %298 : vector<16x32xf32>
    %cst_101 = arith.constant dense<0.000000e+00> : vector<16xf32>
    %300 = vector.multi_reduction <add>, %299, %cst_101 [1] : vector<16x32xf32> to vector<16xf32>
    %301 = vector.shape_cast %300 : vector<16xf32> to vector<16x1xf32>
    %cst_102 = arith.constant 3.200000e+01 : f32
    %302 = vector.broadcast %cst_102 : f32 to vector<16x1xf32>
    %303 = arith.divf %301, %302 : vector<16x1xf32>
    %304 = vector.broadcast %303 : vector<16x1xf32> to vector<16x32xf32>
    %305 = arith.subf %299, %304 : vector<16x32xf32>
    %306 = arith.mulf %305, %305 : vector<16x32xf32>
    %cst_103 = arith.constant dense<0.000000e+00> : vector<16xf32>
    %307 = vector.multi_reduction <add>, %306, %cst_103 [1] : vector<16x32xf32> to vector<16xf32>
    %308 = vector.shape_cast %307 : vector<16xf32> to vector<16x1xf32>
    %cst_104 = arith.constant 3.200000e+01 : f32
    %309 = vector.broadcast %cst_104 : f32 to vector<16x1xf32>
    %310 = arith.divf %308, %309 : vector<16x1xf32>
    %311 = vector.broadcast %303 : vector<16x1xf32> to vector<16x32xf32>
    %312 = arith.subf %299, %311 : vector<16x32xf32>
    %cst_105 = arith.constant 9.99999974E-6 : f32
    %313 = vector.broadcast %cst_105 : f32 to vector<16x1xf32>
    %314 = arith.addf %310, %313 : vector<16x1xf32>
    %315 = math.rsqrt %314 : vector<16x1xf32>
    %316 = vector.broadcast %315 : vector<16x1xf32> to vector<16x32xf32>
    %317 = arith.mulf %312, %316 : vector<16x32xf32>
    %318 = vector.broadcast %9 : vector<1x32xf32> to vector<16x32xf32>
    %319 = arith.mulf %317, %318 : vector<16x32xf32>
    %320 = vector.broadcast %10 : vector<1x32xf32> to vector<16x32xf32>
    %321 = arith.addf %319, %320 : vector<16x32xf32>
    %c0_106 = arith.constant 0 : index
    %c768 = arith.constant 768 : index
    %322 = vector.load %arg5[%c0_106, %c768] : memref<1x960xf32, #tpu.memory_space<vmem>>, vector<1x32xf32>
    %c0_107 = arith.constant 0 : index
    %c800 = arith.constant 800 : index
    %323 = vector.load %arg5[%c0_107, %c800] : memref<1x960xf32, #tpu.memory_space<vmem>>, vector<1x32xf32>
    %c0_108 = arith.constant 0 : index
    %c384_109 = arith.constant 384 : index
    %324 = vector.load %arg3[%c0_108, %c384_109] : memref<32x768xf32, #tpu.memory_space<vmem>>, vector<32x96xf32>
    %cst_110 = arith.constant dense<0.000000e+00> : vector<16x96xf32>
    %325 = tpu.matmul %321, %324, %cst_110 {dimension_numbers = #tpu.dot_dimension_numbers<[1], [0], [0], [1], [0, 0, 1, 1], [], []>} : vector<16x32xf32>, vector<32x96xf32>, vector<16x96xf32> -> vector<16x96xf32>
    %c0_111 = arith.constant 0 : index
    %c480 = arith.constant 480 : index
    %326 = vector.load %arg5[%c0_111, %c480] : memref<1x960xf32, #tpu.memory_space<vmem>>, vector<1x96xf32>
    %327 = vector.broadcast %326 : vector<1x96xf32> to vector<16x96xf32>
    %328 = arith.addf %325, %327 : vector<16x96xf32>
    %329 = vector.extract_strided_slice %328 {offsets = [0, 0], sizes = [16, 32], strides = [1, 1]} : vector<16x96xf32> to vector<16x32xf32>
    %330 = vector.extract_strided_slice %328 {offsets = [0, 32], sizes = [16, 32], strides = [1, 1]} : vector<16x96xf32> to vector<16x32xf32>
    %331 = vector.extract_strided_slice %328 {offsets = [0, 64], sizes = [16, 32], strides = [1, 1]} : vector<16x96xf32> to vector<16x32xf32>
    %c0_112 = arith.constant 0 : index
    %c576 = arith.constant 576 : index
    %332 = vector.load %arg3[%c0_112, %c576] : memref<32x768xf32, #tpu.memory_space<vmem>>, vector<32x32xf32>
    %c0_113 = arith.constant 0 : index
    %c672 = arith.constant 672 : index
    %333 = vector.load %arg5[%c0_113, %c672] : memref<1x960xf32, #tpu.memory_space<vmem>>, vector<1x32xf32>
    %334 = vector.shape_cast %329 : vector<16x32xf32> to vector<2x8x32xf32>
    %335 = vector.shape_cast %330 : vector<16x32xf32> to vector<2x8x32xf32>
    %336 = vector.shape_cast %331 : vector<16x32xf32> to vector<2x8x32xf32>
    %337 = vector.extract_strided_slice %334 {offsets = [0, 0, 0], sizes = [2, 8, 8], strides = [1, 1, 1]} : vector<2x8x32xf32> to vector<2x8x8xf32>
    %338 = vector.extract_strided_slice %335 {offsets = [0, 0, 0], sizes = [2, 8, 8], strides = [1, 1, 1]} : vector<2x8x32xf32> to vector<2x8x8xf32>
    "tpu.trace_start"() <{level = 10 : i32, message = "bqd,bkd->bqk"}> : () -> ()
    %cst_114 = arith.constant dense<0.000000e+00> : vector<2x8x8xf32>
    %339 = tpu.matmul %337, %338, %cst_114 {dimension_numbers = #tpu.dot_dimension_numbers<[2], [2], [1], [1], [0, 0, 0, 1, 1, 1], [0], [0]>} : vector<2x8x8xf32>, vector<2x8x8xf32>, vector<2x8x8xf32> -> vector<2x8x8xf32>
    "tpu.trace_stop"() : () -> ()
    %340 = arith.addf %339, %2 : vector<2x8x8xf32>
    %341 = vector.extract_strided_slice %334 {offsets = [0, 0, 8], sizes = [2, 8, 8], strides = [1, 1, 1]} : vector<2x8x32xf32> to vector<2x8x8xf32>
    %342 = vector.extract_strided_slice %335 {offsets = [0, 0, 8], sizes = [2, 8, 8], strides = [1, 1, 1]} : vector<2x8x32xf32> to vector<2x8x8xf32>
    "tpu.trace_start"() <{level = 10 : i32, message = "bqd,bkd->bqk"}> : () -> ()
    %cst_115 = arith.constant dense<0.000000e+00> : vector<2x8x8xf32>
    %343 = tpu.matmul %341, %342, %cst_115 {dimension_numbers = #tpu.dot_dimension_numbers<[2], [2], [1], [1], [0, 0, 0, 1, 1, 1], [0], [0]>} : vector<2x8x8xf32>, vector<2x8x8xf32>, vector<2x8x8xf32> -> vector<2x8x8xf32>
    "tpu.trace_stop"() : () -> ()
    %344 = arith.addf %343, %2 : vector<2x8x8xf32>
    %345 = vector.extract_strided_slice %334 {offsets = [0, 0, 16], sizes = [2, 8, 8], strides = [1, 1, 1]} : vector<2x8x32xf32> to vector<2x8x8xf32>
    %346 = vector.extract_strided_slice %335 {offsets = [0, 0, 16], sizes = [2, 8, 8], strides = [1, 1, 1]} : vector<2x8x32xf32> to vector<2x8x8xf32>
    "tpu.trace_start"() <{level = 10 : i32, message = "bqd,bkd->bqk"}> : () -> ()
    %cst_116 = arith.constant dense<0.000000e+00> : vector<2x8x8xf32>
    %347 = tpu.matmul %345, %346, %cst_116 {dimension_numbers = #tpu.dot_dimension_numbers<[2], [2], [1], [1], [0, 0, 0, 1, 1, 1], [0], [0]>} : vector<2x8x8xf32>, vector<2x8x8xf32>, vector<2x8x8xf32> -> vector<2x8x8xf32>
    "tpu.trace_stop"() : () -> ()
    %348 = arith.addf %347, %2 : vector<2x8x8xf32>
    %349 = vector.extract_strided_slice %334 {offsets = [0, 0, 24], sizes = [2, 8, 8], strides = [1, 1, 1]} : vector<2x8x32xf32> to vector<2x8x8xf32>
    %350 = vector.extract_strided_slice %335 {offsets = [0, 0, 24], sizes = [2, 8, 8], strides = [1, 1, 1]} : vector<2x8x32xf32> to vector<2x8x8xf32>
    "tpu.trace_start"() <{level = 10 : i32, message = "bqd,bkd->bqk"}> : () -> ()
    %cst_117 = arith.constant dense<0.000000e+00> : vector<2x8x8xf32>
    %351 = tpu.matmul %349, %350, %cst_117 {dimension_numbers = #tpu.dot_dimension_numbers<[2], [2], [1], [1], [0, 0, 0, 1, 1, 1], [0], [0]>} : vector<2x8x8xf32>, vector<2x8x8xf32>, vector<2x8x8xf32> -> vector<2x8x8xf32>
    "tpu.trace_stop"() : () -> ()
    %352 = arith.addf %351, %2 : vector<2x8x8xf32>
    %cst_118 = arith.constant dense<0xFF800000> : vector<2x8xf32>
    %353 = vector.multi_reduction <maximumf>, %340, %cst_118 [2] : vector<2x8x8xf32> to vector<2x8xf32>
    %354 = vector.shape_cast %353 : vector<2x8xf32> to vector<2x8x1xf32>
    %355 = vector.broadcast %354 : vector<2x8x1xf32> to vector<2x8x8xf32>
    %356 = arith.subf %340, %355 : vector<2x8x8xf32>
    %357 = math.exp %356 : vector<2x8x8xf32>
    %cst_119 = arith.constant dense<0.000000e+00> : vector<2x8xf32>
    %358 = vector.multi_reduction <add>, %357, %cst_119 [2] : vector<2x8x8xf32> to vector<2x8xf32>
    %359 = vector.shape_cast %358 : vector<2x8xf32> to vector<2x8x1xf32>
    %360 = tpu.reciprocal %359 {approx = true} : vector<2x8x1xf32> -> vector<2x8x1xf32>
    %361 = vector.broadcast %360 : vector<2x8x1xf32> to vector<2x8x8xf32>
    %362 = arith.mulf %357, %361 : vector<2x8x8xf32>
    %363 = vector.extract_strided_slice %336 {offsets = [0, 0, 0], sizes = [2, 8, 8], strides = [1, 1, 1]} : vector<2x8x32xf32> to vector<2x8x8xf32>
    "tpu.trace_start"() <{level = 10 : i32, message = "bqk,bkd->bqd"}> : () -> ()
    %cst_120 = arith.constant dense<0.000000e+00> : vector<2x8x8xf32>
    %364 = tpu.matmul %362, %363, %cst_120 {dimension_numbers = #tpu.dot_dimension_numbers<[2], [1], [1], [2], [0, 0, 0, 1, 1, 2], [0], [0]>} : vector<2x8x8xf32>, vector<2x8x8xf32>, vector<2x8x8xf32> -> vector<2x8x8xf32>
    "tpu.trace_stop"() : () -> ()
    %365 = vector.shape_cast %364 : vector<2x8x8xf32> to vector<16x8xf32>
    %366 = vector.extract_strided_slice %332 {offsets = [0, 0], sizes = [8, 32], strides = [1, 1]} : vector<32x32xf32> to vector<8x32xf32>
    %cst_121 = arith.constant dense<0.000000e+00> : vector<16x32xf32>
    %367 = tpu.matmul %365, %366, %cst_121 {dimension_numbers = #tpu.dot_dimension_numbers<[1], [0], [0], [1], [0, 0, 1, 1], [], []>} : vector<16x8xf32>, vector<8x32xf32>, vector<16x32xf32> -> vector<16x32xf32>
    %368 = vector.broadcast %333 : vector<1x32xf32> to vector<16x32xf32>
    %369 = arith.addf %368, %367 : vector<16x32xf32>
    %cst_122 = arith.constant dense<0xFF800000> : vector<2x8xf32>
    %370 = vector.multi_reduction <maximumf>, %344, %cst_122 [2] : vector<2x8x8xf32> to vector<2x8xf32>
    %371 = vector.shape_cast %370 : vector<2x8xf32> to vector<2x8x1xf32>
    %372 = vector.broadcast %371 : vector<2x8x1xf32> to vector<2x8x8xf32>
    %373 = arith.subf %344, %372 : vector<2x8x8xf32>
    %374 = math.exp %373 : vector<2x8x8xf32>
    %cst_123 = arith.constant dense<0.000000e+00> : vector<2x8xf32>
    %375 = vector.multi_reduction <add>, %374, %cst_123 [2] : vector<2x8x8xf32> to vector<2x8xf32>
    %376 = vector.shape_cast %375 : vector<2x8xf32> to vector<2x8x1xf32>
    %377 = tpu.reciprocal %376 {approx = true} : vector<2x8x1xf32> -> vector<2x8x1xf32>
    %378 = vector.broadcast %377 : vector<2x8x1xf32> to vector<2x8x8xf32>
    %379 = arith.mulf %374, %378 : vector<2x8x8xf32>
    %380 = vector.extract_strided_slice %336 {offsets = [0, 0, 8], sizes = [2, 8, 8], strides = [1, 1, 1]} : vector<2x8x32xf32> to vector<2x8x8xf32>
    "tpu.trace_start"() <{level = 10 : i32, message = "bqk,bkd->bqd"}> : () -> ()
    %cst_124 = arith.constant dense<0.000000e+00> : vector<2x8x8xf32>
    %381 = tpu.matmul %379, %380, %cst_124 {dimension_numbers = #tpu.dot_dimension_numbers<[2], [1], [1], [2], [0, 0, 0, 1, 1, 2], [0], [0]>} : vector<2x8x8xf32>, vector<2x8x8xf32>, vector<2x8x8xf32> -> vector<2x8x8xf32>
    "tpu.trace_stop"() : () -> ()
    %382 = vector.shape_cast %381 : vector<2x8x8xf32> to vector<16x8xf32>
    %383 = vector.extract_strided_slice %332 {offsets = [8, 0], sizes = [8, 32], strides = [1, 1]} : vector<32x32xf32> to vector<8x32xf32>
    %cst_125 = arith.constant dense<0.000000e+00> : vector<16x32xf32>
    %384 = tpu.matmul %382, %383, %cst_125 {dimension_numbers = #tpu.dot_dimension_numbers<[1], [0], [0], [1], [0, 0, 1, 1], [], []>} : vector<16x8xf32>, vector<8x32xf32>, vector<16x32xf32> -> vector<16x32xf32>
    %385 = arith.addf %369, %384 : vector<16x32xf32>
    %cst_126 = arith.constant dense<0xFF800000> : vector<2x8xf32>
    %386 = vector.multi_reduction <maximumf>, %348, %cst_126 [2] : vector<2x8x8xf32> to vector<2x8xf32>
    %387 = vector.shape_cast %386 : vector<2x8xf32> to vector<2x8x1xf32>
    %388 = vector.broadcast %387 : vector<2x8x1xf32> to vector<2x8x8xf32>
    %389 = arith.subf %348, %388 : vector<2x8x8xf32>
    %390 = math.exp %389 : vector<2x8x8xf32>
    %cst_127 = arith.constant dense<0.000000e+00> : vector<2x8xf32>
    %391 = vector.multi_reduction <add>, %390, %cst_127 [2] : vector<2x8x8xf32> to vector<2x8xf32>
    %392 = vector.shape_cast %391 : vector<2x8xf32> to vector<2x8x1xf32>
    %393 = tpu.reciprocal %392 {approx = true} : vector<2x8x1xf32> -> vector<2x8x1xf32>
    %394 = vector.broadcast %393 : vector<2x8x1xf32> to vector<2x8x8xf32>
    %395 = arith.mulf %390, %394 : vector<2x8x8xf32>
    %396 = vector.extract_strided_slice %336 {offsets = [0, 0, 16], sizes = [2, 8, 8], strides = [1, 1, 1]} : vector<2x8x32xf32> to vector<2x8x8xf32>
    "tpu.trace_start"() <{level = 10 : i32, message = "bqk,bkd->bqd"}> : () -> ()
    %cst_128 = arith.constant dense<0.000000e+00> : vector<2x8x8xf32>
    %397 = tpu.matmul %395, %396, %cst_128 {dimension_numbers = #tpu.dot_dimension_numbers<[2], [1], [1], [2], [0, 0, 0, 1, 1, 2], [0], [0]>} : vector<2x8x8xf32>, vector<2x8x8xf32>, vector<2x8x8xf32> -> vector<2x8x8xf32>
    "tpu.trace_stop"() : () -> ()
    %398 = vector.shape_cast %397 : vector<2x8x8xf32> to vector<16x8xf32>
    %399 = vector.extract_strided_slice %332 {offsets = [16, 0], sizes = [8, 32], strides = [1, 1]} : vector<32x32xf32> to vector<8x32xf32>
    %cst_129 = arith.constant dense<0.000000e+00> : vector<16x32xf32>
    %400 = tpu.matmul %398, %399, %cst_129 {dimension_numbers = #tpu.dot_dimension_numbers<[1], [0], [0], [1], [0, 0, 1, 1], [], []>} : vector<16x8xf32>, vector<8x32xf32>, vector<16x32xf32> -> vector<16x32xf32>
    %401 = arith.addf %385, %400 : vector<16x32xf32>
    %cst_130 = arith.constant dense<0xFF800000> : vector<2x8xf32>
    %402 = vector.multi_reduction <maximumf>, %352, %cst_130 [2] : vector<2x8x8xf32> to vector<2x8xf32>
    %403 = vector.shape_cast %402 : vector<2x8xf32> to vector<2x8x1xf32>
    %404 = vector.broadcast %403 : vector<2x8x1xf32> to vector<2x8x8xf32>
    %405 = arith.subf %352, %404 : vector<2x8x8xf32>
    %406 = math.exp %405 : vector<2x8x8xf32>
    %cst_131 = arith.constant dense<0.000000e+00> : vector<2x8xf32>
    %407 = vector.multi_reduction <add>, %406, %cst_131 [2] : vector<2x8x8xf32> to vector<2x8xf32>
    %408 = vector.shape_cast %407 : vector<2x8xf32> to vector<2x8x1xf32>
    %409 = tpu.reciprocal %408 {approx = true} : vector<2x8x1xf32> -> vector<2x8x1xf32>
    %410 = vector.broadcast %409 : vector<2x8x1xf32> to vector<2x8x8xf32>
    %411 = arith.mulf %406, %410 : vector<2x8x8xf32>
    %412 = vector.extract_strided_slice %336 {offsets = [0, 0, 24], sizes = [2, 8, 8], strides = [1, 1, 1]} : vector<2x8x32xf32> to vector<2x8x8xf32>
    "tpu.trace_start"() <{level = 10 : i32, message = "bqk,bkd->bqd"}> : () -> ()
    %cst_132 = arith.constant dense<0.000000e+00> : vector<2x8x8xf32>
    %413 = tpu.matmul %411, %412, %cst_132 {dimension_numbers = #tpu.dot_dimension_numbers<[2], [1], [1], [2], [0, 0, 0, 1, 1, 2], [0], [0]>} : vector<2x8x8xf32>, vector<2x8x8xf32>, vector<2x8x8xf32> -> vector<2x8x8xf32>
    "tpu.trace_stop"() : () -> ()
    %414 = vector.shape_cast %413 : vector<2x8x8xf32> to vector<16x8xf32>
    %415 = vector.extract_strided_slice %332 {offsets = [24, 0], sizes = [8, 32], strides = [1, 1]} : vector<32x32xf32> to vector<8x32xf32>
    %cst_133 = arith.constant dense<0.000000e+00> : vector<16x32xf32>
    %416 = tpu.matmul %414, %415, %cst_133 {dimension_numbers = #tpu.dot_dimension_numbers<[1], [0], [0], [1], [0, 0, 1, 1], [], []>} : vector<16x8xf32>, vector<8x32xf32>, vector<16x32xf32> -> vector<16x32xf32>
    %417 = arith.addf %401, %416 : vector<16x32xf32>
    %418 = arith.addf %321, %417 : vector<16x32xf32>
    %cst_134 = arith.constant dense<0.000000e+00> : vector<16xf32>
    %419 = vector.multi_reduction <add>, %418, %cst_134 [1] : vector<16x32xf32> to vector<16xf32>
    %420 = vector.shape_cast %419 : vector<16xf32> to vector<16x1xf32>
    %cst_135 = arith.constant 3.200000e+01 : f32
    %421 = vector.broadcast %cst_135 : f32 to vector<16x1xf32>
    %422 = arith.divf %420, %421 : vector<16x1xf32>
    %423 = vector.broadcast %422 : vector<16x1xf32> to vector<16x32xf32>
    %424 = arith.subf %418, %423 : vector<16x32xf32>
    %425 = arith.mulf %424, %424 : vector<16x32xf32>
    %cst_136 = arith.constant dense<0.000000e+00> : vector<16xf32>
    %426 = vector.multi_reduction <add>, %425, %cst_136 [1] : vector<16x32xf32> to vector<16xf32>
    %427 = vector.shape_cast %426 : vector<16xf32> to vector<16x1xf32>
    %cst_137 = arith.constant 3.200000e+01 : f32
    %428 = vector.broadcast %cst_137 : f32 to vector<16x1xf32>
    %429 = arith.divf %427, %428 : vector<16x1xf32>
    %430 = vector.broadcast %422 : vector<16x1xf32> to vector<16x32xf32>
    %431 = arith.subf %418, %430 : vector<16x32xf32>
    %cst_138 = arith.constant 9.99999974E-6 : f32
    %432 = vector.broadcast %cst_138 : f32 to vector<16x1xf32>
    %433 = arith.addf %429, %432 : vector<16x1xf32>
    %434 = math.rsqrt %433 : vector<16x1xf32>
    %435 = vector.broadcast %434 : vector<16x1xf32> to vector<16x32xf32>
    %436 = arith.mulf %431, %435 : vector<16x32xf32>
    %437 = vector.broadcast %322 : vector<1x32xf32> to vector<16x32xf32>
    %438 = arith.mulf %436, %437 : vector<16x32xf32>
    %439 = vector.broadcast %323 : vector<1x32xf32> to vector<16x32xf32>
    %440 = arith.addf %438, %439 : vector<16x32xf32>
    %c0_139 = arith.constant 0 : index
    %c480_140 = arith.constant 480 : index
    %441 = vector.load %arg3[%c0_139, %c480_140] : memref<32x768xf32, #tpu.memory_space<vmem>>, vector<32x32xf32>
    %cst_141 = arith.constant dense<0.000000e+00> : vector<16x32xf32>
    %442 = tpu.matmul %440, %441, %cst_141 {dimension_numbers = #tpu.dot_dimension_numbers<[1], [0], [0], [1], [0, 0, 1, 1], [], []>} : vector<16x32xf32>, vector<32x32xf32>, vector<16x32xf32> -> vector<16x32xf32>
    %c0_142 = arith.constant 0 : index
    %c576_143 = arith.constant 576 : index
    %443 = vector.load %arg5[%c0_142, %c576_143] : memref<1x960xf32, #tpu.memory_space<vmem>>, vector<1x32xf32>
    %444 = vector.broadcast %443 : vector<1x32xf32> to vector<16x32xf32>
    %445 = arith.addf %442, %444 : vector<16x32xf32>
    %446 = vector.extract_strided_slice %8 {offsets = [0, 64], sizes = [20, 64], strides = [1, 1]} : vector<20x128xf32> to vector<20x64xf32>
    %447 = vector.extract_strided_slice %446 {offsets = [0, 0], sizes = [20, 32], strides = [1, 1]} : vector<20x64xf32> to vector<20x32xf32>
    %448 = vector.extract_strided_slice %446 {offsets = [0, 32], sizes = [20, 32], strides = [1, 1]} : vector<20x64xf32> to vector<20x32xf32>
    %c0_144 = arith.constant 0 : index
    %c608 = arith.constant 608 : index
    %449 = vector.load %arg3[%c0_144, %c608] : memref<32x768xf32, #tpu.memory_space<vmem>>, vector<32x32xf32>
    %c0_145 = arith.constant 0 : index
    %c704 = arith.constant 704 : index
    %450 = vector.load %arg5[%c0_145, %c704] : memref<1x960xf32, #tpu.memory_space<vmem>>, vector<1x32xf32>
    %451 = vector.shape_cast %445 : vector<16x32xf32> to vector<2x8x32xf32>
    %452 = vector.shape_cast %447 : vector<20x32xf32> to vector<2x10x32xf32>
    %453 = vector.shape_cast %448 : vector<20x32xf32> to vector<2x10x32xf32>
    %454 = vector.extract_strided_slice %451 {offsets = [0, 0, 0], sizes = [2, 8, 8], strides = [1, 1, 1]} : vector<2x8x32xf32> to vector<2x8x8xf32>
    %455 = vector.extract_strided_slice %452 {offsets = [0, 0, 0], sizes = [2, 10, 8], strides = [1, 1, 1]} : vector<2x10x32xf32> to vector<2x10x8xf32>
    "tpu.trace_start"() <{level = 10 : i32, message = "bqd,bkd->bqk"}> : () -> ()
    %cst_146 = arith.constant dense<0.000000e+00> : vector<2x8x10xf32>
    %456 = tpu.matmul %454, %455, %cst_146 {dimension_numbers = #tpu.dot_dimension_numbers<[2], [2], [1], [1], [0, 0, 0, 1, 1, 1], [0], [0]>} : vector<2x8x8xf32>, vector<2x10x8xf32>, vector<2x8x10xf32> -> vector<2x8x10xf32>
    "tpu.trace_stop"() : () -> ()
    %457 = vector.broadcast %3 : vector<2x1x10xf32> to vector<2x8x10xf32>
    %458 = arith.addf %456, %457 : vector<2x8x10xf32>
    %459 = vector.extract_strided_slice %451 {offsets = [0, 0, 8], sizes = [2, 8, 8], strides = [1, 1, 1]} : vector<2x8x32xf32> to vector<2x8x8xf32>
    %460 = vector.extract_strided_slice %452 {offsets = [0, 0, 8], sizes = [2, 10, 8], strides = [1, 1, 1]} : vector<2x10x32xf32> to vector<2x10x8xf32>
    "tpu.trace_start"() <{level = 10 : i32, message = "bqd,bkd->bqk"}> : () -> ()
    %cst_147 = arith.constant dense<0.000000e+00> : vector<2x8x10xf32>
    %461 = tpu.matmul %459, %460, %cst_147 {dimension_numbers = #tpu.dot_dimension_numbers<[2], [2], [1], [1], [0, 0, 0, 1, 1, 1], [0], [0]>} : vector<2x8x8xf32>, vector<2x10x8xf32>, vector<2x8x10xf32> -> vector<2x8x10xf32>
    "tpu.trace_stop"() : () -> ()
    %462 = vector.broadcast %3 : vector<2x1x10xf32> to vector<2x8x10xf32>
    %463 = arith.addf %461, %462 : vector<2x8x10xf32>
    %464 = vector.extract_strided_slice %451 {offsets = [0, 0, 16], sizes = [2, 8, 8], strides = [1, 1, 1]} : vector<2x8x32xf32> to vector<2x8x8xf32>
    %465 = vector.extract_strided_slice %452 {offsets = [0, 0, 16], sizes = [2, 10, 8], strides = [1, 1, 1]} : vector<2x10x32xf32> to vector<2x10x8xf32>
    "tpu.trace_start"() <{level = 10 : i32, message = "bqd,bkd->bqk"}> : () -> ()
    %cst_148 = arith.constant dense<0.000000e+00> : vector<2x8x10xf32>
    %466 = tpu.matmul %464, %465, %cst_148 {dimension_numbers = #tpu.dot_dimension_numbers<[2], [2], [1], [1], [0, 0, 0, 1, 1, 1], [0], [0]>} : vector<2x8x8xf32>, vector<2x10x8xf32>, vector<2x8x10xf32> -> vector<2x8x10xf32>
    "tpu.trace_stop"() : () -> ()
    %467 = vector.broadcast %3 : vector<2x1x10xf32> to vector<2x8x10xf32>
    %468 = arith.addf %466, %467 : vector<2x8x10xf32>
    %469 = vector.extract_strided_slice %451 {offsets = [0, 0, 24], sizes = [2, 8, 8], strides = [1, 1, 1]} : vector<2x8x32xf32> to vector<2x8x8xf32>
    %470 = vector.extract_strided_slice %452 {offsets = [0, 0, 24], sizes = [2, 10, 8], strides = [1, 1, 1]} : vector<2x10x32xf32> to vector<2x10x8xf32>
    "tpu.trace_start"() <{level = 10 : i32, message = "bqd,bkd->bqk"}> : () -> ()
    %cst_149 = arith.constant dense<0.000000e+00> : vector<2x8x10xf32>
    %471 = tpu.matmul %469, %470, %cst_149 {dimension_numbers = #tpu.dot_dimension_numbers<[2], [2], [1], [1], [0, 0, 0, 1, 1, 1], [0], [0]>} : vector<2x8x8xf32>, vector<2x10x8xf32>, vector<2x8x10xf32> -> vector<2x8x10xf32>
    "tpu.trace_stop"() : () -> ()
    %472 = vector.broadcast %3 : vector<2x1x10xf32> to vector<2x8x10xf32>
    %473 = arith.addf %471, %472 : vector<2x8x10xf32>
    %cst_150 = arith.constant dense<0xFF800000> : vector<2x8xf32>
    %474 = vector.multi_reduction <maximumf>, %458, %cst_150 [2] : vector<2x8x10xf32> to vector<2x8xf32>
    %475 = vector.shape_cast %474 : vector<2x8xf32> to vector<2x8x1xf32>
    %476 = vector.broadcast %475 : vector<2x8x1xf32> to vector<2x8x10xf32>
    %477 = arith.subf %458, %476 : vector<2x8x10xf32>
    %478 = math.exp %477 : vector<2x8x10xf32>
    %cst_151 = arith.constant dense<0.000000e+00> : vector<2x8xf32>
    %479 = vector.multi_reduction <add>, %478, %cst_151 [2] : vector<2x8x10xf32> to vector<2x8xf32>
    %480 = vector.shape_cast %479 : vector<2x8xf32> to vector<2x8x1xf32>
    %481 = tpu.reciprocal %480 {approx = true} : vector<2x8x1xf32> -> vector<2x8x1xf32>
    %482 = vector.broadcast %481 : vector<2x8x1xf32> to vector<2x8x10xf32>
    %483 = arith.mulf %478, %482 : vector<2x8x10xf32>
    %c0_152 = arith.constant 0 : index
    %c0_153 = arith.constant 0 : index
    %c0_154 = arith.constant 0 : index
    %c0_155 = arith.constant 0 : index
    %484 = vector.load %arg7[%c0_152, %c0_153, %c0_154, %c0_155] : memref<2x4x8x10xf32, #tpu.memory_space<vmem>>, vector<2x1x8x10xf32>
    %485 = vector.shape_cast %484 : vector<2x1x8x10xf32> to vector<2x8x10xf32>
    %486 = vector.shape_cast %483 : vector<2x8x10xf32> to vector<2x1x8x10xf32>
    tpu.vector_store %arg7[%c0_152, %c0_153, %c0_154, %c0_155], %486 {strides = array<i32>} : memref<2x4x8x10xf32, #tpu.memory_space<vmem>>, vector<2x1x8x10xf32>,
    %487 = vector.extract_strided_slice %453 {offsets = [0, 0, 0], sizes = [2, 10, 8], strides = [1, 1, 1]} : vector<2x10x32xf32> to vector<2x10x8xf32>
    "tpu.trace_start"() <{level = 10 : i32, message = "bqk,bkd->bqd"}> : () -> ()
    %cst_156 = arith.constant dense<0.000000e+00> : vector<2x8x8xf32>
    %488 = tpu.matmul %483, %487, %cst_156 {dimension_numbers = #tpu.dot_dimension_numbers<[2], [1], [1], [2], [0, 0, 0, 1, 1, 2], [0], [0]>} : vector<2x8x10xf32>, vector<2x10x8xf32>, vector<2x8x8xf32> -> vector<2x8x8xf32>
    "tpu.trace_stop"() : () -> ()
    %489 = vector.shape_cast %488 : vector<2x8x8xf32> to vector<16x8xf32>
    %490 = vector.extract_strided_slice %449 {offsets = [0, 0], sizes = [8, 32], strides = [1, 1]} : vector<32x32xf32> to vector<8x32xf32>
    %cst_157 = arith.constant dense<0.000000e+00> : vector<16x32xf32>
    %491 = tpu.matmul %489, %490, %cst_157 {dimension_numbers = #tpu.dot_dimension_numbers<[1], [0], [0], [1], [0, 0, 1, 1], [], []>} : vector<16x8xf32>, vector<8x32xf32>, vector<16x32xf32> -> vector<16x32xf32>
    %492 = vector.broadcast %450 : vector<1x32xf32> to vector<16x32xf32>
    %493 = arith.addf %492, %491 : vector<16x32xf32>
    %cst_158 = arith.constant dense<0xFF800000> : vector<2x8xf32>
    %494 = vector.multi_reduction <maximumf>, %463, %cst_158 [2] : vector<2x8x10xf32> to vector<2x8xf32>
    %495 = vector.shape_cast %494 : vector<2x8xf32> to vector<2x8x1xf32>
    %496 = vector.broadcast %495 : vector<2x8x1xf32> to vector<2x8x10xf32>
    %497 = arith.subf %463, %496 : vector<2x8x10xf32>
    %498 = math.exp %497 : vector<2x8x10xf32>
    %cst_159 = arith.constant dense<0.000000e+00> : vector<2x8xf32>
    %499 = vector.multi_reduction <add>, %498, %cst_159 [2] : vector<2x8x10xf32> to vector<2x8xf32>
    %500 = vector.shape_cast %499 : vector<2x8xf32> to vector<2x8x1xf32>
    %501 = tpu.reciprocal %500 {approx = true} : vector<2x8x1xf32> -> vector<2x8x1xf32>
    %502 = vector.broadcast %501 : vector<2x8x1xf32> to vector<2x8x10xf32>
    %503 = arith.mulf %498, %502 : vector<2x8x10xf32>
    %c0_160 = arith.constant 0 : index
    %c1 = arith.constant 1 : index
    %c0_161 = arith.constant 0 : index
    %c0_162 = arith.constant 0 : index
    %504 = vector.load %arg7[%c0_160, %c1, %c0_161, %c0_162] : memref<2x4x8x10xf32, #tpu.memory_space<vmem>>, vector<2x1x8x10xf32>
    %505 = vector.shape_cast %504 : vector<2x1x8x10xf32> to vector<2x8x10xf32>
    %506 = vector.shape_cast %503 : vector<2x8x10xf32> to vector<2x1x8x10xf32>
    tpu.vector_store %arg7[%c0_160, %c1, %c0_161, %c0_162], %506 {strides = array<i32>} : memref<2x4x8x10xf32, #tpu.memory_space<vmem>>, vector<2x1x8x10xf32>,
    %507 = vector.extract_strided_slice %453 {offsets = [0, 0, 8], sizes = [2, 10, 8], strides = [1, 1, 1]} : vector<2x10x32xf32> to vector<2x10x8xf32>
    "tpu.trace_start"() <{level = 10 : i32, message = "bqk,bkd->bqd"}> : () -> ()
    %cst_163 = arith.constant dense<0.000000e+00> : vector<2x8x8xf32>
    %508 = tpu.matmul %503, %507, %cst_163 {dimension_numbers = #tpu.dot_dimension_numbers<[2], [1], [1], [2], [0, 0, 0, 1, 1, 2], [0], [0]>} : vector<2x8x10xf32>, vector<2x10x8xf32>, vector<2x8x8xf32> -> vector<2x8x8xf32>
    "tpu.trace_stop"() : () -> ()
    %509 = vector.shape_cast %508 : vector<2x8x8xf32> to vector<16x8xf32>
    %510 = vector.extract_strided_slice %449 {offsets = [8, 0], sizes = [8, 32], strides = [1, 1]} : vector<32x32xf32> to vector<8x32xf32>
    %cst_164 = arith.constant dense<0.000000e+00> : vector<16x32xf32>
    %511 = tpu.matmul %509, %510, %cst_164 {dimension_numbers = #tpu.dot_dimension_numbers<[1], [0], [0], [1], [0, 0, 1, 1], [], []>} : vector<16x8xf32>, vector<8x32xf32>, vector<16x32xf32> -> vector<16x32xf32>
    %512 = arith.addf %493, %511 : vector<16x32xf32>
    %cst_165 = arith.constant dense<0xFF800000> : vector<2x8xf32>
    %513 = vector.multi_reduction <maximumf>, %468, %cst_165 [2] : vector<2x8x10xf32> to vector<2x8xf32>
    %514 = vector.shape_cast %513 : vector<2x8xf32> to vector<2x8x1xf32>
    %515 = vector.broadcast %514 : vector<2x8x1xf32> to vector<2x8x10xf32>
    %516 = arith.subf %468, %515 : vector<2x8x10xf32>
    %517 = math.exp %516 : vector<2x8x10xf32>
    %cst_166 = arith.constant dense<0.000000e+00> : vector<2x8xf32>
    %518 = vector.multi_reduction <add>, %517, %cst_166 [2] : vector<2x8x10xf32> to vector<2x8xf32>
    %519 = vector.shape_cast %518 : vector<2x8xf32> to vector<2x8x1xf32>
    %520 = tpu.reciprocal %519 {approx = true} : vector<2x8x1xf32> -> vector<2x8x1xf32>
    %521 = vector.broadcast %520 : vector<2x8x1xf32> to vector<2x8x10xf32>
    %522 = arith.mulf %517, %521 : vector<2x8x10xf32>
    %c0_167 = arith.constant 0 : index
    %c2 = arith.constant 2 : index
    %c0_168 = arith.constant 0 : index
    %c0_169 = arith.constant 0 : index
    %523 = vector.load %arg7[%c0_167, %c2, %c0_168, %c0_169] : memref<2x4x8x10xf32, #tpu.memory_space<vmem>>, vector<2x1x8x10xf32>
    %524 = vector.shape_cast %523 : vector<2x1x8x10xf32> to vector<2x8x10xf32>
    %525 = vector.shape_cast %522 : vector<2x8x10xf32> to vector<2x1x8x10xf32>
    tpu.vector_store %arg7[%c0_167, %c2, %c0_168, %c0_169], %525 {strides = array<i32>} : memref<2x4x8x10xf32, #tpu.memory_space<vmem>>, vector<2x1x8x10xf32>,
    %526 = vector.extract_strided_slice %453 {offsets = [0, 0, 16], sizes = [2, 10, 8], strides = [1, 1, 1]} : vector<2x10x32xf32> to vector<2x10x8xf32>
    "tpu.trace_start"() <{level = 10 : i32, message = "bqk,bkd->bqd"}> : () -> ()
    %cst_170 = arith.constant dense<0.000000e+00> : vector<2x8x8xf32>
    %527 = tpu.matmul %522, %526, %cst_170 {dimension_numbers = #tpu.dot_dimension_numbers<[2], [1], [1], [2], [0, 0, 0, 1, 1, 2], [0], [0]>} : vector<2x8x10xf32>, vector<2x10x8xf32>, vector<2x8x8xf32> -> vector<2x8x8xf32>
    "tpu.trace_stop"() : () -> ()
    %528 = vector.shape_cast %527 : vector<2x8x8xf32> to vector<16x8xf32>
    %529 = vector.extract_strided_slice %449 {offsets = [16, 0], sizes = [8, 32], strides = [1, 1]} : vector<32x32xf32> to vector<8x32xf32>
    %cst_171 = arith.constant dense<0.000000e+00> : vector<16x32xf32>
    %530 = tpu.matmul %528, %529, %cst_171 {dimension_numbers = #tpu.dot_dimension_numbers<[1], [0], [0], [1], [0, 0, 1, 1], [], []>} : vector<16x8xf32>, vector<8x32xf32>, vector<16x32xf32> -> vector<16x32xf32>
    %531 = arith.addf %512, %530 : vector<16x32xf32>
    %cst_172 = arith.constant dense<0xFF800000> : vector<2x8xf32>
    %532 = vector.multi_reduction <maximumf>, %473, %cst_172 [2] : vector<2x8x10xf32> to vector<2x8xf32>
    %533 = vector.shape_cast %532 : vector<2x8xf32> to vector<2x8x1xf32>
    %534 = vector.broadcast %533 : vector<2x8x1xf32> to vector<2x8x10xf32>
    %535 = arith.subf %473, %534 : vector<2x8x10xf32>
    %536 = math.exp %535 : vector<2x8x10xf32>
    %cst_173 = arith.constant dense<0.000000e+00> : vector<2x8xf32>
    %537 = vector.multi_reduction <add>, %536, %cst_173 [2] : vector<2x8x10xf32> to vector<2x8xf32>
    %538 = vector.shape_cast %537 : vector<2x8xf32> to vector<2x8x1xf32>
    %539 = tpu.reciprocal %538 {approx = true} : vector<2x8x1xf32> -> vector<2x8x1xf32>
    %540 = vector.broadcast %539 : vector<2x8x1xf32> to vector<2x8x10xf32>
    %541 = arith.mulf %536, %540 : vector<2x8x10xf32>
    %c0_174 = arith.constant 0 : index
    %c3 = arith.constant 3 : index
    %c0_175 = arith.constant 0 : index
    %c0_176 = arith.constant 0 : index
    %542 = vector.load %arg7[%c0_174, %c3, %c0_175, %c0_176] : memref<2x4x8x10xf32, #tpu.memory_space<vmem>>, vector<2x1x8x10xf32>
    %543 = vector.shape_cast %542 : vector<2x1x8x10xf32> to vector<2x8x10xf32>
    %544 = vector.shape_cast %541 : vector<2x8x10xf32> to vector<2x1x8x10xf32>
    tpu.vector_store %arg7[%c0_174, %c3, %c0_175, %c0_176], %544 {strides = array<i32>} : memref<2x4x8x10xf32, #tpu.memory_space<vmem>>, vector<2x1x8x10xf32>,
    %545 = vector.extract_strided_slice %453 {offsets = [0, 0, 24], sizes = [2, 10, 8], strides = [1, 1, 1]} : vector<2x10x32xf32> to vector<2x10x8xf32>
    "tpu.trace_start"() <{level = 10 : i32, message = "bqk,bkd->bqd"}> : () -> ()
    %cst_177 = arith.constant dense<0.000000e+00> : vector<2x8x8xf32>
    %546 = tpu.matmul %541, %545, %cst_177 {dimension_numbers = #tpu.dot_dimension_numbers<[2], [1], [1], [2], [0, 0, 0, 1, 1, 2], [0], [0]>} : vector<2x8x10xf32>, vector<2x10x8xf32>, vector<2x8x8xf32> -> vector<2x8x8xf32>
    "tpu.trace_stop"() : () -> ()
    %547 = vector.shape_cast %546 : vector<2x8x8xf32> to vector<16x8xf32>
    %548 = vector.extract_strided_slice %449 {offsets = [24, 0], sizes = [8, 32], strides = [1, 1]} : vector<32x32xf32> to vector<8x32xf32>
    %cst_178 = arith.constant dense<0.000000e+00> : vector<16x32xf32>
    %549 = tpu.matmul %547, %548, %cst_178 {dimension_numbers = #tpu.dot_dimension_numbers<[1], [0], [0], [1], [0, 0, 1, 1], [], []>} : vector<16x8xf32>, vector<8x32xf32>, vector<16x32xf32> -> vector<16x32xf32>
    %550 = arith.addf %531, %549 : vector<16x32xf32>
    %551 = arith.addf %440, %550 : vector<16x32xf32>
    %cst_179 = arith.constant dense<0.000000e+00> : vector<16xf32>
    %552 = vector.multi_reduction <add>, %551, %cst_179 [1] : vector<16x32xf32> to vector<16xf32>
    %553 = vector.shape_cast %552 : vector<16xf32> to vector<16x1xf32>
    %cst_180 = arith.constant 3.200000e+01 : f32
    %554 = vector.broadcast %cst_180 : f32 to vector<16x1xf32>
    %555 = arith.divf %553, %554 : vector<16x1xf32>
    %556 = vector.broadcast %555 : vector<16x1xf32> to vector<16x32xf32>
    %557 = arith.subf %551, %556 : vector<16x32xf32>
    %558 = arith.mulf %557, %557 : vector<16x32xf32>
    %cst_181 = arith.constant dense<0.000000e+00> : vector<16xf32>
    %559 = vector.multi_reduction <add>, %558, %cst_181 [1] : vector<16x32xf32> to vector<16xf32>
    %560 = vector.shape_cast %559 : vector<16xf32> to vector<16x1xf32>
    %cst_182 = arith.constant 3.200000e+01 : f32
    %561 = vector.broadcast %cst_182 : f32 to vector<16x1xf32>
    %562 = arith.divf %560, %561 : vector<16x1xf32>
    %563 = vector.broadcast %555 : vector<16x1xf32> to vector<16x32xf32>
    %564 = arith.subf %551, %563 : vector<16x32xf32>
    %cst_183 = arith.constant 9.99999974E-6 : f32
    %565 = vector.broadcast %cst_183 : f32 to vector<16x1xf32>
    %566 = arith.addf %562, %565 : vector<16x1xf32>
    %567 = math.rsqrt %566 : vector<16x1xf32>
    %568 = vector.broadcast %567 : vector<16x1xf32> to vector<16x32xf32>
    %569 = arith.mulf %564, %568 : vector<16x32xf32>
    %570 = vector.broadcast %322 : vector<1x32xf32> to vector<16x32xf32>
    %571 = arith.mulf %569, %570 : vector<16x32xf32>
    %572 = vector.broadcast %323 : vector<1x32xf32> to vector<16x32xf32>
    %573 = arith.addf %571, %572 : vector<16x32xf32>
    %c0_184 = arith.constant 0 : index
    %c512 = arith.constant 512 : index
    %574 = vector.load %arg3[%c0_184, %c512] : memref<32x768xf32, #tpu.memory_space<vmem>>, vector<32x64xf32>
    %cst_185 = arith.constant dense<0.000000e+00> : vector<16x64xf32>
    %575 = tpu.matmul %573, %574, %cst_185 {dimension_numbers = #tpu.dot_dimension_numbers<[1], [0], [0], [1], [0, 0, 1, 1], [], []>} : vector<16x32xf32>, vector<32x64xf32>, vector<16x64xf32> -> vector<16x64xf32>
    %c0_186 = arith.constant 0 : index
    %c608_187 = arith.constant 608 : index
    %576 = vector.load %arg5[%c0_186, %c608_187] : memref<1x960xf32, #tpu.memory_space<vmem>>, vector<1x64xf32>
    %577 = vector.broadcast %576 : vector<1x64xf32> to vector<16x64xf32>
    %578 = arith.addf %575, %577 : vector<16x64xf32>
    %cst_188 = arith.constant 5.000000e-01 : f32
    %579 = vector.broadcast %cst_188 : f32 to vector<16x64xf32>
    %580 = arith.mulf %578, %579 : vector<16x64xf32>
    %cst_189 = arith.constant 0.707106769 : f32
    %581 = vector.broadcast %cst_189 : f32 to vector<16x64xf32>
    %582 = arith.mulf %578, %581 : vector<16x64xf32>
    %cst_190 = arith.constant 0.000000e+00 : f32
    %583 = vector.broadcast %cst_190 : f32 to vector<16x64xf32>
    %584 = arith.cmpf oge, %582, %583 : vector<16x64xf32>
    %cst_191 = arith.constant 1.000000e+00 : f32
    %cst_192 = arith.constant -1.000000e+00 : f32
    %585 = vector.broadcast %cst_191 : f32 to vector<16x64xf32>
    %586 = vector.broadcast %cst_192 : f32 to vector<16x64xf32>
    %587 = arith.select %584, %585, %586 : vector<16x64xi1>, vector<16x64xf32>
    %588 = arith.mulf %582, %587 : vector<16x64xf32>
    %cst_193 = arith.constant 0.327591091 : f32
    %589 = vector.broadcast %cst_193 : f32 to vector<16x64xf32>
    %590 = arith.mulf %589, %588 : vector<16x64xf32>
    %cst_194 = arith.constant 1.000000e+00 : f32
    %591 = vector.broadcast %cst_194 : f32 to vector<16x64xf32>
    %592 = arith.addf %591, %590 : vector<16x64xf32>
    %593 = tpu.reciprocal %592 {approx = true} : vector<16x64xf32> -> vector<16x64xf32>
    %cst_195 = arith.constant 1.06140542 : f32
    %594 = vector.broadcast %cst_195 : f32 to vector<16x64xf32>
    %595 = arith.mulf %594, %593 : vector<16x64xf32>
    %cst_196 = arith.constant -1.45315206 : f32
    %596 = vector.broadcast %cst_196 : f32 to vector<16x64xf32>
    %597 = arith.addf %595, %596 : vector<16x64xf32>
    %598 = arith.mulf %597, %593 : vector<16x64xf32>
    %cst_197 = arith.constant 1.42141378 : f32
    %599 = vector.broadcast %cst_197 : f32 to vector<16x64xf32>
    %600 = arith.addf %598, %599 : vector<16x64xf32>
    %601 = arith.mulf %600, %593 : vector<16x64xf32>
    %cst_198 = arith.constant -0.284496725 : f32
    %602 = vector.broadcast %cst_198 : f32 to vector<16x64xf32>
    %603 = arith.addf %601, %602 : vector<16x64xf32>
    %604 = arith.mulf %603, %593 : vector<16x64xf32>
    %cst_199 = arith.constant 0.254829586 : f32
    %605 = vector.broadcast %cst_199 : f32 to vector<16x64xf32>
    %606 = arith.addf %604, %605 : vector<16x64xf32>
    %607 = arith.mulf %606, %593 : vector<16x64xf32>
    %cst_200 = arith.constant 0.000000e+00 : f32
    %608 = vector.broadcast %cst_200 : f32 to vector<16x64xf32>
    %609 = arith.subf %608, %588 : vector<16x64xf32>
    %610 = arith.mulf %609, %588 : vector<16x64xf32>
    %611 = math.exp %610 : vector<16x64xf32>
    %612 = arith.mulf %607, %611 : vector<16x64xf32>
    %cst_201 = arith.constant 1.000000e+00 : f32
    %613 = vector.broadcast %cst_201 : f32 to vector<16x64xf32>
    %614 = arith.subf %613, %612 : vector<16x64xf32>
    %615 = arith.mulf %587, %614 : vector<16x64xf32>
    %cst_202 = arith.constant 1.000000e+00 : f32
    %616 = vector.broadcast %cst_202 : f32 to vector<16x64xf32>
    %617 = arith.addf %616, %615 : vector<16x64xf32>
    %618 = arith.mulf %580, %617 : vector<16x64xf32>
    %c0_203 = arith.constant 0 : index
    %c32 = arith.constant 32 : index
    %619 = vector.load %arg4[%c0_203, %c32] : memref<64x64xf32, #tpu.memory_space<vmem>>, vector<64x32xf32>
    %cst_204 = arith.constant dense<0.000000e+00> : vector<16x32xf32>
    %620 = tpu.matmul %618, %619, %cst_204 {dimension_numbers = #tpu.dot_dimension_numbers<[1], [0], [0], [1], [0, 0, 1, 1], [], []>} : vector<16x64xf32>, vector<64x32xf32>, vector<16x32xf32> -> vector<16x32xf32>
    %c0_205 = arith.constant 0 : index
    %c736 = arith.constant 736 : index
    %621 = vector.load %arg5[%c0_205, %c736] : memref<1x960xf32, #tpu.memory_space<vmem>>, vector<1x32xf32>
    %622 = vector.broadcast %621 : vector<1x32xf32> to vector<16x32xf32>
    %623 = arith.addf %620, %622 : vector<16x32xf32>
    %624 = arith.addf %573, %623 : vector<16x32xf32>
    %cst_206 = arith.constant dense<0.000000e+00> : vector<16xf32>
    %625 = vector.multi_reduction <add>, %624, %cst_206 [1] : vector<16x32xf32> to vector<16xf32>
    %626 = vector.shape_cast %625 : vector<16xf32> to vector<16x1xf32>
    %cst_207 = arith.constant 3.200000e+01 : f32
    %627 = vector.broadcast %cst_207 : f32 to vector<16x1xf32>
    %628 = arith.divf %626, %627 : vector<16x1xf32>
    %629 = vector.broadcast %628 : vector<16x1xf32> to vector<16x32xf32>
    %630 = arith.subf %624, %629 : vector<16x32xf32>
    %631 = arith.mulf %630, %630 : vector<16x32xf32>
    %cst_208 = arith.constant dense<0.000000e+00> : vector<16xf32>
    %632 = vector.multi_reduction <add>, %631, %cst_208 [1] : vector<16x32xf32> to vector<16xf32>
    %633 = vector.shape_cast %632 : vector<16xf32> to vector<16x1xf32>
    %cst_209 = arith.constant 3.200000e+01 : f32
    %634 = vector.broadcast %cst_209 : f32 to vector<16x1xf32>
    %635 = arith.divf %633, %634 : vector<16x1xf32>
    %636 = vector.broadcast %628 : vector<16x1xf32> to vector<16x32xf32>
    %637 = arith.subf %624, %636 : vector<16x32xf32>
    %cst_210 = arith.constant 9.99999974E-6 : f32
    %638 = vector.broadcast %cst_210 : f32 to vector<16x1xf32>
    %639 = arith.addf %635, %638 : vector<16x1xf32>
    %640 = math.rsqrt %639 : vector<16x1xf32>
    %641 = vector.broadcast %640 : vector<16x1xf32> to vector<16x32xf32>
    %642 = arith.mulf %637, %641 : vector<16x32xf32>
    %643 = vector.broadcast %322 : vector<1x32xf32> to vector<16x32xf32>
    %644 = arith.mulf %642, %643 : vector<16x32xf32>
    %645 = vector.broadcast %323 : vector<1x32xf32> to vector<16x32xf32>
    %646 = arith.addf %644, %645 : vector<16x32xf32>
    %c0_211 = arith.constant 0 : index
    %c640 = arith.constant 640 : index
    %647 = vector.load %arg3[%c0_211, %c640] : memref<32x768xf32, #tpu.memory_space<vmem>>, vector<32x128xf32>
    %cst_212 = arith.constant dense<0.000000e+00> : vector<16x128xf32>
    %648 = tpu.matmul %646, %647, %cst_212 {dimension_numbers = #tpu.dot_dimension_numbers<[1], [0], [0], [1], [0, 0, 1, 1], [], []>} : vector<16x32xf32>, vector<32x128xf32>, vector<16x128xf32> -> vector<16x128xf32>
    %c0_213 = arith.constant 0 : index
    %c832 = arith.constant 832 : index
    %649 = vector.load %arg5[%c0_213, %c832] : memref<1x960xf32, #tpu.memory_space<vmem>>, vector<1x128xf32>
    %650 = vector.broadcast %649 : vector<1x128xf32> to vector<16x128xf32>
    %651 = arith.addf %648, %650 : vector<16x128xf32>
    %c0_214 = arith.constant 0 : index
    %c0_215 = arith.constant 0 : index
    %652 = vector.load %arg6[%c0_214, %c0_215] : memref<16x128xf32, #tpu.memory_space<vmem>>, vector<16x128xf32>
    tpu.vector_store %arg6[%c0_214, %c0_215], %651 {strides = array<i32>} : memref<16x128xf32, #tpu.memory_space<vmem>>, vector<16x128xf32>,
    return
  }
}

</mosaic_0001>

<llo_original>
// kernel: decoder_forward.1
$region0: #{decoder_forward.1}
  #allocation0 [shape = 'u32[]', space=smem, size = 0x4, offset = 0x4, fixed_abs, tag = 'smem constant byte address 0x4 - core index']
  #allocation1 [shape = 'u32[72,128]{1,0:T(1,128)}', space=vmem, size = 0x9000, scoped, tag = 'internal scratch']
  %s0 = inlined_call_operand.vmem [shape: f32[36,32], index: 0, kind: input, shape index: {}]
  %s1 = inlined_call_operand.vmem [shape: f32[2,8,8], index: 1, kind: input, shape index: {}]
  %s2 = inlined_call_operand.vmem [shape: f32[2,1,10], index: 2, kind: input, shape index: {}]
  %s3 = inlined_call_operand.vmem [shape: f32[32,768], index: 3, kind: input, shape index: {}]
  %s4 = inlined_call_operand.vmem [shape: f32[64,64], index: 4, kind: input, shape index: {}]
  %s5 = inlined_call_operand.vmem [shape: f32[1,960], index: 5, kind: input, shape index: {}]
  %s6 = inlined_call_operand.vmem [shape: f32[16,128], index: 6, kind: output, shape index: {0}]
  %s7 = inlined_call_operand.hbm [shape: f32[2,4,8,10], index: 7, kind: output, shape index: {1}]
  %8 = xla_tuple %s6, %s7
  %s9 = sld [smem:[#allocation0]]
  $region42: #{decoder_forward.1} parent=0
    _
  %s11 = ssub.s32 1, %s9
  %s12 = scalar_select 0, %s11, %s9
  $region1: #{decoder_forward.1} parent=0
    #allocation2 [shape = 'u8[32768]{0}', space=vmem, size = 0x8000, scoped, tag = 'output window, operand 1, single buffered']
    #allocation3 [shape = 's32[1]{0}', space=sflag, size = 0x4, scoped, tag = 'scoped memory for decoder_forward.1']
    %13 = vsyncpa [#allocation3], 0
    // Predicated region
    $region2: #{decoder_forward.1} parent=1 // pred_check
      _
    $region3: #{decoder_forward.1} parent=1 // pred_check_branch
      %15 = sbr.rel (0) target = $region5
    $region4: #{decoder_forward.1} parent=1 // pred_region
      _
    $region5: #{decoder_forward.1} parent=1 // pred_fallthru
      _
    // Predicated region
    $region6: #{decoder_forward.1} parent=1 // pred_check
      _
    $region7: #{decoder_forward.1} parent=1 // pred_check_branch
      %17 = sbr.rel (0) target = $region9
    $region8: #{decoder_forward.1} parent=1 // pred_region
      _
    $region9: #{decoder_forward.1} parent=1 // pred_fallthru
      _
    // Predicated region
    $region10: #{decoder_forward.1} parent=1 // pred_check
      _
    $region11: #{decoder_forward.1} parent=1 // pred_check_branch
      %19 = sbr.rel (0) target = $region13
    $region12: #{decoder_forward.1} parent=1 // pred_region
      _
    $region13: #{decoder_forward.1} parent=1 // pred_fallthru
      _
    // Predicated region
    $region14: #{decoder_forward.1} parent=1 // pred_check
      _
    $region15: #{decoder_forward.1} parent=1 // pred_check_branch
      %21 = sbr.rel (0) target = $region17
    $region16: #{decoder_forward.1} parent=1 // pred_region
      _
    $region17: #{decoder_forward.1} parent=1 // pred_fallthru
      _
    // Predicated region
    $region18: #{decoder_forward.1} parent=1 // pred_check
      _
    $region19: #{decoder_forward.1} parent=1 // pred_check_branch
      %23 = sbr.rel (0) target = $region21
    $region20: #{decoder_forward.1} parent=1 // pred_region
      _
    $region21: #{decoder_forward.1} parent=1 // pred_fallthru
      _
    // Predicated region
    $region22: #{decoder_forward.1} parent=1 // pred_check
      _
    $region23: #{decoder_forward.1} parent=1 // pred_check_branch
      %25 = sbr.rel (0) target = $region25
    $region24: #{decoder_forward.1} parent=1 // pred_region
      _
    $region25: #{decoder_forward.1} parent=1 // pred_fallthru
      _
    %v26 = vld [vmem:[%s0] sm:$0xff]
    %v27 = vld [vmem:[%s0 + $0x8] sm:$0xff]
    %v28 = vld [vmem:[%s0 + $0x10] sm:$0xff]
    %v29 = vld [vmem:[%s0 + $0x18] sm:$0xff]
    %v30 = vld [vmem:[%s0 + $0x20] sm:$0xf]
    %v31 = vld [vmem:[%s1] sm:$0xff]
    %v32 = vld [vmem:[%s1 + $0x8] sm:$0xff]
    %v33 = vld [vmem:[%s2] sm:$0x1]
    %v34 = vld [vmem:[%s2 + $0x1] sm:$0x1]
    %v35 = vld [vmem:[%s3] sm:$0xff]
    %v36 = vld [vmem:[%s3 + $0x30] sm:$0xff]
    %v37 = vld [vmem:[%s3 + $0x60] sm:$0xff]
    %v38 = vld [vmem:[%s3 + $0x90] sm:$0xff]
    %v39 = vld [vmem:[%s5] sm:$0x1]
    %v41 = vperm.slane %v39, 0
    %vm43 = vcmask 261120
    %v45 = vsel %vm43, %v28, 0
    %v48 = vsel %vm43, %v29, 0
    %v51 = vsel %vm43, %v30, 0
    %53 = vmatpush.msra.mxu0 0.0
    %54 = vmatpush.msra.mxu0 0.0
    %55 = vmatpush.msra.mxu0 0.0
    %56 = vmatpush.msra.mxu0 0.0
    %57 = vmatpush.msra.mxu0 0.0
    %58 = vmatpush.msra.mxu0 0.0
    %59 = vmatpush.msra.mxu0 0.0
    %60 = vmatpush.msra.mxu0 0.0
    %61 = vmatpush.msra.mxu0 0.0
    %62 = vmatpush.msra.mxu0 0.0
    %63 = vmatpush.msra.mxu0 0.0
    %64 = vmatpush.msra.mxu0 0.0
    %65 = vmatpush.msra.mxu0 %v38
    %66 = vmatpush.msra.mxu0 %v37
    %67 = vmatpush.msra.mxu0 %v36
    %68 = vmatpush.msra.mxu0 %v35
    %69 = vmatmul.f32.gmra.mxu0 %v45
    %v70 = vpop.f32.mrf.mxu0
    %v71 = vadd.f32 %v41, %v70
    %72 = vmatmul.f32.gmra.mxu0 %v48
    %v73 = vpop.f32.mrf.mxu0
    %v74 = vadd.f32 %v41, %v73
    %75 = vmatmul.f32.gmra.mxu0 %v51
    %v76 = vpop.f32.mrf.mxu0
    %v77 = vadd.f32 %v41, %v76
    %78 = vdwg.mxu0
    %v79 = vld [vmem:[%s5 + $0x3] sm:$0x1]
    %v80 = vld [vmem:[%s3 + $0x8] sm:$0xff]
    %v81 = vld [vmem:[%s3 + $0x38] sm:$0xff]
    %v82 = vld [vmem:[%s3 + $0x68] sm:$0xff]
    %v83 = vld [vmem:[%s3 + $0x98] sm:$0xff]
    %v84 = vld [vmem:[%s5 + $0x1] sm:$0x1]
    %v86 = vperm.slane %v84, 0
    %v89 = vsel %vm43, %v26, 0
    %v92 = vsel %vm43, %v27, 0
    %94 = vmatpush.msra.mxu0 0.0
    %95 = vmatpush.msra.mxu0 0.0
    %96 = vmatpush.msra.mxu0 0.0
    %97 = vmatpush.msra.mxu0 0.0
    %98 = vmatpush.msra.mxu0 0.0
    %99 = vmatpush.msra.mxu0 0.0
    %100 = vmatpush.msra.mxu0 0.0
    %101 = vmatpush.msra.mxu0 0.0
    %102 = vmatpush.msra.mxu0 0.0
    %103 = vmatpush.msra.mxu0 0.0
    %104 = vmatpush.msra.mxu0 0.0
    %105 = vmatpush.msra.mxu0 0.0
    %106 = vmatpush.msra.mxu0 %v83
    %107 = vmatpush.msra.mxu0 %v82
    %108 = vmatpush.msra.mxu0 %v81
    %109 = vmatpush.msra.mxu0 %v80
    %110 = vmatmul.f32.gmra.mxu0 %v89
    %v111 = vpop.f32.mrf.mxu0
    %v112 = vadd.f32 %v86, %v111
    %113 = vmatmul.f32.gmra.mxu0 %v92
    %v114 = vpop.f32.mrf.mxu0
    %v115 = vadd.f32 %v86, %v114
    %116 = vdwg.mxu0
    %v117 = vld [vmem:[%s3 + $0x10] sm:$0xff]
    %v118 = vld [vmem:[%s3 + $0x40] sm:$0xff]
    %v119 = vld [vmem:[%s3 + $0x70] sm:$0xff]
    %v120 = vld [vmem:[%s3 + $0xa0] sm:$0xff]
    %v121 = vld [vmem:[%s5 + $0x2] sm:$0x1]
    %123 = vrot.lane.b32.xlu0 %v112, 96
    %v124 = vpop.permute.xlu0 %123
    %vm125 = vcmask 64512
    %v126 = vsel %vm125, %v112, 0
    %v128 = vsel %vm125, %v124, 0
    %130 = vmatpush.xpose.msra.mxu0 0.0
    %131 = vmatpush.xpose.msra.mxu0 0.0
    %132 = vmatpush.xpose.msra.mxu0 0.0
    %133 = vmatpush.xpose.msra.mxu0 0.0
    %134 = vmatpush.xpose.msra.mxu0 0.0
    %135 = vmatpush.xpose.msra.mxu0 0.0
    %136 = vmatpush.xpose.msra.mxu0 0.0
    %137 = vmatpush.xpose.msra.mxu0 0.0
    %138 = vmatpush.xpose.msra.mxu0 0.0
    %139 = vmatpush.xpose.msra.mxu0 0.0
    %140 = vmatpush.xpose.msra.mxu0 0.0
    %141 = vmatpush.xpose.msra.mxu0 0.0
    %142 = vmatpush.xpose.msra.mxu0 0.0
    %143 = vmatpush.xpose.msra.mxu0 0.0
    %144 = vmatpush.xpose.msra.mxu0 0.0
    %145 = vmatpush.xpose.msra.mxu0 %v128
    %146 = vmatmul.f32.gmra.mxu0 %v126
    %v147 = vpop.f32.mrf.mxu0
    %v148 = vadd.f32 %v31, %v147
    %149 = vdwg.mxu0
    %151 = vrot.lane.b32.xlu0 %v115, 96
    %v152 = vpop.permute.xlu0 %151
    %v153 = vsel %vm125, %v115, 0
    %v155 = vsel %vm125, %v152, 0
    %157 = vmatpush.xpose.msra.mxu0 0.0
    %158 = vmatpush.xpose.msra.mxu0 0.0
    %159 = vmatpush.xpose.msra.mxu0 0.0
    %160 = vmatpush.xpose.msra.mxu0 0.0
    %161 = vmatpush.xpose.msra.mxu0 0.0
    %162 = vmatpush.xpose.msra.mxu0 0.0
    %163 = vmatpush.xpose.msra.mxu0 0.0
    %164 = vmatpush.xpose.msra.mxu0 0.0
    %165 = vmatpush.xpose.msra.mxu0 0.0
    %166 = vmatpush.xpose.msra.mxu0 0.0
    %167 = vmatpush.xpose.msra.mxu0 0.0
    %168 = vmatpush.xpose.msra.mxu0 0.0
    %169 = vmatpush.xpose.msra.mxu0 0.0
    %170 = vmatpush.xpose.msra.mxu0 0.0
    %171 = vmatpush.xpose.msra.mxu0 0.0
    %172 = vmatpush.xpose.msra.mxu0 %v155
    %173 = vmatmul.f32.gmra.mxu0 %v153
    %v174 = vpop.f32.mrf.mxu0
    %v175 = vadd.f32 %v32, %v174
    %176 = vdwg.mxu0
    %177 = vrot.lane.b32.xlu0 %v112, 120
    %v178 = vpop.permute.xlu0 %177
    %179 = vrot.lane.b32.xlu0 %v112, 88
    %v180 = vpop.permute.xlu0 %179
    %v181 = vsel %vm125, %v178, 0
    %v183 = vsel %vm125, %v180, 0
    %185 = vmatpush.xpose.msra.mxu0 0.0
    %186 = vmatpush.xpose.msra.mxu0 0.0
    %187 = vmatpush.xpose.msra.mxu0 0.0
    %188 = vmatpush.xpose.msra.mxu0 0.0
    %189 = vmatpush.xpose.msra.mxu0 0.0
    %190 = vmatpush.xpose.msra.mxu0 0.0
    %191 = vmatpush.xpose.msra.mxu0 0.0
    %192 = vmatpush.xpose.msra.mxu0 0.0
    %193 = vmatpush.xpose.msra.mxu0 0.0
    %194 = vmatpush.xpose.msra.mxu0 0.0
    %195 = vmatpush.xpose.msra.mxu0 0.0
    %196 = vmatpush.xpose.msra.mxu0 0.0
    %197 = vmatpush.xpose.msra.mxu0 0.0
    %198 = vmatpush.xpose.msra.mxu0 0.0
    %199 = vmatpush.xpose.msra.mxu0 0.0
    %200 = vmatpush.xpose.msra.mxu0 %v183
    %201 = vmatmul.f32.gmra.mxu0 %v181
    %v202 = vpop.f32.mrf.mxu0
    %v203 = vadd.f32 %v31, %v202
    %204 = vdwg.mxu0
    %205 = vrot.lane.b32.xlu0 %v115, 120
    %v206 = vpop.permute.xlu0 %205
    %207 = vrot.lane.b32.xlu0 %v115, 88
    %v208 = vpop.permute.xlu0 %207
    %v209 = vsel %vm125, %v206, 0
    %v211 = vsel %vm125, %v208, 0
    %213 = vmatpush.xpose.msra.mxu0 0.0
    %214 = vmatpush.xpose.msra.mxu0 0.0
    %215 = vmatpush.xpose.msra.mxu0 0.0
    %216 = vmatpush.xpose.msra.mxu0 0.0
    %217 = vmatpush.xpose.msra.mxu0 0.0
    %218 = vmatpush.xpose.msra.mxu0 0.0
    %219 = vmatpush.xpose.msra.mxu0 0.0
    %220 = vmatpush.xpose.msra.mxu0 0.0
    %221 = vmatpush.xpose.msra.mxu0 0.0
    %222 = vmatpush.xpose.msra.mxu0 0.0
    %223 = vmatpush.xpose.msra.mxu0 0.0
    %224 = vmatpush.xpose.msra.mxu0 0.0
    %225 = vmatpush.xpose.msra.mxu0 0.0
    %226 = vmatpush.xpose.msra.mxu0 0.0
    %227 = vmatpush.xpose.msra.mxu0 0.0
    %228 = vmatpush.xpose.msra.mxu0 %v211
    %229 = vmatmul.f32.gmra.mxu0 %v209
    %v230 = vpop.f32.mrf.mxu0
    %v231 = vadd.f32 %v32, %v230
    %232 = vdwg.mxu0
    %233 = vrot.lane.b32.xlu0 %v112, 112
    %v234 = vpop.permute.xlu0 %233
    %235 = vrot.lane.b32.xlu0 %v112, 80
    %v236 = vpop.permute.xlu0 %235
    %v237 = vsel %vm125, %v234, 0
    %v239 = vsel %vm125, %v236, 0
    %241 = vmatpush.xpose.msra.mxu0 0.0
    %242 = vmatpush.xpose.msra.mxu0 0.0
    %243 = vmatpush.xpose.msra.mxu0 0.0
    %244 = vmatpush.xpose.msra.mxu0 0.0
    %245 = vmatpush.xpose.msra.mxu0 0.0
    %246 = vmatpush.xpose.msra.mxu0 0.0
    %247 = vmatpush.xpose.msra.mxu0 0.0
    %248 = vmatpush.xpose.msra.mxu0 0.0
    %249 = vmatpush.xpose.msra.mxu0 0.0
    %250 = vmatpush.xpose.msra.mxu0 0.0
    %251 = vmatpush.xpose.msra.mxu0 0.0
    %252 = vmatpush.xpose.msra.mxu0 0.0
    %253 = vmatpush.xpose.msra.mxu0 0.0
    %254 = vmatpush.xpose.msra.mxu0 0.0
    %255 = vmatpush.xpose.msra.mxu0 0.0
    %256 = vmatpush.xpose.msra.mxu0 %v239
    %257 = vmatmul.f32.gmra.mxu0 %v237
    %v258 = vpop.f32.mrf.mxu0
    %v259 = vadd.f32 %v31, %v258
    %260 = vdwg.mxu0
    %261 = vrot.lane.b32.xlu0 %v115, 112
    %v262 = vpop.permute.xlu0 %261
    %263 = vrot.lane.b32.xlu0 %v115, 80
    %v264 = vpop.permute.xlu0 %263
    %v265 = vsel %vm125, %v262, 0
    %v267 = vsel %vm125, %v264, 0
    %269 = vmatpush.xpose.msra.mxu0 0.0
    %270 = vmatpush.xpose.msra.mxu0 0.0
    %271 = vmatpush.xpose.msra.mxu0 0.0
    %272 = vmatpush.xpose.msra.mxu0 0.0
    %273 = vmatpush.xpose.msra.mxu0 0.0
    %274 = vmatpush.xpose.msra.mxu0 0.0
    %275 = vmatpush.xpose.msra.mxu0 0.0
    %276 = vmatpush.xpose.msra.mxu0 0.0
    %277 = vmatpush.xpose.msra.mxu0 0.0
    %278 = vmatpush.xpose.msra.mxu0 0.0
    %279 = vmatpush.xpose.msra.mxu0 0.0
    %280 = vmatpush.xpose.msra.mxu0 0.0
    %281 = vmatpush.xpose.msra.mxu0 0.0
    %282 = vmatpush.xpose.msra.mxu0 0.0
    %283 = vmatpush.xpose.msra.mxu0 0.0
    %284 = vmatpush.xpose.msra.mxu0 %v267
    %285 = vmatmul.f32.gmra.mxu0 %v265
    %v286 = vpop.f32.mrf.mxu0
    %v287 = vadd.f32 %v32, %v286
    %288 = vdwg.mxu0
    %289 = vrot.lane.b32.xlu0 %v112, 104
    %v290 = vpop.permute.xlu0 %289
    %291 = vrot.lane.b32.xlu0 %v112, 72
    %v292 = vpop.permute.xlu0 %291
    %v293 = vsel %vm125, %v290, 0
    %v295 = vsel %vm125, %v292, 0
    %297 = vmatpush.xpose.msra.mxu0 0.0
    %298 = vmatpush.xpose.msra.mxu0 0.0
    %299 = vmatpush.xpose.msra.mxu0 0.0
    %300 = vmatpush.xpose.msra.mxu0 0.0
    %301 = vmatpush.xpose.msra.mxu0 0.0
    %302 = vmatpush.xpose.msra.mxu0 0.0
    %303 = vmatpush.xpose.msra.mxu0 0.0
    %304 = vmatpush.xpose.msra.mxu0 0.0
    %305 = vmatpush.xpose.msra.mxu0 0.0
    %306 = vmatpush.xpose.msra.mxu0 0.0
    %307 = vmatpush.xpose.msra.mxu0 0.0
    %308 = vmatpush.xpose.msra.mxu0 0.0
    %309 = vmatpush.xpose.msra.mxu0 0.0
    %310 = vmatpush.xpose.msra.mxu0 0.0
    %311 = vmatpush.xpose.msra.mxu0 0.0
    %312 = vmatpush.xpose.msra.mxu0 %v295
    %313 = vmatmul.f32.gmra.mxu0 %v293
    %v314 = vpop.f32.mrf.mxu0
    %v315 = vadd.f32 %v31, %v314
    %316 = vdwg.mxu0
    %317 = vrot.lane.b32.xlu0 %v115, 104
    %v318 = vpop.permute.xlu0 %317
    %319 = vrot.lane.b32.xlu0 %v115, 72
    %v320 = vpop.permute.xlu0 %319
    %v321 = vsel %vm125, %v318, 0
    %v323 = vsel %vm125, %v320, 0
    %325 = vmatpush.xpose.msra.mxu0 0.0
    %326 = vmatpush.xpose.msra.mxu0 0.0
    %327 = vmatpush.xpose.msra.mxu0 0.0
    %328 = vmatpush.xpose.msra.mxu0 0.0
    %329 = vmatpush.xpose.msra.mxu0 0.0
    %330 = vmatpush.xpose.msra.mxu0 0.0
    %331 = vmatpush.xpose.msra.mxu0 0.0
    %332 = vmatpush.xpose.msra.mxu0 0.0
    %333 = vmatpush.xpose.msra.mxu0 0.0
    %334 = vmatpush.xpose.msra.mxu0 0.0
    %335 = vmatpush.xpose.msra.mxu0 0.0
    %336 = vmatpush.xpose.msra.mxu0 0.0
    %337 = vmatpush.xpose.msra.mxu0 0.0
    %338 = vmatpush.xpose.msra.mxu0 0.0
    %339 = vmatpush.xpose.msra.mxu0 0.0
    %340 = vmatpush.xpose.msra.mxu0 %v323
    %341 = vmatmul.f32.gmra.mxu0 %v321
    %v342 = vpop.f32.mrf.mxu0
    %v343 = vadd.f32 %v32, %v342
    %344 = vdwg.mxu0
    %v345 = vsel %vm125, %v148, -inf
    %346 = vmax.xlane.f32.xlu0 %v345
    %v347 = vpop.xlane.xlu0 %346
    %v348 = vsel %vm125, %v175, -inf
    %349 = vmax.xlane.f32.xlu0 %v348
    %v350 = vpop.xlane.xlu0 %349
    %v351 = vsub.f32 %v148, %v347
    %v352 = vsub.f32 %v175, %v350
    %v353 = vmul.f32 %v351, 1.442695
    %v354 = vpow.pop %v353
    %v355 = vmul.f32 %v352, 1.442695
    %v356 = vpow.pop %v355
    %v357 = vsel %vm125, %v354, 0.0
    %358 = vadd.xlane.f32.xlu0 %v357
    %v359 = vpop.xlane.xlu0 %358
    %v360 = vsel %vm125, %v356, 0.0
    %361 = vadd.xlane.f32.xlu0 %v360
    %v362 = vpop.xlane.xlu0 %361
    %v363 = vrcp.pop %v359
    %v364 = vrcp.pop %v362
    %v365 = vmul.f32 %v354, %v363
    %v366 = vmul.f32 %v356, %v364
    %367 = vrot.lane.b32.xlu0 %v112, 64
    %v368 = vpop.permute.xlu0 %367
    %v371 = vsel %vm125, %v365, 0
    %373 = vmatpush.msra.mxu0 0.0
    %374 = vmatpush.msra.mxu0 0.0
    %375 = vmatpush.msra.mxu0 0.0
    %376 = vmatpush.msra.mxu0 0.0
    %377 = vmatpush.msra.mxu0 0.0
    %378 = vmatpush.msra.mxu0 0.0
    %379 = vmatpush.msra.mxu0 0.0
    %380 = vmatpush.msra.mxu0 0.0
    %381 = vmatpush.msra.mxu0 0.0
    %382 = vmatpush.msra.mxu0 0.0
    %383 = vmatpush.msra.mxu0 0.0
    %384 = vmatpush.msra.mxu0 0.0
    %385 = vmatpush.msra.mxu0 0.0
    %386 = vmatpush.msra.mxu0 0.0
    %387 = vmatpush.msra.mxu0 0.0
    %388 = vmatpush.msra.mxu0 %v368
    %389 = vmatmul.f32.gmra.mxu0 %v371
    %v390 = vpop.f32.mrf.mxu0
    %v391 = vadd.f32 0.0, %v390
    %392 = vdwg.mxu0
    %393 = vrot.lane.b32.xlu0 %v115, 64
    %v394 = vpop.permute.xlu0 %393
    %v397 = vsel %vm125, %v366, 0
    %399 = vmatpush.msra.mxu0 0.0
    %400 = vmatpush.msra.mxu0 0.0
    %401 = vmatpush.msra.mxu0 0.0
    %402 = vmatpush.msra.mxu0 0.0
    %403 = vmatpush.msra.mxu0 0.0
    %404 = vmatpush.msra.mxu0 0.0
    %405 = vmatpush.msra.mxu0 0.0
    %406 = vmatpush.msra.mxu0 0.0
    %407 = vmatpush.msra.mxu0 0.0
    %408 = vmatpush.msra.mxu0 0.0
    %409 = vmatpush.msra.mxu0 0.0
    %410 = vmatpush.msra.mxu0 0.0
    %411 = vmatpush.msra.mxu0 0.0
    %412 = vmatpush.msra.mxu0 0.0
    %413 = vmatpush.msra.mxu0 0.0
    %414 = vmatpush.msra.mxu0 %v394
    %415 = vmatmul.f32.gmra.mxu0 %v397
    %v416 = vpop.f32.mrf.mxu0
    %v417 = vadd.f32 0.0, %v416
    %418 = vdwg.mxu0
    %420 = vrot.lane.b32.xlu0 %v117, 64
    %v421 = vpop.permute.xlu0 %420
    %v424 = vsel %vm125, %v391, 0
    %v427 = vsel %vm125, %v417, 0
    %429 = vmatpush.msra.mxu0 0.0
    %430 = vmatpush.msra.mxu0 0.0
    %431 = vmatpush.msra.mxu0 0.0
    %432 = vmatpush.msra.mxu0 0.0
    %433 = vmatpush.msra.mxu0 0.0
    %434 = vmatpush.msra.mxu0 0.0
    %435 = vmatpush.msra.mxu0 0.0
    %436 = vmatpush.msra.mxu0 0.0
    %437 = vmatpush.msra.mxu0 0.0
    %438 = vmatpush.msra.mxu0 0.0
    %439 = vmatpush.msra.mxu0 0.0
    %440 = vmatpush.msra.mxu0 0.0
    %441 = vmatpush.msra.mxu0 0.0
    %442 = vmatpush.msra.mxu0 0.0
    %443 = vmatpush.msra.mxu0 0.0
    %444 = vmatpush.msra.mxu0 %v421
    %445 = vmatmul.f32.gmra.mxu0 %v424
    %v446 = vpop.f32.mrf.mxu0
    %v447 = vadd.f32 0.0, %v446
    %448 = vmatmul.f32.gmra.mxu0 %v427
    %v449 = vpop.f32.mrf.mxu0
    %v450 = vadd.f32 0.0, %v449
    %451 = vdwg.mxu0
    %v453 = vperm.slane %v121, 0
    %457 = vrot.lane.b32.xlu0 %v447, 64
    %v458 = vpop.permute.xlu0 %457
    %459 = vrot.lane.b32.xlu0 %v450, 64
    %v460 = vpop.permute.xlu0 %459
    %v463 = vadd.f32 %v453, %v458
    %v464 = vadd.f32 %v453, %v460
    %v465 = vsel %vm125, %v203, -inf
    %466 = vmax.xlane.f32.xlu0 %v465
    %v467 = vpop.xlane.xlu0 %466
    %v468 = vsel %vm125, %v231, -inf
    %469 = vmax.xlane.f32.xlu0 %v468
    %v470 = vpop.xlane.xlu0 %469
    %v471 = vsub.f32 %v203, %v467
    %v472 = vsub.f32 %v231, %v470
    %v473 = vmul.f32 %v471, 1.442695
    %v474 = vpow.pop %v473
    %v475 = vmul.f32 %v472, 1.442695
    %v476 = vpow.pop %v475
    %v477 = vsel %vm125, %v474, 0.0
    %478 = vadd.xlane.f32.xlu0 %v477
    %v479 = vpop.xlane.xlu0 %478
    %v480 = vsel %vm125, %v476, 0.0
    %481 = vadd.xlane.f32.xlu0 %v480
    %v482 = vpop.xlane.xlu0 %481
    %v483 = vrcp.pop %v479
    %v484 = vrcp.pop %v482
    %v485 = vmul.f32 %v474, %v483
    %v486 = vmul.f32 %v476, %v484
    %487 = vrot.lane.b32.xlu0 %v112, 56
    %v488 = vpop.permute.xlu0 %487
    %v491 = vsel %vm125, %v485, 0
    %493 = vmatpush.msra.mxu0 0.0
    %494 = vmatpush.msra.mxu0 0.0
    %495 = vmatpush.msra.mxu0 0.0
    %496 = vmatpush.msra.mxu0 0.0
    %497 = vmatpush.msra.mxu0 0.0
    %498 = vmatpush.msra.mxu0 0.0
    %499 = vmatpush.msra.mxu0 0.0
    %500 = vmatpush.msra.mxu0 0.0
    %501 = vmatpush.msra.mxu0 0.0
    %502 = vmatpush.msra.mxu0 0.0
    %503 = vmatpush.msra.mxu0 0.0
    %504 = vmatpush.msra.mxu0 0.0
    %505 = vmatpush.msra.mxu0 0.0
    %506 = vmatpush.msra.mxu0 0.0
    %507 = vmatpush.msra.mxu0 0.0
    %508 = vmatpush.msra.mxu0 %v488
    %509 = vmatmul.f32.gmra.mxu0 %v491
    %v510 = vpop.f32.mrf.mxu0
    %v511 = vadd.f32 0.0, %v510
    %512 = vdwg.mxu0
    %513 = vrot.lane.b32.xlu0 %v115, 56
    %v514 = vpop.permute.xlu0 %513
    %v517 = vsel %vm125, %v486, 0
    %519 = vmatpush.msra.mxu0 0.0
    %520 = vmatpush.msra.mxu0 0.0
    %521 = vmatpush.msra.mxu0 0.0
    %522 = vmatpush.msra.mxu0 0.0
    %523 = vmatpush.msra.mxu0 0.0
    %524 = vmatpush.msra.mxu0 0.0
    %525 = vmatpush.msra.mxu0 0.0
    %526 = vmatpush.msra.mxu0 0.0
    %527 = vmatpush.msra.mxu0 0.0
    %528 = vmatpush.msra.mxu0 0.0
    %529 = vmatpush.msra.mxu0 0.0
    %530 = vmatpush.msra.mxu0 0.0
    %531 = vmatpush.msra.mxu0 0.0
    %532 = vmatpush.msra.mxu0 0.0
    %533 = vmatpush.msra.mxu0 0.0
    %534 = vmatpush.msra.mxu0 %v514
    %535 = vmatmul.f32.gmra.mxu0 %v517
    %v536 = vpop.f32.mrf.mxu0
    %v537 = vadd.f32 0.0, %v536
    %538 = vdwg.mxu0
    %540 = vrot.lane.b32.xlu0 %v118, 64
    %v541 = vpop.permute.xlu0 %540
    %v544 = vsel %vm125, %v511, 0
    %v547 = vsel %vm125, %v537, 0
    %549 = vmatpush.msra.mxu0 0.0
    %550 = vmatpush.msra.mxu0 0.0
    %551 = vmatpush.msra.mxu0 0.0
    %552 = vmatpush.msra.mxu0 0.0
    %553 = vmatpush.msra.mxu0 0.0
    %554 = vmatpush.msra.mxu0 0.0
    %555 = vmatpush.msra.mxu0 0.0
    %556 = vmatpush.msra.mxu0 0.0
    %557 = vmatpush.msra.mxu0 0.0
    %558 = vmatpush.msra.mxu0 0.0
    %559 = vmatpush.msra.mxu0 0.0
    %560 = vmatpush.msra.mxu0 0.0
    %561 = vmatpush.msra.mxu0 0.0
    %562 = vmatpush.msra.mxu0 0.0
    %563 = vmatpush.msra.mxu0 0.0
    %564 = vmatpush.msra.mxu0 %v541
    %565 = vmatmul.f32.gmra.mxu0 %v544
    %v566 = vpop.f32.mrf.mxu0
    %v567 = vadd.f32 0.0, %v566
    %568 = vmatmul.f32.gmra.mxu0 %v547
    %v569 = vpop.f32.mrf.mxu0
    %v570 = vadd.f32 0.0, %v569
    %571 = vdwg.mxu0
    %574 = vrot.lane.b32.xlu0 %v567, 64
    %v575 = vpop.permute.xlu0 %574
    %576 = vrot.lane.b32.xlu0 %v570, 64
    %v577 = vpop.permute.xlu0 %576
    %v580 = vadd.f32 %v463, %v575
    %v581 = vadd.f32 %v464, %v577
    %v582 = vsel %vm125, %v259, -inf
    %583 = vmax.xlane.f32.xlu0 %v582
    %v584 = vpop.xlane.xlu0 %583
    %v585 = vsel %vm125, %v287, -inf
    %586 = vmax.xlane.f32.xlu0 %v585
    %v587 = vpop.xlane.xlu0 %586
    %v588 = vsub.f32 %v259, %v584
    %v589 = vsub.f32 %v287, %v587
    %v590 = vmul.f32 %v588, 1.442695
    %v591 = vpow.pop %v590
    %v592 = vmul.f32 %v589, 1.442695
    %v593 = vpow.pop %v592
    %v594 = vsel %vm125, %v591, 0.0
    %595 = vadd.xlane.f32.xlu0 %v594
    %v596 = vpop.xlane.xlu0 %595
    %v597 = vsel %vm125, %v593, 0.0
    %598 = vadd.xlane.f32.xlu0 %v597
    %v599 = vpop.xlane.xlu0 %598
    %v600 = vrcp.pop %v596
    %v601 = vrcp.pop %v599
    %v602 = vmul.f32 %v591, %v600
    %v603 = vmul.f32 %v593, %v601
    %604 = vrot.lane.b32.xlu0 %v112, 48
    %v605 = vpop.permute.xlu0 %604
    %v608 = vsel %vm125, %v602, 0
    %610 = vmatpush.msra.mxu0 0.0
    %611 = vmatpush.msra.mxu0 0.0
    %612 = vmatpush.msra.mxu0 0.0
    %613 = vmatpush.msra.mxu0 0.0
    %614 = vmatpush.msra.mxu0 0.0
    %615 = vmatpush.msra.mxu0 0.0
    %616 = vmatpush.msra.mxu0 0.0
    %617 = vmatpush.msra.mxu0 0.0
    %618 = vmatpush.msra.mxu0 0.0
    %619 = vmatpush.msra.mxu0 0.0
    %620 = vmatpush.msra.mxu0 0.0
    %621 = vmatpush.msra.mxu0 0.0
    %622 = vmatpush.msra.mxu0 0.0
    %623 = vmatpush.msra.mxu0 0.0
    %624 = vmatpush.msra.mxu0 0.0
    %625 = vmatpush.msra.mxu0 %v605
    %626 = vmatmul.f32.gmra.mxu0 %v608
    %v627 = vpop.f32.mrf.mxu0
    %v628 = vadd.f32 0.0, %v627
    %629 = vdwg.mxu0
    %630 = vrot.lane.b32.xlu0 %v115, 48
    %v631 = vpop.permute.xlu0 %630
    %v634 = vsel %vm125, %v603, 0
    %636 = vmatpush.msra.mxu0 0.0
    %637 = vmatpush.msra.mxu0 0.0
    %638 = vmatpush.msra.mxu0 0.0
    %639 = vmatpush.msra.mxu0 0.0
    %640 = vmatpush.msra.mxu0 0.0
    %641 = vmatpush.msra.mxu0 0.0
    %642 = vmatpush.msra.mxu0 0.0
    %643 = vmatpush.msra.mxu0 0.0
    %644 = vmatpush.msra.mxu0 0.0
    %645 = vmatpush.msra.mxu0 0.0
    %646 = vmatpush.msra.mxu0 0.0
    %647 = vmatpush.msra.mxu0 0.0
    %648 = vmatpush.msra.mxu0 0.0
    %649 = vmatpush.msra.mxu0 0.0
    %650 = vmatpush.msra.mxu0 0.0
    %651 = vmatpush.msra.mxu0 %v631
    %652 = vmatmul.f32.gmra.mxu0 %v634
    %v653 = vpop.f32.mrf.mxu0
    %v654 = vadd.f32 0.0, %v653
    %655 = vdwg.mxu0
    %657 = vrot.lane.b32.xlu0 %v119, 64
    %v658 = vpop.permute.xlu0 %657
    %v661 = vsel %vm125, %v628, 0
    %v664 = vsel %vm125, %v654, 0
    %666 = vmatpush.msra.mxu0 0.0
    %667 = vmatpush.msra.mxu0 0.0
    %668 = vmatpush.msra.mxu0 0.0
    %669 = vmatpush.msra.mxu0 0.0
    %670 = vmatpush.msra.mxu0 0.0
    %671 = vmatpush.msra.mxu0 0.0
    %672 = vmatpush.msra.mxu0 0.0
    %673 = vmatpush.msra.mxu0 0.0
    %674 = vmatpush.msra.mxu0 0.0
    %675 = vmatpush.msra.mxu0 0.0
    %676 = vmatpush.msra.mxu0 0.0
    %677 = vmatpush.msra.mxu0 0.0
    %678 = vmatpush.msra.mxu0 0.0
    %679 = vmatpush.msra.mxu0 0.0
    %680 = vmatpush.msra.mxu0 0.0
    %681 = vmatpush.msra.mxu0 %v658
    %682 = vmatmul.f32.gmra.mxu0 %v661
    %v683 = vpop.f32.mrf.mxu0
    %v684 = vadd.f32 0.0, %v683
    %685 = vmatmul.f32.gmra.mxu0 %v664
    %v686 = vpop.f32.mrf.mxu0
    %v687 = vadd.f32 0.0, %v686
    %688 = vdwg.mxu0
    %691 = vrot.lane.b32.xlu0 %v684, 64
    %v692 = vpop.permute.xlu0 %691
    %693 = vrot.lane.b32.xlu0 %v687, 64
    %v694 = vpop.permute.xlu0 %693
    %v697 = vadd.f32 %v580, %v692
    %v698 = vadd.f32 %v581, %v694
    %v699 = vsel %vm125, %v315, -inf
    %700 = vmax.xlane.f32.xlu0 %v699
    %v701 = vpop.xlane.xlu0 %700
    %v702 = vsel %vm125, %v343, -inf
    %703 = vmax.xlane.f32.xlu0 %v702
    %v704 = vpop.xlane.xlu0 %703
    %v705 = vsub.f32 %v315, %v701
    %v706 = vsub.f32 %v343, %v704
    %v707 = vmul.f32 %v705, 1.442695
    %v708 = vpow.pop %v707
    %v709 = vmul.f32 %v706, 1.442695
    %v710 = vpow.pop %v709
    %v711 = vsel %vm125, %v708, 0.0
    %712 = vadd.xlane.f32.xlu0 %v711
    %v713 = vpop.xlane.xlu0 %712
    %v714 = vsel %vm125, %v710, 0.0
    %715 = vadd.xlane.f32.xlu0 %v714
    %v716 = vpop.xlane.xlu0 %715
    %v717 = vrcp.pop %v713
    %v718 = vrcp.pop %v716
    %v719 = vmul.f32 %v708, %v717
    %v720 = vmul.f32 %v710, %v718
    %721 = vrot.lane.b32.xlu0 %v112, 40
    %v722 = vpop.permute.xlu0 %721
    %v725 = vsel %vm125, %v719, 0
    %727 = vmatpush.msra.mxu0 0.0
    %728 = vmatpush.msra.mxu0 0.0
    %729 = vmatpush.msra.mxu0 0.0
    %730 = vmatpush.msra.mxu0 0.0
    %731 = vmatpush.msra.mxu0 0.0
    %732 = vmatpush.msra.mxu0 0.0
    %733 = vmatpush.msra.mxu0 0.0
    %734 = vmatpush.msra.mxu0 0.0
    %735 = vmatpush.msra.mxu0 0.0
    %736 = vmatpush.msra.mxu0 0.0
    %737 = vmatpush.msra.mxu0 0.0
    %738 = vmatpush.msra.mxu0 0.0
    %739 = vmatpush.msra.mxu0 0.0
    %740 = vmatpush.msra.mxu0 0.0
    %741 = vmatpush.msra.mxu0 0.0
    %742 = vmatpush.msra.mxu0 %v722
    %743 = vmatmul.f32.gmra.mxu0 %v725
    %v744 = vpop.f32.mrf.mxu0
    %v745 = vadd.f32 0.0, %v744
    %746 = vdwg.mxu0
    %747 = vrot.lane.b32.xlu0 %v115, 40
    %v748 = vpop.permute.xlu0 %747
    %v751 = vsel %vm125, %v720, 0
    %753 = vmatpush.msra.mxu0 0.0
    %754 = vmatpush.msra.mxu0 0.0
    %755 = vmatpush.msra.mxu0 0.0
    %756 = vmatpush.msra.mxu0 0.0
    %757 = vmatpush.msra.mxu0 0.0
    %758 = vmatpush.msra.mxu0 0.0
    %759 = vmatpush.msra.mxu0 0.0
    %760 = vmatpush.msra.mxu0 0.0
    %761 = vmatpush.msra.mxu0 0.0
    %762 = vmatpush.msra.mxu0 0.0
    %763 = vmatpush.msra.mxu0 0.0
    %764 = vmatpush.msra.mxu0 0.0
    %765 = vmatpush.msra.mxu0 0.0
    %766 = vmatpush.msra.mxu0 0.0
    %767 = vmatpush.msra.mxu0 0.0
    %768 = vmatpush.msra.mxu0 %v748
    %769 = vmatmul.f32.gmra.mxu0 %v751
    %v770 = vpop.f32.mrf.mxu0
    %v771 = vadd.f32 0.0, %v770
    %772 = vdwg.mxu0
    %774 = vrot.lane.b32.xlu0 %v120, 64
    %v775 = vpop.permute.xlu0 %774
    %v778 = vsel %vm125, %v745, 0
    %v781 = vsel %vm125, %v771, 0
    %783 = vmatpush.msra.mxu0 0.0
    %784 = vmatpush.msra.mxu0 0.0
    %785 = vmatpush.msra.mxu0 0.0
    %786 = vmatpush.msra.mxu0 0.0
    %787 = vmatpush.msra.mxu0 0.0
    %788 = vmatpush.msra.mxu0 0.0
    %789 = vmatpush.msra.mxu0 0.0
    %790 = vmatpush.msra.mxu0 0.0
    %791 = vmatpush.msra.mxu0 0.0
    %792 = vmatpush.msra.mxu0 0.0
    %793 = vmatpush.msra.mxu0 0.0
    %794 = vmatpush.msra.mxu0 0.0
    %795 = vmatpush.msra.mxu0 0.0
    %796 = vmatpush.msra.mxu0 0.0
    %797 = vmatpush.msra.mxu0 0.0
    %798 = vmatpush.msra.mxu0 %v775
    %799 = vmatmul.f32.gmra.mxu0 %v778
    %v800 = vpop.f32.mrf.mxu0
    %v801 = vadd.f32 0.0, %v800
    %802 = vmatmul.f32.gmra.mxu0 %v781
    %v803 = vpop.f32.mrf.mxu0
    %v804 = vadd.f32 0.0, %v803
    %805 = vdwg.mxu0
    %808 = vrot.lane.b32.xlu0 %v801, 64
    %v809 = vpop.permute.xlu0 %808
    %810 = vrot.lane.b32.xlu0 %v804, 64
    %v811 = vpop.permute.xlu0 %810
    %v814 = vadd.f32 %v697, %v809
    %v815 = vadd.f32 %v698, %v811
    %818 = vrot.lane.b32.xlu0 %v814, 64
    %v819 = vpop.permute.xlu0 %818
    %820 = vrot.lane.b32.xlu0 %v815, 64
    %v821 = vpop.permute.xlu0 %820
    %v824 = vadd.f32 %v26, %v819
    %v825 = vadd.f32 %v27, %v821
    %v826 = vsel %vm43, %v824, 0.0
    %827 = vadd.xlane.f32.xlu0 %v826
    %v828 = vpop.xlane.xlu0 %827
    %v829 = vsel %vm43, %v825, 0.0
    %830 = vadd.xlane.f32.xlu0 %v829
    %v831 = vpop.xlane.xlu0 %830
    %v832 = vrcp.pop 32.0
    %v833 = vmul.f32 32.0, %v832
    %v834 = vsub.f32 1.0, %v833
    %v835 = vmul.f32 %v832, %v834
    %v836 = vadd.f32 %v832, %v835
    %vm837 = vweird.f32 %v832
    %v838 = vsel %vm837, %v832, %v836
    %v839 = vmul.f32 %v828, %v838
    %v840 = vmul.f32 %v831, %v838
    %v841 = vsub.f32 %v824, %v839
    %v842 = vsub.f32 %v825, %v840
    %v843 = vmul.f32 %v841, %v841
    %v844 = vmul.f32 %v842, %v842
    %v845 = vsel %vm43, %v843, 0.0
    %846 = vadd.xlane.f32.xlu0 %v845
    %v847 = vpop.xlane.xlu0 %846
    %v848 = vsel %vm43, %v844, 0.0
    %849 = vadd.xlane.f32.xlu0 %v848
    %v850 = vpop.xlane.xlu0 %849
    %v851 = vmul.f32 %v847, %v838
    %v852 = vmul.f32 %v850, %v838
    %v853 = vadd.f32 %v851, 1e-05
    %v854 = vadd.f32 %v852, 1e-05
    %v855 = vrsqrt.pop %v853
    %v856 = vmul.f32 %v855, %v853
    %v857 = vmul.f32 %v856, %v855
    %v858 = vmul.f32 0.5, %v857
    %v859 = vsub.f32 1.5, %v858
    %v860 = vmul.f32 %v855, %v859
    %vm861 = vweird.f32 %v853
    %vm862 = vweird.f32 %v855
    %vm863 = vmor %vm861, %vm862
    %v864 = vsel %vm863, %v855, %v860
    %v865 = vrsqrt.pop %v854
    %v866 = vmul.f32 %v865, %v854
    %v867 = vmul.f32 %v866, %v865
    %v868 = vmul.f32 0.5, %v867
    %v869 = vsub.f32 1.5, %v868
    %v870 = vmul.f32 %v865, %v869
    %vm871 = vweird.f32 %v854
    %vm872 = vweird.f32 %v865
    %vm873 = vmor %vm871, %vm872
    %v874 = vsel %vm873, %v865, %v870
    %v875 = vmul.f32 %v841, %v864
    %v876 = vmul.f32 %v842, %v874
    %v878 = vperm.slane %v79, 0
    %879 = vrot.lane.b32.xlu0 %v878, 96
    %v880 = vpop.permute.xlu0 %879
    %v882 = vmul.f32 %v875, %v880
    %v883 = vmul.f32 %v876, %v880
    %884 = vrot.lane.b32.xlu0 %v878, 64
    %v885 = vpop.permute.xlu0 %884
    %v887 = vadd.f32 %v882, %v885
    %v888 = vadd.f32 %v883, %v885
    %v889 = vld [vmem:[%s3 + $0x8] sm:$0xff]
    %v890 = vld [vmem:[%s3 + $0x38] sm:$0xff]
    %v891 = vld [vmem:[%s3 + $0x68] sm:$0xff]
    %v892 = vld [vmem:[%s3 + $0x98] sm:$0xff]
    %v893 = vld [vmem:[%s5 + $0x1] sm:$0x1]
    %v895 = vperm.slane %v893, 0
    %900 = vrot.lane.b32.xlu0 %v889, 32
    %v901 = vpop.permute.xlu0 %900
    %902 = vrot.lane.b32.xlu0 %v890, 32
    %v903 = vpop.permute.xlu0 %902
    %904 = vrot.lane.b32.xlu0 %v891, 32
    %v905 = vpop.permute.xlu0 %904
    %906 = vrot.lane.b32.xlu0 %v892, 32
    %v907 = vpop.permute.xlu0 %906
    %912 = vrot.lane.b32.xlu0 %v895, 32
    %v913 = vpop.permute.xlu0 %912
    %v916 = vsel %vm43, %v887, 0
    %v919 = vsel %vm43, %v888, 0
    %921 = vmatpush.msra.mxu0 0.0
    %922 = vmatpush.msra.mxu0 0.0
    %923 = vmatpush.msra.mxu0 0.0
    %924 = vmatpush.msra.mxu0 0.0
    %925 = vmatpush.msra.mxu0 0.0
    %926 = vmatpush.msra.mxu0 0.0
    %927 = vmatpush.msra.mxu0 0.0
    %928 = vmatpush.msra.mxu0 0.0
    %929 = vmatpush.msra.mxu0 0.0
    %930 = vmatpush.msra.mxu0 0.0
    %931 = vmatpush.msra.mxu0 0.0
    %932 = vmatpush.msra.mxu0 0.0
    %933 = vmatpush.msra.mxu0 %v907
    %934 = vmatpush.msra.mxu0 %v905
    %935 = vmatpush.msra.mxu0 %v903
    %936 = vmatpush.msra.mxu0 %v901
    %937 = vmatmul.f32.gmra.mxu0 %v916
    %v938 = vpop.f32.mrf.mxu0
    %v939 = vadd.f32 %v913, %v938
    %940 = vmatmul.f32.gmra.mxu0 %v919
    %v941 = vpop.f32.mrf.mxu0
    %v942 = vadd.f32 %v913, %v941
    %943 = vdwg.mxu0
    %v944 = vld [vmem:[%s3 + $0x10] sm:$0xff]
    %v945 = vld [vmem:[%s3 + $0x40] sm:$0xff]
    %v946 = vld [vmem:[%s3 + $0x70] sm:$0xff]
    %v947 = vld [vmem:[%s3 + $0xa0] sm:$0xff]
    %v948 = vld [vmem:[%s5 + $0x2] sm:$0x1]
    %v952 = vrot.slane %v71, 2
    %v953 = vrot.slane %v71, 4
    %v954 = vrot.slane %v71, 6
    %v955 = vrot.slane %v74, 2
    %v956 = vrot.slane %v74, 4
    %v957 = vrot.slane %v74, 6
    %v958 = vrot.slane %v77, 2
    %v961 = vperm.slane %v33, 0
    %v962 = vperm.slane %v34, 0
    %965 = vst [vmem:[#allocation1] ss:$4 sm:$0xff] %v71
    %s966 = scalar_lea.vmem [#allocation1], 1
    %967 = vst [vmem:[%s966] ss:$4 sm:$0xff] %v952
    %s968 = scalar_lea.vmem [#allocation1], 2
    %969 = vst [vmem:[%s968] ss:$4 sm:$0xff] %v953
    %s970 = scalar_lea.vmem [#allocation1], 3
    %971 = vst [vmem:[%s970] ss:$4 sm:$0xff] %v954
    %s972 = scalar_lea.vmem [#allocation1], 32
    %973 = vst [vmem:[%s972] ss:$4 sm:$0xff] %v74
    %v974 = vld.sshfl [vmem:[#allocation1] sm:$0xff pattern:$0x73625140]
    %v975 = vld.sshfl [vmem:[#allocation1 + $0x20] sm:$0xff pattern:$0x73625140]
    %v977 = vsel %vm125, %v939, 0
    %v979 = vsel %vm125, %v974, 0
    %v981 = vsel %vm125, %v975, 0
    %983 = vmatpush.xpose.msra.mxu0 0.0
    %984 = vmatpush.xpose.msra.mxu0 0.0
    %985 = vmatpush.xpose.msra.mxu0 0.0
    %986 = vmatpush.xpose.msra.mxu0 0.0
    %987 = vmatpush.xpose.msra.mxu0 0.0
    %988 = vmatpush.xpose.msra.mxu0 0.0
    %989 = vmatpush.xpose.msra.mxu0 0.0
    %990 = vmatpush.xpose.msra.mxu0 0.0
    %991 = vmatpush.xpose.msra.mxu0 0.0
    %992 = vmatpush.xpose.msra.mxu0 0.0
    %993 = vmatpush.xpose.msra.mxu0 0.0
    %994 = vmatpush.xpose.msra.mxu0 0.0
    %995 = vmatpush.xpose.msra.mxu0 0.0
    %996 = vmatpush.xpose.msra.mxu0 0.0
    %997 = vmatpush.xpose.msra.mxu0 %v981
    %998 = vmatpush.xpose.msra.mxu0 %v979
    %999 = vmatmul.f32.gmra.mxu0 %v977
    %v1000 = vpop.f32.mrf.mxu0
    %v1001 = vadd.f32 %v961, %v1000
    %1002 = vdwg.mxu0
    %1003 = vst [vmem:[#allocation1] ss:$4 sm:$0xff] %v955
    %s1004 = scalar_lea.vmem [#allocation1], 1
    %1005 = vst [vmem:[%s1004] ss:$4 sm:$0xff] %v956
    %s1006 = scalar_lea.vmem [#allocation1], 2
    %1007 = vst [vmem:[%s1006] ss:$4 sm:$0xff] %v957
    %s1008 = scalar_lea.vmem [#allocation1], 3
    %1009 = vst [vmem:[%s1008] ss:$4 sm:$0xff] %v77
    %s1010 = scalar_lea.vmem [#allocation1], 32
    %1011 = vst [vmem:[%s1010] ss:$4 sm:$0xff] %v958
    %v1012 = vld.sshfl [vmem:[#allocation1] sm:$0xff pattern:$0x73625140]
    %v1013 = vld.sshfl [vmem:[#allocation1 + $0x20] sm:$0xff pattern:$0x73625140]
    %v1015 = vsel %vm125, %v942, 0
    %v1017 = vsel %vm125, %v1012, 0
    %v1019 = vsel %vm125, %v1013, 0
    %1021 = vmatpush.xpose.msra.mxu0 0.0
    %1022 = vmatpush.xpose.msra.mxu0 0.0
    %1023 = vmatpush.xpose.msra.mxu0 0.0
    %1024 = vmatpush.xpose.msra.mxu0 0.0
    %1025 = vmatpush.xpose.msra.mxu0 0.0
    %1026 = vmatpush.xpose.msra.mxu0 0.0
    %1027 = vmatpush.xpose.msra.mxu0 0.0
    %1028 = vmatpush.xpose.msra.mxu0 0.0
    %1029 = vmatpush.xpose.msra.mxu0 0.0
    %1030 = vmatpush.xpose.msra.mxu0 0.0
    %1031 = vmatpush.xpose.msra.mxu0 0.0
    %1032 = vmatpush.xpose.msra.mxu0 0.0
    %1033 = vmatpush.xpose.msra.mxu0 0.0
    %1034 = vmatpush.xpose.msra.mxu0 0.0
    %1035 = vmatpush.xpose.msra.mxu0 %v1019
    %1036 = vmatpush.xpose.msra.mxu0 %v1017
    %1037 = vmatmul.f32.gmra.mxu0 %v1015
    %v1038 = vpop.f32.mrf.mxu0
    %v1039 = vadd.f32 %v962, %v1038
    %1040 = vdwg.mxu0
    %1041 = vrot.lane.b32.xlu0 %v939, 120
    %v1042 = vpop.permute.xlu0 %1041
    %1043 = vst [vmem:[#allocation1] ss:$4 sm:$0xff] %v71
    %s1044 = scalar_lea.vmem [#allocation1], 1
    %1045 = vst [vmem:[%s1044] ss:$4 sm:$0xff] %v952
    %s1046 = scalar_lea.vmem [#allocation1], 2
    %1047 = vst [vmem:[%s1046] ss:$4 sm:$0xff] %v953
    %s1048 = scalar_lea.vmem [#allocation1], 3
    %1049 = vst [vmem:[%s1048] ss:$4 sm:$0xff] %v954
    %s1050 = scalar_lea.vmem [#allocation1], 32
    %1051 = vst [vmem:[%s1050] ss:$4 sm:$0xff] %v74
    %v1052 = vld.sshfl [vmem:[#allocation1] sm:$0xff pattern:$0x73625140]
    %v1053 = vld.sshfl [vmem:[#allocation1 + $0x20] sm:$0xff pattern:$0x73625140]
    %1054 = vrot.lane.b32.xlu0 %v1052, 120
    %v1055 = vpop.permute.xlu0 %1054
    %1056 = vrot.lane.b32.xlu0 %v1053, 120
    %v1057 = vpop.permute.xlu0 %1056
    %v1058 = vsel %vm125, %v1042, 0
    %v1060 = vsel %vm125, %v1055, 0
    %v1062 = vsel %vm125, %v1057, 0
    %1064 = vmatpush.xpose.msra.mxu0 0.0
    %1065 = vmatpush.xpose.msra.mxu0 0.0
    %1066 = vmatpush.xpose.msra.mxu0 0.0
    %1067 = vmatpush.xpose.msra.mxu0 0.0
    %1068 = vmatpush.xpose.msra.mxu0 0.0
    %1069 = vmatpush.xpose.msra.mxu0 0.0
    %1070 = vmatpush.xpose.msra.mxu0 0.0
    %1071 = vmatpush.xpose.msra.mxu0 0.0
    %1072 = vmatpush.xpose.msra.mxu0 0.0
    %1073 = vmatpush.xpose.msra.mxu0 0.0
    %1074 = vmatpush.xpose.msra.mxu0 0.0
    %1075 = vmatpush.xpose.msra.mxu0 0.0
    %1076 = vmatpush.xpose.msra.mxu0 0.0
    %1077 = vmatpush.xpose.msra.mxu0 0.0
    %1078 = vmatpush.xpose.msra.mxu0 %v1062
    %1079 = vmatpush.xpose.msra.mxu0 %v1060
    %1080 = vmatmul.f32.gmra.mxu0 %v1058
    %v1081 = vpop.f32.mrf.mxu0
    %v1082 = vadd.f32 %v961, %v1081
    %1083 = vdwg.mxu0
    %1084 = vrot.lane.b32.xlu0 %v942, 120
    %v1085 = vpop.permute.xlu0 %1084
    %1086 = vst [vmem:[#allocation1] ss:$4 sm:$0xff] %v955
    %s1087 = scalar_lea.vmem [#allocation1], 1
    %1088 = vst [vmem:[%s1087] ss:$4 sm:$0xff] %v956
    %s1089 = scalar_lea.vmem [#allocation1], 2
    %1090 = vst [vmem:[%s1089] ss:$4 sm:$0xff] %v957
    %s1091 = scalar_lea.vmem [#allocation1], 3
    %1092 = vst [vmem:[%s1091] ss:$4 sm:$0xff] %v77
    %s1093 = scalar_lea.vmem [#allocation1], 32
    %1094 = vst [vmem:[%s1093] ss:$4 sm:$0xff] %v958
    %v1095 = vld.sshfl [vmem:[#allocation1] sm:$0xff pattern:$0x73625140]
    %v1096 = vld.sshfl [vmem:[#allocation1 + $0x20] sm:$0xff pattern:$0x73625140]
    %1097 = vrot.lane.b32.xlu0 %v1095, 120
    %v1098 = vpop.permute.xlu0 %1097
    %1099 = vrot.lane.b32.xlu0 %v1096, 120
    %v1100 = vpop.permute.xlu0 %1099
    %v1101 = vsel %vm125, %v1085, 0
    %v1103 = vsel %vm125, %v1098, 0
    %v1105 = vsel %vm125, %v1100, 0
    %1107 = vmatpush.xpose.msra.mxu0 0.0
    %1108 = vmatpush.xpose.msra.mxu0 0.0
    %1109 = vmatpush.xpose.msra.mxu0 0.0
    %1110 = vmatpush.xpose.msra.mxu0 0.0
    %1111 = vmatpush.xpose.msra.mxu0 0.0
    %1112 = vmatpush.xpose.msra.mxu0 0.0
    %1113 = vmatpush.xpose.msra.mxu0 0.0
    %1114 = vmatpush.xpose.msra.mxu0 0.0
    %1115 = vmatpush.xpose.msra.mxu0 0.0
    %1116 = vmatpush.xpose.msra.mxu0 0.0
    %1117 = vmatpush.xpose.msra.mxu0 0.0
    %1118 = vmatpush.xpose.msra.mxu0 0.0
    %1119 = vmatpush.xpose.msra.mxu0 0.0
    %1120 = vmatpush.xpose.msra.mxu0 0.0
    %1121 = vmatpush.xpose.msra.mxu0 %v1105
    %1122 = vmatpush.xpose.msra.mxu0 %v1103
    %1123 = vmatmul.f32.gmra.mxu0 %v1101
    %v1124 = vpop.f32.mrf.mxu0
    %v1125 = vadd.f32 %v962, %v1124
    %1126 = vdwg.mxu0
    %1127 = vrot.lane.b32.xlu0 %v939, 112
    %v1128 = vpop.permute.xlu0 %1127
    %1129 = vst [vmem:[#allocation1] ss:$4 sm:$0xff] %v71
    %s1130 = scalar_lea.vmem [#allocation1], 1
    %1131 = vst [vmem:[%s1130] ss:$4 sm:$0xff] %v952
    %s1132 = scalar_lea.vmem [#allocation1], 2
    %1133 = vst [vmem:[%s1132] ss:$4 sm:$0xff] %v953
    %s1134 = scalar_lea.vmem [#allocation1], 3
    %1135 = vst [vmem:[%s1134] ss:$4 sm:$0xff] %v954
    %s1136 = scalar_lea.vmem [#allocation1], 32
    %1137 = vst [vmem:[%s1136] ss:$4 sm:$0xff] %v74
    %v1138 = vld.sshfl [vmem:[#allocation1] sm:$0xff pattern:$0x73625140]
    %v1139 = vld.sshfl [vmem:[#allocation1 + $0x20] sm:$0xff pattern:$0x73625140]
    %1140 = vrot.lane.b32.xlu0 %v1138, 112
    %v1141 = vpop.permute.xlu0 %1140
    %1142 = vrot.lane.b32.xlu0 %v1139, 112
    %v1143 = vpop.permute.xlu0 %1142
    %v1144 = vsel %vm125, %v1128, 0
    %v1146 = vsel %vm125, %v1141, 0
    %v1148 = vsel %vm125, %v1143, 0
    %1150 = vmatpush.xpose.msra.mxu0 0.0
    %1151 = vmatpush.xpose.msra.mxu0 0.0
    %1152 = vmatpush.xpose.msra.mxu0 0.0
    %1153 = vmatpush.xpose.msra.mxu0 0.0
    %1154 = vmatpush.xpose.msra.mxu0 0.0
    %1155 = vmatpush.xpose.msra.mxu0 0.0
    %1156 = vmatpush.xpose.msra.mxu0 0.0
    %1157 = vmatpush.xpose.msra.mxu0 0.0
    %1158 = vmatpush.xpose.msra.mxu0 0.0
    %1159 = vmatpush.xpose.msra.mxu0 0.0
    %1160 = vmatpush.xpose.msra.mxu0 0.0
    %1161 = vmatpush.xpose.msra.mxu0 0.0
    %1162 = vmatpush.xpose.msra.mxu0 0.0
    %1163 = vmatpush.xpose.msra.mxu0 0.0
    %1164 = vmatpush.xpose.msra.mxu0 %v1148
    %1165 = vmatpush.xpose.msra.mxu0 %v1146
    %1166 = vmatmul.f32.gmra.mxu0 %v1144
    %v1167 = vpop.f32.mrf.mxu0
    %v1168 = vadd.f32 %v961, %v1167
    %1169 = vdwg.mxu0
    %1170 = vrot.lane.b32.xlu0 %v942, 112
    %v1171 = vpop.permute.xlu0 %1170
    %1172 = vst [vmem:[#allocation1] ss:$4 sm:$0xff] %v955
    %s1173 = scalar_lea.vmem [#allocation1], 1
    %1174 = vst [vmem:[%s1173] ss:$4 sm:$0xff] %v956
    %s1175 = scalar_lea.vmem [#allocation1], 2
    %1176 = vst [vmem:[%s1175] ss:$4 sm:$0xff] %v957
    %s1177 = scalar_lea.vmem [#allocation1], 3
    %1178 = vst [vmem:[%s1177] ss:$4 sm:$0xff] %v77
    %s1179 = scalar_lea.vmem [#allocation1], 32
    %1180 = vst [vmem:[%s1179] ss:$4 sm:$0xff] %v958
    %v1181 = vld.sshfl [vmem:[#allocation1] sm:$0xff pattern:$0x73625140]
    %v1182 = vld.sshfl [vmem:[#allocation1 + $0x20] sm:$0xff pattern:$0x73625140]
    %1183 = vrot.lane.b32.xlu0 %v1181, 112
    %v1184 = vpop.permute.xlu0 %1183
    %1185 = vrot.lane.b32.xlu0 %v1182, 112
    %v1186 = vpop.permute.xlu0 %1185
    %v1187 = vsel %vm125, %v1171, 0
    %v1189 = vsel %vm125, %v1184, 0
    %v1191 = vsel %vm125, %v1186, 0
    %1193 = vmatpush.xpose.msra.mxu0 0.0
    %1194 = vmatpush.xpose.msra.mxu0 0.0
    %1195 = vmatpush.xpose.msra.mxu0 0.0
    %1196 = vmatpush.xpose.msra.mxu0 0.0
    %1197 = vmatpush.xpose.msra.mxu0 0.0
    %1198 = vmatpush.xpose.msra.mxu0 0.0
    %1199 = vmatpush.xpose.msra.mxu0 0.0
    %1200 = vmatpush.xpose.msra.mxu0 0.0
    %1201 = vmatpush.xpose.msra.mxu0 0.0
    %1202 = vmatpush.xpose.msra.mxu0 0.0
    %1203 = vmatpush.xpose.msra.mxu0 0.0
    %1204 = vmatpush.xpose.msra.mxu0 0.0
    %1205 = vmatpush.xpose.msra.mxu0 0.0
    %1206 = vmatpush.xpose.msra.mxu0 0.0
    %1207 = vmatpush.xpose.msra.mxu0 %v1191
    %1208 = vmatpush.xpose.msra.mxu0 %v1189
    %1209 = vmatmul.f32.gmra.mxu0 %v1187
    %v1210 = vpop.f32.mrf.mxu0
    %v1211 = vadd.f32 %v962, %v1210
    %1212 = vdwg.mxu0
    %1213 = vrot.lane.b32.xlu0 %v939, 104
    %v1214 = vpop.permute.xlu0 %1213
    %1215 = vst [vmem:[#allocation1] ss:$4 sm:$0xff] %v71
    %s1216 = scalar_lea.vmem [#allocation1], 1
    %1217 = vst [vmem:[%s1216] ss:$4 sm:$0xff] %v952
    %s1218 = scalar_lea.vmem [#allocation1], 2
    %1219 = vst [vmem:[%s1218] ss:$4 sm:$0xff] %v953
    %s1220 = scalar_lea.vmem [#allocation1], 3
    %1221 = vst [vmem:[%s1220] ss:$4 sm:$0xff] %v954
    %s1222 = scalar_lea.vmem [#allocation1], 32
    %1223 = vst [vmem:[%s1222] ss:$4 sm:$0xff] %v74
    %v1224 = vld.sshfl [vmem:[#allocation1] sm:$0xff pattern:$0x73625140]
    %v1225 = vld.sshfl [vmem:[#allocation1 + $0x20] sm:$0xff pattern:$0x73625140]
    %1226 = vrot.lane.b32.xlu0 %v1224, 104
    %v1227 = vpop.permute.xlu0 %1226
    %1228 = vrot.lane.b32.xlu0 %v1225, 104
    %v1229 = vpop.permute.xlu0 %1228
    %v1230 = vsel %vm125, %v1214, 0
    %v1232 = vsel %vm125, %v1227, 0
    %v1234 = vsel %vm125, %v1229, 0
    %1236 = vmatpush.xpose.msra.mxu0 0.0
    %1237 = vmatpush.xpose.msra.mxu0 0.0
    %1238 = vmatpush.xpose.msra.mxu0 0.0
    %1239 = vmatpush.xpose.msra.mxu0 0.0
    %1240 = vmatpush.xpose.msra.mxu0 0.0
    %1241 = vmatpush.xpose.msra.mxu0 0.0
    %1242 = vmatpush.xpose.msra.mxu0 0.0
    %1243 = vmatpush.xpose.msra.mxu0 0.0
    %1244 = vmatpush.xpose.msra.mxu0 0.0
    %1245 = vmatpush.xpose.msra.mxu0 0.0
    %1246 = vmatpush.xpose.msra.mxu0 0.0
    %1247 = vmatpush.xpose.msra.mxu0 0.0
    %1248 = vmatpush.xpose.msra.mxu0 0.0
    %1249 = vmatpush.xpose.msra.mxu0 0.0
    %1250 = vmatpush.xpose.msra.mxu0 %v1234
    %1251 = vmatpush.xpose.msra.mxu0 %v1232
    %1252 = vmatmul.f32.gmra.mxu0 %v1230
    %v1253 = vpop.f32.mrf.mxu0
    %v1254 = vadd.f32 %v961, %v1253
    %1255 = vdwg.mxu0
    %1256 = vrot.lane.b32.xlu0 %v942, 104
    %v1257 = vpop.permute.xlu0 %1256
    %1258 = vst [vmem:[#allocation1] ss:$4 sm:$0xff] %v955
    %s1259 = scalar_lea.vmem [#allocation1], 1
    %1260 = vst [vmem:[%s1259] ss:$4 sm:$0xff] %v956
    %s1261 = scalar_lea.vmem [#allocation1], 2
    %1262 = vst [vmem:[%s1261] ss:$4 sm:$0xff] %v957
    %s1263 = scalar_lea.vmem [#allocation1], 3
    %1264 = vst [vmem:[%s1263] ss:$4 sm:$0xff] %v77
    %s1265 = scalar_lea.vmem [#allocation1], 32
    %1266 = vst [vmem:[%s1265] ss:$4 sm:$0xff] %v958
    %v1267 = vld.sshfl [vmem:[#allocation1] sm:$0xff pattern:$0x73625140]
    %v1268 = vld.sshfl [vmem:[#allocation1 + $0x20] sm:$0xff pattern:$0x73625140]
    %1269 = vrot.lane.b32.xlu0 %v1267, 104
    %v1270 = vpop.permute.xlu0 %1269
    %1271 = vrot.lane.b32.xlu0 %v1268, 104
    %v1272 = vpop.permute.xlu0 %1271
    %v1273 = vsel %vm125, %v1257, 0
    %v1275 = vsel %vm125, %v1270, 0
    %v1277 = vsel %vm125, %v1272, 0
    %1279 = vmatpush.xpose.msra.mxu0 0.0
    %1280 = vmatpush.xpose.msra.mxu0 0.0
    %1281 = vmatpush.xpose.msra.mxu0 0.0
    %1282 = vmatpush.xpose.msra.mxu0 0.0
    %1283 = vmatpush.xpose.msra.mxu0 0.0
    %1284 = vmatpush.xpose.msra.mxu0 0.0
    %1285 = vmatpush.xpose.msra.mxu0 0.0
    %1286 = vmatpush.xpose.msra.mxu0 0.0
    %1287 = vmatpush.xpose.msra.mxu0 0.0
    %1288 = vmatpush.xpose.msra.mxu0 0.0
    %1289 = vmatpush.xpose.msra.mxu0 0.0
    %1290 = vmatpush.xpose.msra.mxu0 0.0
    %1291 = vmatpush.xpose.msra.mxu0 0.0
    %1292 = vmatpush.xpose.msra.mxu0 0.0
    %1293 = vmatpush.xpose.msra.mxu0 %v1277
    %1294 = vmatpush.xpose.msra.mxu0 %v1275
    %1295 = vmatmul.f32.gmra.mxu0 %v1273
    %v1296 = vpop.f32.mrf.mxu0
    %v1297 = vadd.f32 %v962, %v1296
    %1298 = vdwg.mxu0
    %vm1299 = vcmask 80896
    %v1300 = vsel %vm1299, %v1001, -inf
    %1301 = vmax.xlane.f32.xlu0 %v1300
    %v1302 = vpop.xlane.xlu0 %1301
    %v1303 = vsel %vm1299, %v1039, -inf
    %1304 = vmax.xlane.f32.xlu0 %v1303
    %v1305 = vpop.xlane.xlu0 %1304
    %v1306 = vsub.f32 %v1001, %v1302
    %v1307 = vsub.f32 %v1039, %v1305
    %v1308 = vmul.f32 %v1306, 1.442695
    %v1309 = vpow.pop %v1308
    %v1310 = vmul.f32 %v1307, 1.442695
    %v1311 = vpow.pop %v1310
    %v1312 = vsel %vm1299, %v1309, 0.0
    %1313 = vadd.xlane.f32.xlu0 %v1312
    %v1314 = vpop.xlane.xlu0 %1313
    %v1315 = vsel %vm1299, %v1311, 0.0
    %1316 = vadd.xlane.f32.xlu0 %v1315
    %v1317 = vpop.xlane.xlu0 %1316
    %v1318 = vrcp.pop %v1314
    %v1319 = vrcp.pop %v1317
    %v1320 = vmul.f32 %v1309, %v1318
    %v1321 = vmul.f32 %v1311, %v1319
    %1322 = vst [vmem:[#allocation1] ss:$4 sm:$0xff] %v71
    %s1323 = scalar_lea.vmem [#allocation1], 1
    %1324 = vst [vmem:[%s1323] ss:$4 sm:$0xff] %v952
    %s1325 = scalar_lea.vmem [#allocation1], 2
    %1326 = vst [vmem:[%s1325] ss:$4 sm:$0xff] %v953
    %s1327 = scalar_lea.vmem [#allocation1], 3
    %1328 = vst [vmem:[%s1327] ss:$4 sm:$0xff] %v954
    %s1329 = scalar_lea.vmem [#allocation1], 32
    %1330 = vst [vmem:[%s1329] ss:$4 sm:$0xff] %v74
    %v1331 = vld.sshfl [vmem:[#allocation1] sm:$0xff pattern:$0x73625140]
    %v1332 = vld.sshfl [vmem:[#allocation1 + $0x20] sm:$0xff pattern:$0x73625140]
    %1333 = vrot.lane.b32.xlu0 %v1331, 96
    %v1334 = vpop.permute.xlu0 %1333
    %1335 = vrot.lane.b32.xlu0 %v1332, 96
    %v1336 = vpop.permute.xlu0 %1335
    %v1339 = vsel %vm1299, %v1320, 0
    %vm1341 = vcmask 1041408
    %v1342 = vsel %vm1341, %v1336, 0
    %1344 = vmatpush.msra.mxu0 0.0
    %1345 = vmatpush.msra.mxu0 0.0
    %1346 = vmatpush.msra.mxu0 0.0
    %1347 = vmatpush.msra.mxu0 0.0
    %1348 = vmatpush.msra.mxu0 0.0
    %1349 = vmatpush.msra.mxu0 0.0
    %1350 = vmatpush.msra.mxu0 0.0
    %1351 = vmatpush.msra.mxu0 0.0
    %1352 = vmatpush.msra.mxu0 0.0
    %1353 = vmatpush.msra.mxu0 0.0
    %1354 = vmatpush.msra.mxu0 0.0
    %1355 = vmatpush.msra.mxu0 0.0
    %1356 = vmatpush.msra.mxu0 0.0
    %1357 = vmatpush.msra.mxu0 0.0
    %1358 = vmatpush.msra.mxu0 %v1342
    %1359 = vmatpush.msra.mxu0 %v1334
    %1360 = vmatmul.f32.gmra.mxu0 %v1339
    %v1361 = vpop.f32.mrf.mxu0
    %v1362 = vadd.f32 0.0, %v1361
    %1363 = vdwg.mxu0
    %1364 = vst [vmem:[#allocation1] ss:$4 sm:$0xff] %v955
    %s1365 = scalar_lea.vmem [#allocation1], 1
    %1366 = vst [vmem:[%s1365] ss:$4 sm:$0xff] %v956
    %s1367 = scalar_lea.vmem [#allocation1], 2
    %1368 = vst [vmem:[%s1367] ss:$4 sm:$0xff] %v957
    %s1369 = scalar_lea.vmem [#allocation1], 3
    %1370 = vst [vmem:[%s1369] ss:$4 sm:$0xff] %v77
    %s1371 = scalar_lea.vmem [#allocation1], 32
    %1372 = vst [vmem:[%s1371] ss:$4 sm:$0xff] %v958
    %v1373 = vld.sshfl [vmem:[#allocation1] sm:$0xff pattern:$0x73625140]
    %v1374 = vld.sshfl [vmem:[#allocation1 + $0x20] sm:$0xff pattern:$0x73625140]
    %1375 = vrot.lane.b32.xlu0 %v1373, 96
    %v1376 = vpop.permute.xlu0 %1375
    %1377 = vrot.lane.b32.xlu0 %v1374, 96
    %v1378 = vpop.permute.xlu0 %1377
    %v1381 = vsel %vm1299, %v1321, 0
    %v1383 = vsel %vm1341, %v1378, 0
    %1385 = vmatpush.msra.mxu0 0.0
    %1386 = vmatpush.msra.mxu0 0.0
    %1387 = vmatpush.msra.mxu0 0.0
    %1388 = vmatpush.msra.mxu0 0.0
    %1389 = vmatpush.msra.mxu0 0.0
    %1390 = vmatpush.msra.mxu0 0.0
    %1391 = vmatpush.msra.mxu0 0.0
    %1392 = vmatpush.msra.mxu0 0.0
    %1393 = vmatpush.msra.mxu0 0.0
    %1394 = vmatpush.msra.mxu0 0.0
    %1395 = vmatpush.msra.mxu0 0.0
    %1396 = vmatpush.msra.mxu0 0.0
    %1397 = vmatpush.msra.mxu0 0.0
    %1398 = vmatpush.msra.mxu0 0.0
    %1399 = vmatpush.msra.mxu0 %v1383
    %1400 = vmatpush.msra.mxu0 %v1376
    %1401 = vmatmul.f32.gmra.mxu0 %v1381
    %v1402 = vpop.f32.mrf.mxu0
    %v1403 = vadd.f32 0.0, %v1402
    %1404 = vdwg.mxu0
    %1406 = vrot.lane.b32.xlu0 %v944, 32
    %v1407 = vpop.permute.xlu0 %1406
    %v1410 = vsel %vm125, %v1362, 0
    %v1413 = vsel %vm125, %v1403, 0
    %1415 = vmatpush.msra.mxu0 0.0
    %1416 = vmatpush.msra.mxu0 0.0
    %1417 = vmatpush.msra.mxu0 0.0
    %1418 = vmatpush.msra.mxu0 0.0
    %1419 = vmatpush.msra.mxu0 0.0
    %1420 = vmatpush.msra.mxu0 0.0
    %1421 = vmatpush.msra.mxu0 0.0
    %1422 = vmatpush.msra.mxu0 0.0
    %1423 = vmatpush.msra.mxu0 0.0
    %1424 = vmatpush.msra.mxu0 0.0
    %1425 = vmatpush.msra.mxu0 0.0
    %1426 = vmatpush.msra.mxu0 0.0
    %1427 = vmatpush.msra.mxu0 0.0
    %1428 = vmatpush.msra.mxu0 0.0
    %1429 = vmatpush.msra.mxu0 0.0
    %1430 = vmatpush.msra.mxu0 %v1407
    %1431 = vmatmul.f32.gmra.mxu0 %v1410
    %v1432 = vpop.f32.mrf.mxu0
    %v1433 = vadd.f32 0.0, %v1432
    %1434 = vmatmul.f32.gmra.mxu0 %v1413
    %v1435 = vpop.f32.mrf.mxu0
    %v1436 = vadd.f32 0.0, %v1435
    %1437 = vdwg.mxu0
    %v1439 = vperm.slane %v948, 0
    %1443 = vrot.lane.b32.xlu0 %v1433, 96
    %v1444 = vpop.permute.xlu0 %1443
    %1445 = vrot.lane.b32.xlu0 %v1436, 96
    %v1446 = vpop.permute.xlu0 %1445
    %v1449 = vadd.f32 %v1439, %v1444
    %v1450 = vadd.f32 %v1439, %v1446
    %v1451 = vsel %vm1299, %v1082, -inf
    %1452 = vmax.xlane.f32.xlu0 %v1451
    %v1453 = vpop.xlane.xlu0 %1452
    %v1454 = vsel %vm1299, %v1125, -inf
    %1455 = vmax.xlane.f32.xlu0 %v1454
    %v1456 = vpop.xlane.xlu0 %1455
    %v1457 = vsub.f32 %v1082, %v1453
    %v1458 = vsub.f32 %v1125, %v1456
    %v1459 = vmul.f32 %v1457, 1.442695
    %v1460 = vpow.pop %v1459
    %v1461 = vmul.f32 %v1458, 1.442695
    %v1462 = vpow.pop %v1461
    %v1463 = vsel %vm1299, %v1460, 0.0
    %1464 = vadd.xlane.f32.xlu0 %v1463
    %v1465 = vpop.xlane.xlu0 %1464
    %v1466 = vsel %vm1299, %v1462, 0.0
    %1467 = vadd.xlane.f32.xlu0 %v1466
    %v1468 = vpop.xlane.xlu0 %1467
    %v1469 = vrcp.pop %v1465
    %v1470 = vrcp.pop %v1468
    %v1471 = vmul.f32 %v1460, %v1469
    %v1472 = vmul.f32 %v1462, %v1470
    %1473 = vst [vmem:[#allocation1] ss:$4 sm:$0xff] %v71
    %s1474 = scalar_lea.vmem [#allocation1], 1
    %1475 = vst [vmem:[%s1474] ss:$4 sm:$0xff] %v952
    %s1476 = scalar_lea.vmem [#allocation1], 2
    %1477 = vst [vmem:[%s1476] ss:$4 sm:$0xff] %v953
    %s1478 = scalar_lea.vmem [#allocation1], 3
    %1479 = vst [vmem:[%s1478] ss:$4 sm:$0xff] %v954
    %s1480 = scalar_lea.vmem [#allocation1], 32
    %1481 = vst [vmem:[%s1480] ss:$4 sm:$0xff] %v74
    %v1482 = vld.sshfl [vmem:[#allocation1] sm:$0xff pattern:$0x73625140]
    %v1483 = vld.sshfl [vmem:[#allocation1 + $0x20] sm:$0xff pattern:$0x73625140]
    %1484 = vrot.lane.b32.xlu0 %v1482, 88
    %v1485 = vpop.permute.xlu0 %1484
    %1486 = vrot.lane.b32.xlu0 %v1483, 88
    %v1487 = vpop.permute.xlu0 %1486
    %v1490 = vsel %vm1299, %v1471, 0
    %v1492 = vsel %vm1341, %v1487, 0
    %1494 = vmatpush.msra.mxu0 0.0
    %1495 = vmatpush.msra.mxu0 0.0
    %1496 = vmatpush.msra.mxu0 0.0
    %1497 = vmatpush.msra.mxu0 0.0
    %1498 = vmatpush.msra.mxu0 0.0
    %1499 = vmatpush.msra.mxu0 0.0
    %1500 = vmatpush.msra.mxu0 0.0
    %1501 = vmatpush.msra.mxu0 0.0
    %1502 = vmatpush.msra.mxu0 0.0
    %1503 = vmatpush.msra.mxu0 0.0
    %1504 = vmatpush.msra.mxu0 0.0
    %1505 = vmatpush.msra.mxu0 0.0
    %1506 = vmatpush.msra.mxu0 0.0
    %1507 = vmatpush.msra.mxu0 0.0
    %1508 = vmatpush.msra.mxu0 %v1492
    %1509 = vmatpush.msra.mxu0 %v1485
    %1510 = vmatmul.f32.gmra.mxu0 %v1490
    %v1511 = vpop.f32.mrf.mxu0
    %v1512 = vadd.f32 0.0, %v1511
    %1513 = vdwg.mxu0
    %1514 = vst [vmem:[#allocation1] ss:$4 sm:$0xff] %v955
    %s1515 = scalar_lea.vmem [#allocation1], 1
    %1516 = vst [vmem:[%s1515] ss:$4 sm:$0xff] %v956
    %s1517 = scalar_lea.vmem [#allocation1], 2
    %1518 = vst [vmem:[%s1517] ss:$4 sm:$0xff] %v957
    %s1519 = scalar_lea.vmem [#allocation1], 3
    %1520 = vst [vmem:[%s1519] ss:$4 sm:$0xff] %v77
    %s1521 = scalar_lea.vmem [#allocation1], 32
    %1522 = vst [vmem:[%s1521] ss:$4 sm:$0xff] %v958
    %v1523 = vld.sshfl [vmem:[#allocation1] sm:$0xff pattern:$0x73625140]
    %v1524 = vld.sshfl [vmem:[#allocation1 + $0x20] sm:$0xff pattern:$0x73625140]
    %1525 = vrot.lane.b32.xlu0 %v1523, 88
    %v1526 = vpop.permute.xlu0 %1525
    %1527 = vrot.lane.b32.xlu0 %v1524, 88
    %v1528 = vpop.permute.xlu0 %1527
    %v1531 = vsel %vm1299, %v1472, 0
    %v1533 = vsel %vm1341, %v1528, 0
    %1535 = vmatpush.msra.mxu0 0.0
    %1536 = vmatpush.msra.mxu0 0.0
    %1537 = vmatpush.msra.mxu0 0.0
    %1538 = vmatpush.msra.mxu0 0.0
    %1539 = vmatpush.msra.mxu0 0.0
    %1540 = vmatpush.msra.mxu0 0.0
    %1541 = vmatpush.msra.mxu0 0.0
    %1542 = vmatpush.msra.mxu0 0.0
    %1543 = vmatpush.msra.mxu0 0.0
    %1544 = vmatpush.msra.mxu0 0.0
    %1545 = vmatpush.msra.mxu0 0.0
    %1546 = vmatpush.msra.mxu0 0.0
    %1547 = vmatpush.msra.mxu0 0.0
    %1548 = vmatpush.msra.mxu0 0.0
    %1549 = vmatpush.msra.mxu0 %v1533
    %1550 = vmatpush.msra.mxu0 %v1526
    %1551 = vmatmul.f32.gmra.mxu0 %v1531
    %v1552 = vpop.f32.mrf.mxu0
    %v1553 = vadd.f32 0.0, %v1552
    %1554 = vdwg.mxu0
    %1556 = vrot.lane.b32.xlu0 %v945, 32
    %v1557 = vpop.permute.xlu0 %1556
    %v1560 = vsel %vm125, %v1512, 0
    %v1563 = vsel %vm125, %v1553, 0
    %1565 = vmatpush.msra.mxu0 0.0
    %1566 = vmatpush.msra.mxu0 0.0
    %1567 = vmatpush.msra.mxu0 0.0
    %1568 = vmatpush.msra.mxu0 0.0
    %1569 = vmatpush.msra.mxu0 0.0
    %1570 = vmatpush.msra.mxu0 0.0
    %1571 = vmatpush.msra.mxu0 0.0
    %1572 = vmatpush.msra.mxu0 0.0
    %1573 = vmatpush.msra.mxu0 0.0
    %1574 = vmatpush.msra.mxu0 0.0
    %1575 = vmatpush.msra.mxu0 0.0
    %1576 = vmatpush.msra.mxu0 0.0
    %1577 = vmatpush.msra.mxu0 0.0
    %1578 = vmatpush.msra.mxu0 0.0
    %1579 = vmatpush.msra.mxu0 0.0
    %1580 = vmatpush.msra.mxu0 %v1557
    %1581 = vmatmul.f32.gmra.mxu0 %v1560
    %v1582 = vpop.f32.mrf.mxu0
    %v1583 = vadd.f32 0.0, %v1582
    %1584 = vmatmul.f32.gmra.mxu0 %v1563
    %v1585 = vpop.f32.mrf.mxu0
    %v1586 = vadd.f32 0.0, %v1585
    %1587 = vdwg.mxu0
    %1590 = vrot.lane.b32.xlu0 %v1583, 96
    %v1591 = vpop.permute.xlu0 %1590
    %1592 = vrot.lane.b32.xlu0 %v1586, 96
    %v1593 = vpop.permute.xlu0 %1592
    %v1596 = vadd.f32 %v1449, %v1591
    %v1597 = vadd.f32 %v1450, %v1593
    %v1598 = vsel %vm1299, %v1168, -inf
    %1599 = vmax.xlane.f32.xlu0 %v1598
    %v1600 = vpop.xlane.xlu0 %1599
    %v1601 = vsel %vm1299, %v1211, -inf
    %1602 = vmax.xlane.f32.xlu0 %v1601
    %v1603 = vpop.xlane.xlu0 %1602
    %v1604 = vsub.f32 %v1168, %v1600
    %v1605 = vsub.f32 %v1211, %v1603
    %v1606 = vmul.f32 %v1604, 1.442695
    %v1607 = vpow.pop %v1606
    %v1608 = vmul.f32 %v1605, 1.442695
    %v1609 = vpow.pop %v1608
    %v1610 = vsel %vm1299, %v1607, 0.0
    %1611 = vadd.xlane.f32.xlu0 %v1610
    %v1612 = vpop.xlane.xlu0 %1611
    %v1613 = vsel %vm1299, %v1609, 0.0
    %1614 = vadd.xlane.f32.xlu0 %v1613
    %v1615 = vpop.xlane.xlu0 %1614
    %v1616 = vrcp.pop %v1612
    %v1617 = vrcp.pop %v1615
    %v1618 = vmul.f32 %v1607, %v1616
    %v1619 = vmul.f32 %v1609, %v1617
    %1620 = vst [vmem:[#allocation1] ss:$4 sm:$0xff] %v71
    %s1621 = scalar_lea.vmem [#allocation1], 1
    %1622 = vst [vmem:[%s1621] ss:$4 sm:$0xff] %v952
    %s1623 = scalar_lea.vmem [#allocation1], 2
    %1624 = vst [vmem:[%s1623] ss:$4 sm:$0xff] %v953
    %s1625 = scalar_lea.vmem [#allocation1], 3
    %1626 = vst [vmem:[%s1625] ss:$4 sm:$0xff] %v954
    %s1627 = scalar_lea.vmem [#allocation1], 32
    %1628 = vst [vmem:[%s1627] ss:$4 sm:$0xff] %v74
    %v1629 = vld.sshfl [vmem:[#allocation1] sm:$0xff pattern:$0x73625140]
    %v1630 = vld.sshfl [vmem:[#allocation1 + $0x20] sm:$0xff pattern:$0x73625140]
    %1631 = vrot.lane.b32.xlu0 %v1629, 80
    %v1632 = vpop.permute.xlu0 %1631
    %1633 = vrot.lane.b32.xlu0 %v1630, 80
    %v1634 = vpop.permute.xlu0 %1633
    %v1637 = vsel %vm1299, %v1618, 0
    %v1639 = vsel %vm1341, %v1634, 0
    %1641 = vmatpush.msra.mxu0 0.0
    %1642 = vmatpush.msra.mxu0 0.0
    %1643 = vmatpush.msra.mxu0 0.0
    %1644 = vmatpush.msra.mxu0 0.0
    %1645 = vmatpush.msra.mxu0 0.0
    %1646 = vmatpush.msra.mxu0 0.0
    %1647 = vmatpush.msra.mxu0 0.0
    %1648 = vmatpush.msra.mxu0 0.0
    %1649 = vmatpush.msra.mxu0 0.0
    %1650 = vmatpush.msra.mxu0 0.0
    %1651 = vmatpush.msra.mxu0 0.0
    %1652 = vmatpush.msra.mxu0 0.0
    %1653 = vmatpush.msra.mxu0 0.0
    %1654 = vmatpush.msra.mxu0 0.0
    %1655 = vmatpush.msra.mxu0 %v1639
    %1656 = vmatpush.msra.mxu0 %v1632
    %1657 = vmatmul.f32.gmra.mxu0 %v1637
    %v1658 = vpop.f32.mrf.mxu0
    %v1659 = vadd.f32 0.0, %v1658
    %1660 = vdwg.mxu0
    %1661 = vst [vmem:[#allocation1] ss:$4 sm:$0xff] %v955
    %s1662 = scalar_lea.vmem [#allocation1], 1
    %1663 = vst [vmem:[%s1662] ss:$4 sm:$0xff] %v956
    %s1664 = scalar_lea.vmem [#allocation1], 2
    %1665 = vst [vmem:[%s1664] ss:$4 sm:$0xff] %v957
    %s1666 = scalar_lea.vmem [#allocation1], 3
    %1667 = vst [vmem:[%s1666] ss:$4 sm:$0xff] %v77
    %s1668 = scalar_lea.vmem [#allocation1], 32
    %1669 = vst [vmem:[%s1668] ss:$4 sm:$0xff] %v958
    %v1670 = vld.sshfl [vmem:[#allocation1] sm:$0xff pattern:$0x73625140]
    %v1671 = vld.sshfl [vmem:[#allocation1 + $0x20] sm:$0xff pattern:$0x73625140]
    %1672 = vrot.lane.b32.xlu0 %v1670, 80
    %v1673 = vpop.permute.xlu0 %1672
    %1674 = vrot.lane.b32.xlu0 %v1671, 80
    %v1675 = vpop.permute.xlu0 %1674
    %v1678 = vsel %vm1299, %v1619, 0
    %v1680 = vsel %vm1341, %v1675, 0
    %1682 = vmatpush.msra.mxu0 0.0
    %1683 = vmatpush.msra.mxu0 0.0
    %1684 = vmatpush.msra.mxu0 0.0
    %1685 = vmatpush.msra.mxu0 0.0
    %1686 = vmatpush.msra.mxu0 0.0
    %1687 = vmatpush.msra.mxu0 0.0
    %1688 = vmatpush.msra.mxu0 0.0
    %1689 = vmatpush.msra.mxu0 0.0
    %1690 = vmatpush.msra.mxu0 0.0
    %1691 = vmatpush.msra.mxu0 0.0
    %1692 = vmatpush.msra.mxu0 0.0
    %1693 = vmatpush.msra.mxu0 0.0
    %1694 = vmatpush.msra.mxu0 0.0
    %1695 = vmatpush.msra.mxu0 0.0
    %1696 = vmatpush.msra.mxu0 %v1680
    %1697 = vmatpush.msra.mxu0 %v1673
    %1698 = vmatmul.f32.gmra.mxu0 %v1678
    %v1699 = vpop.f32.mrf.mxu0
    %v1700 = vadd.f32 0.0, %v1699
    %1701 = vdwg.mxu0
    %1703 = vrot.lane.b32.xlu0 %v946, 32
    %v1704 = vpop.permute.xlu0 %1703
    %v1707 = vsel %vm125, %v1659, 0
    %v1710 = vsel %vm125, %v1700, 0
    %1712 = vmatpush.msra.mxu0 0.0
    %1713 = vmatpush.msra.mxu0 0.0
    %1714 = vmatpush.msra.mxu0 0.0
    %1715 = vmatpush.msra.mxu0 0.0
    %1716 = vmatpush.msra.mxu0 0.0
    %1717 = vmatpush.msra.mxu0 0.0
    %1718 = vmatpush.msra.mxu0 0.0
    %1719 = vmatpush.msra.mxu0 0.0
    %1720 = vmatpush.msra.mxu0 0.0
    %1721 = vmatpush.msra.mxu0 0.0
    %1722 = vmatpush.msra.mxu0 0.0
    %1723 = vmatpush.msra.mxu0 0.0
    %1724 = vmatpush.msra.mxu0 0.0
    %1725 = vmatpush.msra.mxu0 0.0
    %1726 = vmatpush.msra.mxu0 0.0
    %1727 = vmatpush.msra.mxu0 %v1704
    %1728 = vmatmul.f32.gmra.mxu0 %v1707
    %v1729 = vpop.f32.mrf.mxu0
    %v1730 = vadd.f32 0.0, %v1729
    %1731 = vmatmul.f32.gmra.mxu0 %v1710
    %v1732 = vpop.f32.mrf.mxu0
    %v1733 = vadd.f32 0.0, %v1732
    %1734 = vdwg.mxu0
    %1737 = vrot.lane.b32.xlu0 %v1730, 96
    %v1738 = vpop.permute.xlu0 %1737
    %1739 = vrot.lane.b32.xlu0 %v1733, 96
    %v1740 = vpop.permute.xlu0 %1739
    %v1743 = vadd.f32 %v1596, %v1738
    %v1744 = vadd.f32 %v1597, %v1740
    %v1745 = vsel %vm1299, %v1254, -inf
    %1746 = vmax.xlane.f32.xlu0 %v1745
    %v1747 = vpop.xlane.xlu0 %1746
    %v1748 = vsel %vm1299, %v1297, -inf
    %1749 = vmax.xlane.f32.xlu0 %v1748
    %v1750 = vpop.xlane.xlu0 %1749
    %v1751 = vsub.f32 %v1254, %v1747
    %v1752 = vsub.f32 %v1297, %v1750
    %v1753 = vmul.f32 %v1751, 1.442695
    %v1754 = vpow.pop %v1753
    %v1755 = vmul.f32 %v1752, 1.442695
    %v1756 = vpow.pop %v1755
    %v1757 = vsel %vm1299, %v1754, 0.0
    %1758 = vadd.xlane.f32.xlu0 %v1757
    %v1759 = vpop.xlane.xlu0 %1758
    %v1760 = vsel %vm1299, %v1756, 0.0
    %1761 = vadd.xlane.f32.xlu0 %v1760
    %v1762 = vpop.xlane.xlu0 %1761
    %v1763 = vrcp.pop %v1759
    %v1764 = vrcp.pop %v1762
    %v1765 = vmul.f32 %v1754, %v1763
    %v1766 = vmul.f32 %v1756, %v1764
    %1767 = vst [vmem:[#allocation1] ss:$4 sm:$0xff] %v71
    %s1768 = scalar_lea.vmem [#allocation1], 1
    %1769 = vst [vmem:[%s1768] ss:$4 sm:$0xff] %v952
    %s1770 = scalar_lea.vmem [#allocation1], 2
    %1771 = vst [vmem:[%s1770] ss:$4 sm:$0xff] %v953
    %s1772 = scalar_lea.vmem [#allocation1], 3
    %1773 = vst [vmem:[%s1772] ss:$4 sm:$0xff] %v954
    %s1774 = scalar_lea.vmem [#allocation1], 32
    %1775 = vst [vmem:[%s1774] ss:$4 sm:$0xff] %v74
    %v1776 = vld.sshfl [vmem:[#allocation1] sm:$0xff pattern:$0x73625140]
    %v1777 = vld.sshfl [vmem:[#allocation1 + $0x20] sm:$0xff pattern:$0x73625140]
    %1778 = vrot.lane.b32.xlu0 %v1776, 72
    %v1779 = vpop.permute.xlu0 %1778
    %1780 = vrot.lane.b32.xlu0 %v1777, 72
    %v1781 = vpop.permute.xlu0 %1780
    %v1784 = vsel %vm1299, %v1765, 0
    %v1786 = vsel %vm1341, %v1781, 0
    %1788 = vmatpush.msra.mxu0 0.0
    %1789 = vmatpush.msra.mxu0 0.0
    %1790 = vmatpush.msra.mxu0 0.0
    %1791 = vmatpush.msra.mxu0 0.0
    %1792 = vmatpush.msra.mxu0 0.0
    %1793 = vmatpush.msra.mxu0 0.0
    %1794 = vmatpush.msra.mxu0 0.0
    %1795 = vmatpush.msra.mxu0 0.0
    %1796 = vmatpush.msra.mxu0 0.0
    %1797 = vmatpush.msra.mxu0 0.0
    %1798 = vmatpush.msra.mxu0 0.0
    %1799 = vmatpush.msra.mxu0 0.0
    %1800 = vmatpush.msra.mxu0 0.0
    %1801 = vmatpush.msra.mxu0 0.0
    %1802 = vmatpush.msra.mxu0 %v1786
    %1803 = vmatpush.msra.mxu0 %v1779
    %1804 = vmatmul.f32.gmra.mxu0 %v1784
    %v1805 = vpop.f32.mrf.mxu0
    %v1806 = vadd.f32 0.0, %v1805
    %1807 = vdwg.mxu0
    %1808 = vst [vmem:[#allocation1] ss:$4 sm:$0xff] %v955
    %s1809 = scalar_lea.vmem [#allocation1], 1
    %1810 = vst [vmem:[%s1809] ss:$4 sm:$0xff] %v956
    %s1811 = scalar_lea.vmem [#allocation1], 2
    %1812 = vst [vmem:[%s1811] ss:$4 sm:$0xff] %v957
    %s1813 = scalar_lea.vmem [#allocation1], 3
    %1814 = vst [vmem:[%s1813] ss:$4 sm:$0xff] %v77
    %s1815 = scalar_lea.vmem [#allocation1], 32
    %1816 = vst [vmem:[%s1815] ss:$4 sm:$0xff] %v958
    %v1817 = vld.sshfl [vmem:[#allocation1] sm:$0xff pattern:$0x73625140]
    %v1818 = vld.sshfl [vmem:[#allocation1 + $0x20] sm:$0xff pattern:$0x73625140]
    %1819 = vrot.lane.b32.xlu0 %v1817, 72
    %v1820 = vpop.permute.xlu0 %1819
    %1821 = vrot.lane.b32.xlu0 %v1818, 72
    %v1822 = vpop.permute.xlu0 %1821
    %v1825 = vsel %vm1299, %v1766, 0
    %v1827 = vsel %vm1341, %v1822, 0
    %1829 = vmatpush.msra.mxu0 0.0
    %1830 = vmatpush.msra.mxu0 0.0
    %1831 = vmatpush.msra.mxu0 0.0
    %1832 = vmatpush.msra.mxu0 0.0
    %1833 = vmatpush.msra.mxu0 0.0
    %1834 = vmatpush.msra.mxu0 0.0
    %1835 = vmatpush.msra.mxu0 0.0
    %1836 = vmatpush.msra.mxu0 0.0
    %1837 = vmatpush.msra.mxu0 0.0
    %1838 = vmatpush.msra.mxu0 0.0
    %1839 = vmatpush.msra.mxu0 0.0
    %1840 = vmatpush.msra.mxu0 0.0
    %1841 = vmatpush.msra.mxu0 0.0
    %1842 = vmatpush.msra.mxu0 0.0
    %1843 = vmatpush.msra.mxu0 %v1827
    %1844 = vmatpush.msra.mxu0 %v1820
    %1845 = vmatmul.f32.gmra.mxu0 %v1825
    %v1846 = vpop.f32.mrf.mxu0
    %v1847 = vadd.f32 0.0, %v1846
    %1848 = vdwg.mxu0
    %1850 = vrot.lane.b32.xlu0 %v947, 32
    %v1851 = vpop.permute.xlu0 %1850
    %v1854 = vsel %vm125, %v1806, 0
    %v1857 = vsel %vm125, %v1847, 0
    %1859 = vmatpush.msra.mxu0 0.0
    %1860 = vmatpush.msra.mxu0 0.0
    %1861 = vmatpush.msra.mxu0 0.0
    %1862 = vmatpush.msra.mxu0 0.0
    %1863 = vmatpush.msra.mxu0 0.0
    %1864 = vmatpush.msra.mxu0 0.0
    %1865 = vmatpush.msra.mxu0 0.0
    %1866 = vmatpush.msra.mxu0 0.0
    %1867 = vmatpush.msra.mxu0 0.0
    %1868 = vmatpush.msra.mxu0 0.0
    %1869 = vmatpush.msra.mxu0 0.0
    %1870 = vmatpush.msra.mxu0 0.0
    %1871 = vmatpush.msra.mxu0 0.0
    %1872 = vmatpush.msra.mxu0 0.0
    %1873 = vmatpush.msra.mxu0 0.0
    %1874 = vmatpush.msra.mxu0 %v1851
    %1875 = vmatmul.f32.gmra.mxu0 %v1854
    %v1876 = vpop.f32.mrf.mxu0
    %v1877 = vadd.f32 0.0, %v1876
    %1878 = vmatmul.f32.gmra.mxu0 %v1857
    %v1879 = vpop.f32.mrf.mxu0
    %v1880 = vadd.f32 0.0, %v1879
    %1881 = vdwg.mxu0
    %1884 = vrot.lane.b32.xlu0 %v1877, 96
    %v1885 = vpop.permute.xlu0 %1884
    %1886 = vrot.lane.b32.xlu0 %v1880, 96
    %v1887 = vpop.permute.xlu0 %1886
    %v1890 = vadd.f32 %v1743, %v1885
    %v1891 = vadd.f32 %v1744, %v1887
    %1894 = vrot.lane.b32.xlu0 %v1890, 32
    %v1895 = vpop.permute.xlu0 %1894
    %1896 = vrot.lane.b32.xlu0 %v1891, 32
    %v1897 = vpop.permute.xlu0 %1896
    %v1900 = vadd.f32 %v887, %v1895
    %v1901 = vadd.f32 %v888, %v1897
    %v1902 = vsel %vm43, %v1900, 0.0
    %1903 = vadd.xlane.f32.xlu0 %v1902
    %v1904 = vpop.xlane.xlu0 %1903
    %v1905 = vsel %vm43, %v1901, 0.0
    %1906 = vadd.xlane.f32.xlu0 %v1905
    %v1907 = vpop.xlane.xlu0 %1906
    %v1908 = vmul.f32 %v1904, %v838
    %v1909 = vmul.f32 %v1907, %v838
    %v1910 = vsub.f32 %v1900, %v1908
    %v1911 = vsub.f32 %v1901, %v1909
    %v1912 = vmul.f32 %v1910, %v1910
    %v1913 = vmul.f32 %v1911, %v1911
    %v1914 = vsel %vm43, %v1912, 0.0
    %1915 = vadd.xlane.f32.xlu0 %v1914
    %v1916 = vpop.xlane.xlu0 %1915
    %v1917 = vsel %vm43, %v1913, 0.0
    %1918 = vadd.xlane.f32.xlu0 %v1917
    %v1919 = vpop.xlane.xlu0 %1918
    %v1920 = vmul.f32 %v1916, %v838
    %v1921 = vmul.f32 %v1919, %v838
    %v1922 = vadd.f32 %v1920, 1e-05
    %v1923 = vadd.f32 %v1921, 1e-05
    %v1924 = vrsqrt.pop %v1922
    %v1925 = vmul.f32 %v1924, %v1922
    %v1926 = vmul.f32 %v1925, %v1924
    %v1927 = vmul.f32 0.5, %v1926
    %v1928 = vsub.f32 1.5, %v1927
    %v1929 = vmul.f32 %v1924, %v1928
    %vm1930 = vweird.f32 %v1922
    %vm1931 = vweird.f32 %v1924
    %vm1932 = vmor %vm1930, %vm1931
    %v1933 = vsel %vm1932, %v1924, %v1929
    %v1934 = vrsqrt.pop %v1923
    %v1935 = vmul.f32 %v1934, %v1923
    %v1936 = vmul.f32 %v1935, %v1934
    %v1937 = vmul.f32 0.5, %v1936
    %v1938 = vsub.f32 1.5, %v1937
    %v1939 = vmul.f32 %v1934, %v1938
    %vm1940 = vweird.f32 %v1923
    %vm1941 = vweird.f32 %v1934
    %vm1942 = vmor %vm1940, %vm1941
    %v1943 = vsel %vm1942, %v1934, %v1939
    %v1944 = vmul.f32 %v1910, %v1933
    %v1945 = vmul.f32 %v1911, %v1943
    %v1946 = vmul.f32 %v1944, %v880
    %v1947 = vmul.f32 %v1945, %v880
    %v1948 = vadd.f32 %v1946, %v885
    %v1949 = vadd.f32 %v1947, %v885
    %v1950 = vld [vmem:[%s3 + $0x10] sm:$0xff]
    %v1951 = vld [vmem:[%s3 + $0x40] sm:$0xff]
    %v1952 = vld [vmem:[%s3 + $0x70] sm:$0xff]
    %v1953 = vld [vmem:[%s3 + $0xa0] sm:$0xff]
    %v1954 = vld [vmem:[%s5 + $0x2] sm:$0x1]
    %v1956 = vperm.slane %v1954, 0
    %v1959 = vsel %vm43, %v1948, 0
    %v1962 = vsel %vm43, %v1949, 0
    %1964 = vmatpush.msra.mxu0 0.0
    %1965 = vmatpush.msra.mxu0 0.0
    %1966 = vmatpush.msra.mxu0 0.0
    %1967 = vmatpush.msra.mxu0 0.0
    %1968 = vmatpush.msra.mxu0 0.0
    %1969 = vmatpush.msra.mxu0 0.0
    %1970 = vmatpush.msra.mxu0 0.0
    %1971 = vmatpush.msra.mxu0 0.0
    %1972 = vmatpush.msra.mxu0 0.0
    %1973 = vmatpush.msra.mxu0 0.0
    %1974 = vmatpush.msra.mxu0 0.0
    %1975 = vmatpush.msra.mxu0 0.0
    %1976 = vmatpush.msra.mxu0 %v1953
    %1977 = vmatpush.msra.mxu0 %v1952
    %1978 = vmatpush.msra.mxu0 %v1951
    %1979 = vmatpush.msra.mxu0 %v1950
    %1980 = vmatmul.f32.gmra.mxu0 %v1959
    %v1981 = vpop.f32.mrf.mxu0
    %v1982 = vadd.f32 %v1956, %v1981
    %1983 = vmatmul.f32.gmra.mxu0 %v1962
    %v1984 = vpop.f32.mrf.mxu0
    %v1985 = vadd.f32 %v1956, %v1984
    %1986 = vdwg.mxu0
    %v1987 = vmul.f32 %v1982, 0.5
    %v1988 = vmul.f32 %v1985, 0.5
    %v1989 = vmul.f32 %v1982, 0.70710677
    %v1990 = vmul.f32 %v1985, 0.70710677
    %vm1991 = vcmp.ge.f32.partialorder %v1989, 0.0
    %vm1992 = vcmp.ge.f32.partialorder %v1990, 0.0
    %v1993 = vsel %vm1991, 1.0, -1.0
    %v1994 = vsel %vm1992, 1.0, -1.0
    %v1995 = vmul.f32 %v1989, %v1993
    %v1996 = vmul.f32 %v1990, %v1994
    %v1997 = vmul.f32 %v1995, 0.3275911
    %v1998 = vmul.f32 %v1996, 0.3275911
    %v1999 = vadd.f32 %v1997, 1.0
    %v2000 = vadd.f32 %v1998, 1.0
    %v2001 = vrcp.pop %v1999
    %v2002 = vrcp.pop %v2000
    %v2003 = vmul.f32 %v2001, 1.0614054
    %v2004 = vmul.f32 %v2002, 1.0614054
    %v2005 = vadd.f32 %v2003, -1.4531521
    %v2006 = vadd.f32 %v2004, -1.4531521
    %v2007 = vmul.f32 %v2005, %v2001
    %v2008 = vmul.f32 %v2006, %v2002
    %v2009 = vadd.f32 %v2007, 1.4214138
    %v2010 = vadd.f32 %v2008, 1.4214138
    %v2011 = vmul.f32 %v2009, %v2001
    %v2012 = vmul.f32 %v2010, %v2002
    %v2013 = vadd.f32 %v2011, -0.28449672
    %v2014 = vadd.f32 %v2012, -0.28449672
    %v2015 = vmul.f32 %v2013, %v2001
    %v2016 = vmul.f32 %v2014, %v2002
    %v2017 = vadd.f32 %v2015, 0.2548296
    %v2018 = vadd.f32 %v2016, 0.2548296
    %v2019 = vmul.f32 %v2017, %v2001
    %v2020 = vmul.f32 %v2018, %v2002
    %v2021 = vsub.f32 0.0, %v1995
    %v2022 = vsub.f32 0.0, %v1996
    %v2023 = vmul.f32 %v2021, %v1995
    %v2024 = vmul.f32 %v2022, %v1996
    %v2025 = vmul.f32 %v2023, 1.442695
    %v2026 = vpow.pop %v2025
    %v2027 = vmul.f32 %v2024, 1.442695
    %v2028 = vpow.pop %v2027
    %v2029 = vmul.f32 %v2019, %v2026
    %v2030 = vmul.f32 %v2020, %v2028
    %v2031 = vsub.f32 1.0, %v2029
    %v2032 = vsub.f32 1.0, %v2030
    %v2033 = vmul.f32 %v1993, %v2031
    %v2034 = vmul.f32 %v1994, %v2032
    %v2035 = vadd.f32 %v2033, 1.0
    %v2036 = vadd.f32 %v2034, 1.0
    %v2037 = vmul.f32 %v1987, %v2035
    %v2038 = vmul.f32 %v1988, %v2036
    %v2039 = vld [vmem:[%s4] sm:$0xff]
    %v2040 = vld [vmem:[%s4 + $0x8] sm:$0xff]
    %v2041 = vld [vmem:[%s4 + $0x10] sm:$0xff]
    %v2042 = vld [vmem:[%s4 + $0x18] sm:$0xff]
    %v2043 = vld [vmem:[%s4 + $0x20] sm:$0xff]
    %v2044 = vld [vmem:[%s4 + $0x28] sm:$0xff]
    %v2045 = vld [vmem:[%s4 + $0x30] sm:$0xff]
    %v2046 = vld [vmem:[%s4 + $0x38] sm:$0xff]
    %v2047 = vld [vmem:[%s5 + $0x3] sm:$0x1]
    %v2049 = vperm.slane %v2047, 0
    %vm2051 = vcmask 523264
    %v2053 = vsel %vm2051, %v2037, 0
    %v2056 = vsel %vm2051, %v2038, 0
    %2058 = vmatpush.msra.mxu0 0.0
    %2059 = vmatpush.msra.mxu0 0.0
    %2060 = vmatpush.msra.mxu0 0.0
    %2061 = vmatpush.msra.mxu0 0.0
    %2062 = vmatpush.msra.mxu0 0.0
    %2063 = vmatpush.msra.mxu0 0.0
    %2064 = vmatpush.msra.mxu0 0.0
    %2065 = vmatpush.msra.mxu0 0.0
    %2066 = vmatpush.msra.mxu0 %v2046
    %2067 = vmatpush.msra.mxu0 %v2045
    %2068 = vmatpush.msra.mxu0 %v2044
    %2069 = vmatpush.msra.mxu0 %v2043
    %2070 = vmatpush.msra.mxu0 %v2042
    %2071 = vmatpush.msra.mxu0 %v2041
    %2072 = vmatpush.msra.mxu0 %v2040
    %2073 = vmatpush.msra.mxu0 %v2039
    %2074 = vmatmul.f32.gmra.mxu0 %v2053
    %v2075 = vpop.f32.mrf.mxu0
    %v2076 = vadd.f32 %v2049, %v2075
    %2077 = vmatmul.f32.gmra.mxu0 %v2056
    %v2078 = vpop.f32.mrf.mxu0
    %v2079 = vadd.f32 %v2049, %v2078
    %2080 = vdwg.mxu0
    %v2081 = vadd.f32 %v1948, %v2076
    %v2082 = vadd.f32 %v1949, %v2079
    %v2083 = vsel %vm43, %v2081, 0.0
    %2084 = vadd.xlane.f32.xlu0 %v2083
    %v2085 = vpop.xlane.xlu0 %2084
    %v2086 = vsel %vm43, %v2082, 0.0
    %2087 = vadd.xlane.f32.xlu0 %v2086
    %v2088 = vpop.xlane.xlu0 %2087
    %v2089 = vmul.f32 %v2085, %v838
    %v2090 = vmul.f32 %v2088, %v838
    %v2091 = vsub.f32 %v2081, %v2089
    %v2092 = vsub.f32 %v2082, %v2090
    %v2093 = vmul.f32 %v2091, %v2091
    %v2094 = vmul.f32 %v2092, %v2092
    %v2095 = vsel %vm43, %v2093, 0.0
    %2096 = vadd.xlane.f32.xlu0 %v2095
    %v2097 = vpop.xlane.xlu0 %2096
    %v2098 = vsel %vm43, %v2094, 0.0
    %2099 = vadd.xlane.f32.xlu0 %v2098
    %v2100 = vpop.xlane.xlu0 %2099
    %v2101 = vmul.f32 %v2097, %v838
    %v2102 = vmul.f32 %v2100, %v838
    %v2103 = vadd.f32 %v2101, 1e-05
    %v2104 = vadd.f32 %v2102, 1e-05
    %v2105 = vrsqrt.pop %v2103
    %v2106 = vmul.f32 %v2105, %v2103
    %v2107 = vmul.f32 %v2106, %v2105
    %v2108 = vmul.f32 0.5, %v2107
    %v2109 = vsub.f32 1.5, %v2108
    %v2110 = vmul.f32 %v2105, %v2109
    %vm2111 = vweird.f32 %v2103
    %vm2112 = vweird.f32 %v2105
    %vm2113 = vmor %vm2111, %vm2112
    %v2114 = vsel %vm2113, %v2105, %v2110
    %v2115 = vrsqrt.pop %v2104
    %v2116 = vmul.f32 %v2115, %v2104
    %v2117 = vmul.f32 %v2116, %v2115
    %v2118 = vmul.f32 0.5, %v2117
    %v2119 = vsub.f32 1.5, %v2118
    %v2120 = vmul.f32 %v2115, %v2119
    %vm2121 = vweird.f32 %v2104
    %vm2122 = vweird.f32 %v2115
    %vm2123 = vmor %vm2121, %vm2122
    %v2124 = vsel %vm2123, %v2115, %v2120
    %v2125 = vmul.f32 %v2091, %v2114
    %v2126 = vmul.f32 %v2092, %v2124
    %v2127 = vmul.f32 %v2125, %v880
    %v2128 = vmul.f32 %v2126, %v880
    %v2129 = vadd.f32 %v2127, %v885
    %v2130 = vadd.f32 %v2128, %v885
    %v2131 = vld [vmem:[%s5 + $0x6] sm:$0x1]
    %v2132 = vld [vmem:[%s3 + $0x18] sm:$0xff]
    %v2133 = vld [vmem:[%s3 + $0x48] sm:$0xff]
    %v2134 = vld [vmem:[%s3 + $0x78] sm:$0xff]
    %v2135 = vld [vmem:[%s3 + $0xa8] sm:$0xff]
    %v2136 = vld [vmem:[%s5 + $0x3] sm:$0x3]
    %v2138 = vperm.slane %v2136, 0
    %v2139 = vperm.slane %v2136, 1
    %2140 = vrot.lane.b32.xlu0 %v2138, 32
    %v2141 = vpop.permute.xlu0 %2140
    %2142 = vrot.lane.b32.xlu0 %v2139, 32
    %v2143 = vpop.permute.xlu0 %2142
    %v2144 = vsel %vm43, %v2141, %v2143
    %v2147 = vsel %vm43, %v2129, 0
    %v2150 = vsel %vm43, %v2130, 0
    %2152 = vmatpush.msra.mxu0 0.0
    %2153 = vmatpush.msra.mxu0 0.0
    %2154 = vmatpush.msra.mxu0 0.0
    %2155 = vmatpush.msra.mxu0 0.0
    %2156 = vmatpush.msra.mxu0 0.0
    %2157 = vmatpush.msra.mxu0 0.0
    %2158 = vmatpush.msra.mxu0 0.0
    %2159 = vmatpush.msra.mxu0 0.0
    %2160 = vmatpush.msra.mxu0 0.0
    %2161 = vmatpush.msra.mxu0 0.0
    %2162 = vmatpush.msra.mxu0 0.0
    %2163 = vmatpush.msra.mxu0 0.0
    %2164 = vmatpush.msra.mxu0 %v2135
    %2165 = vmatpush.msra.mxu0 %v2134
    %2166 = vmatpush.msra.mxu0 %v2133
    %2167 = vmatpush.msra.mxu0 %v2132
    %2168 = vmatmul.f32.gmra.mxu0 %v2147
    %v2169 = vpop.f32.mrf.mxu0
    %v2170 = vadd.f32 %v2144, %v2169
    %2171 = vmatmul.f32.gmra.mxu0 %v2150
    %v2172 = vpop.f32.mrf.mxu0
    %v2173 = vadd.f32 %v2144, %v2172
    %2174 = vdwg.mxu0
    %v2175 = vld [vmem:[%s3 + $0x20] sm:$0xff]
    %v2176 = vld [vmem:[%s3 + $0x50] sm:$0xff]
    %v2177 = vld [vmem:[%s3 + $0x80] sm:$0xff]
    %v2178 = vld [vmem:[%s3 + $0xb0] sm:$0xff]
    %v2179 = vld [vmem:[%s5 + $0x5] sm:$0x1]
    %2181 = vrot.lane.b32.xlu0 %v2170, 96
    %v2182 = vpop.permute.xlu0 %2181
    %v2183 = vsel %vm125, %v2170, 0
    %v2185 = vsel %vm125, %v2182, 0
    %2187 = vmatpush.xpose.msra.mxu0 0.0
    %2188 = vmatpush.xpose.msra.mxu0 0.0
    %2189 = vmatpush.xpose.msra.mxu0 0.0
    %2190 = vmatpush.xpose.msra.mxu0 0.0
    %2191 = vmatpush.xpose.msra.mxu0 0.0
    %2192 = vmatpush.xpose.msra.mxu0 0.0
    %2193 = vmatpush.xpose.msra.mxu0 0.0
    %2194 = vmatpush.xpose.msra.mxu0 0.0
    %2195 = vmatpush.xpose.msra.mxu0 0.0
    %2196 = vmatpush.xpose.msra.mxu0 0.0
    %2197 = vmatpush.xpose.msra.mxu0 0.0
    %2198 = vmatpush.xpose.msra.mxu0 0.0
    %2199 = vmatpush.xpose.msra.mxu0 0.0
    %2200 = vmatpush.xpose.msra.mxu0 0.0
    %2201 = vmatpush.xpose.msra.mxu0 0.0
    %2202 = vmatpush.xpose.msra.mxu0 %v2185
    %2203 = vmatmul.f32.gmra.mxu0 %v2183
    %v2204 = vpop.f32.mrf.mxu0
    %v2205 = vadd.f32 %v31, %v2204
    %2206 = vdwg.mxu0
    %2208 = vrot.lane.b32.xlu0 %v2173, 96
    %v2209 = vpop.permute.xlu0 %2208
    %v2210 = vsel %vm125, %v2173, 0
    %v2212 = vsel %vm125, %v2209, 0
    %2214 = vmatpush.xpose.msra.mxu0 0.0
    %2215 = vmatpush.xpose.msra.mxu0 0.0
    %2216 = vmatpush.xpose.msra.mxu0 0.0
    %2217 = vmatpush.xpose.msra.mxu0 0.0
    %2218 = vmatpush.xpose.msra.mxu0 0.0
    %2219 = vmatpush.xpose.msra.mxu0 0.0
    %2220 = vmatpush.xpose.msra.mxu0 0.0
    %2221 = vmatpush.xpose.msra.mxu0 0.0
    %2222 = vmatpush.xpose.msra.mxu0 0.0
    %2223 = vmatpush.xpose.msra.mxu0 0.0
    %2224 = vmatpush.xpose.msra.mxu0 0.0
    %2225 = vmatpush.xpose.msra.mxu0 0.0
    %2226 = vmatpush.xpose.msra.mxu0 0.0
    %2227 = vmatpush.xpose.msra.mxu0 0.0
    %2228 = vmatpush.xpose.msra.mxu0 0.0
    %2229 = vmatpush.xpose.msra.mxu0 %v2212
    %2230 = vmatmul.f32.gmra.mxu0 %v2210
    %v2231 = vpop.f32.mrf.mxu0
    %v2232 = vadd.f32 %v32, %v2231
    %2233 = vdwg.mxu0
    %2234 = vrot.lane.b32.xlu0 %v2170, 120
    %v2235 = vpop.permute.xlu0 %2234
    %2236 = vrot.lane.b32.xlu0 %v2170, 88
    %v2237 = vpop.permute.xlu0 %2236
    %v2238 = vsel %vm125, %v2235, 0
    %v2240 = vsel %vm125, %v2237, 0
    %2242 = vmatpush.xpose.msra.mxu0 0.0
    %2243 = vmatpush.xpose.msra.mxu0 0.0
    %2244 = vmatpush.xpose.msra.mxu0 0.0
    %2245 = vmatpush.xpose.msra.mxu0 0.0
    %2246 = vmatpush.xpose.msra.mxu0 0.0
    %2247 = vmatpush.xpose.msra.mxu0 0.0
    %2248 = vmatpush.xpose.msra.mxu0 0.0
    %2249 = vmatpush.xpose.msra.mxu0 0.0
    %2250 = vmatpush.xpose.msra.mxu0 0.0
    %2251 = vmatpush.xpose.msra.mxu0 0.0
    %2252 = vmatpush.xpose.msra.mxu0 0.0
    %2253 = vmatpush.xpose.msra.mxu0 0.0
    %2254 = vmatpush.xpose.msra.mxu0 0.0
    %2255 = vmatpush.xpose.msra.mxu0 0.0
    %2256 = vmatpush.xpose.msra.mxu0 0.0
    %2257 = vmatpush.xpose.msra.mxu0 %v2240
    %2258 = vmatmul.f32.gmra.mxu0 %v2238
    %v2259 = vpop.f32.mrf.mxu0
    %v2260 = vadd.f32 %v31, %v2259
    %2261 = vdwg.mxu0
    %2262 = vrot.lane.b32.xlu0 %v2173, 120
    %v2263 = vpop.permute.xlu0 %2262
    %2264 = vrot.lane.b32.xlu0 %v2173, 88
    %v2265 = vpop.permute.xlu0 %2264
    %v2266 = vsel %vm125, %v2263, 0
    %v2268 = vsel %vm125, %v2265, 0
    %2270 = vmatpush.xpose.msra.mxu0 0.0
    %2271 = vmatpush.xpose.msra.mxu0 0.0
    %2272 = vmatpush.xpose.msra.mxu0 0.0
    %2273 = vmatpush.xpose.msra.mxu0 0.0
    %2274 = vmatpush.xpose.msra.mxu0 0.0
    %2275 = vmatpush.xpose.msra.mxu0 0.0
    %2276 = vmatpush.xpose.msra.mxu0 0.0
    %2277 = vmatpush.xpose.msra.mxu0 0.0
    %2278 = vmatpush.xpose.msra.mxu0 0.0
    %2279 = vmatpush.xpose.msra.mxu0 0.0
    %2280 = vmatpush.xpose.msra.mxu0 0.0
    %2281 = vmatpush.xpose.msra.mxu0 0.0
    %2282 = vmatpush.xpose.msra.mxu0 0.0
    %2283 = vmatpush.xpose.msra.mxu0 0.0
    %2284 = vmatpush.xpose.msra.mxu0 0.0
    %2285 = vmatpush.xpose.msra.mxu0 %v2268
    %2286 = vmatmul.f32.gmra.mxu0 %v2266
    %v2287 = vpop.f32.mrf.mxu0
    %v2288 = vadd.f32 %v32, %v2287
    %2289 = vdwg.mxu0
    %2290 = vrot.lane.b32.xlu0 %v2170, 112
    %v2291 = vpop.permute.xlu0 %2290
    %2292 = vrot.lane.b32.xlu0 %v2170, 80
    %v2293 = vpop.permute.xlu0 %2292
    %v2294 = vsel %vm125, %v2291, 0
    %v2296 = vsel %vm125, %v2293, 0
    %2298 = vmatpush.xpose.msra.mxu0 0.0
    %2299 = vmatpush.xpose.msra.mxu0 0.0
    %2300 = vmatpush.xpose.msra.mxu0 0.0
    %2301 = vmatpush.xpose.msra.mxu0 0.0
    %2302 = vmatpush.xpose.msra.mxu0 0.0
    %2303 = vmatpush.xpose.msra.mxu0 0.0
    %2304 = vmatpush.xpose.msra.mxu0 0.0
    %2305 = vmatpush.xpose.msra.mxu0 0.0
    %2306 = vmatpush.xpose.msra.mxu0 0.0
    %2307 = vmatpush.xpose.msra.mxu0 0.0
    %2308 = vmatpush.xpose.msra.mxu0 0.0
    %2309 = vmatpush.xpose.msra.mxu0 0.0
    %2310 = vmatpush.xpose.msra.mxu0 0.0
    %2311 = vmatpush.xpose.msra.mxu0 0.0
    %2312 = vmatpush.xpose.msra.mxu0 0.0
    %2313 = vmatpush.xpose.msra.mxu0 %v2296
    %2314 = vmatmul.f32.gmra.mxu0 %v2294
    %v2315 = vpop.f32.mrf.mxu0
    %v2316 = vadd.f32 %v31, %v2315
    %2317 = vdwg.mxu0
    %2318 = vrot.lane.b32.xlu0 %v2173, 112
    %v2319 = vpop.permute.xlu0 %2318
    %2320 = vrot.lane.b32.xlu0 %v2173, 80
    %v2321 = vpop.permute.xlu0 %2320
    %v2322 = vsel %vm125, %v2319, 0
    %v2324 = vsel %vm125, %v2321, 0
    %2326 = vmatpush.xpose.msra.mxu0 0.0
    %2327 = vmatpush.xpose.msra.mxu0 0.0
    %2328 = vmatpush.xpose.msra.mxu0 0.0
    %2329 = vmatpush.xpose.msra.mxu0 0.0
    %2330 = vmatpush.xpose.msra.mxu0 0.0
    %2331 = vmatpush.xpose.msra.mxu0 0.0
    %2332 = vmatpush.xpose.msra.mxu0 0.0
    %2333 = vmatpush.xpose.msra.mxu0 0.0
    %2334 = vmatpush.xpose.msra.mxu0 0.0
    %2335 = vmatpush.xpose.msra.mxu0 0.0
    %2336 = vmatpush.xpose.msra.mxu0 0.0
    %2337 = vmatpush.xpose.msra.mxu0 0.0
    %2338 = vmatpush.xpose.msra.mxu0 0.0
    %2339 = vmatpush.xpose.msra.mxu0 0.0
    %2340 = vmatpush.xpose.msra.mxu0 0.0
    %2341 = vmatpush.xpose.msra.mxu0 %v2324
    %2342 = vmatmul.f32.gmra.mxu0 %v2322
    %v2343 = vpop.f32.mrf.mxu0
    %v2344 = vadd.f32 %v32, %v2343
    %2345 = vdwg.mxu0
    %2346 = vrot.lane.b32.xlu0 %v2170, 104
    %v2347 = vpop.permute.xlu0 %2346
    %2348 = vrot.lane.b32.xlu0 %v2170, 72
    %v2349 = vpop.permute.xlu0 %2348
    %v2350 = vsel %vm125, %v2347, 0
    %v2352 = vsel %vm125, %v2349, 0
    %2354 = vmatpush.xpose.msra.mxu0 0.0
    %2355 = vmatpush.xpose.msra.mxu0 0.0
    %2356 = vmatpush.xpose.msra.mxu0 0.0
    %2357 = vmatpush.xpose.msra.mxu0 0.0
    %2358 = vmatpush.xpose.msra.mxu0 0.0
    %2359 = vmatpush.xpose.msra.mxu0 0.0
    %2360 = vmatpush.xpose.msra.mxu0 0.0
    %2361 = vmatpush.xpose.msra.mxu0 0.0
    %2362 = vmatpush.xpose.msra.mxu0 0.0
    %2363 = vmatpush.xpose.msra.mxu0 0.0
    %2364 = vmatpush.xpose.msra.mxu0 0.0
    %2365 = vmatpush.xpose.msra.mxu0 0.0
    %2366 = vmatpush.xpose.msra.mxu0 0.0
    %2367 = vmatpush.xpose.msra.mxu0 0.0
    %2368 = vmatpush.xpose.msra.mxu0 0.0
    %2369 = vmatpush.xpose.msra.mxu0 %v2352
    %2370 = vmatmul.f32.gmra.mxu0 %v2350
    %v2371 = vpop.f32.mrf.mxu0
    %v2372 = vadd.f32 %v31, %v2371
    %2373 = vdwg.mxu0
    %2374 = vrot.lane.b32.xlu0 %v2173, 104
    %v2375 = vpop.permute.xlu0 %2374
    %2376 = vrot.lane.b32.xlu0 %v2173, 72
    %v2377 = vpop.permute.xlu0 %2376
    %v2378 = vsel %vm125, %v2375, 0
    %v2380 = vsel %vm125, %v2377, 0
    %2382 = vmatpush.xpose.msra.mxu0 0.0
    %2383 = vmatpush.xpose.msra.mxu0 0.0
    %2384 = vmatpush.xpose.msra.mxu0 0.0
    %2385 = vmatpush.xpose.msra.mxu0 0.0
    %2386 = vmatpush.xpose.msra.mxu0 0.0
    %2387 = vmatpush.xpose.msra.mxu0 0.0
    %2388 = vmatpush.xpose.msra.mxu0 0.0
    %2389 = vmatpush.xpose.msra.mxu0 0.0
    %2390 = vmatpush.xpose.msra.mxu0 0.0
    %2391 = vmatpush.xpose.msra.mxu0 0.0
    %2392 = vmatpush.xpose.msra.mxu0 0.0
    %2393 = vmatpush.xpose.msra.mxu0 0.0
    %2394 = vmatpush.xpose.msra.mxu0 0.0
    %2395 = vmatpush.xpose.msra.mxu0 0.0
    %2396 = vmatpush.xpose.msra.mxu0 0.0
    %2397 = vmatpush.xpose.msra.mxu0 %v2380
    %2398 = vmatmul.f32.gmra.mxu0 %v2378
    %v2399 = vpop.f32.mrf.mxu0
    %v2400 = vadd.f32 %v32, %v2399
    %2401 = vdwg.mxu0
    %v2402 = vsel %vm125, %v2205, -inf
    %2403 = vmax.xlane.f32.xlu0 %v2402
    %v2404 = vpop.xlane.xlu0 %2403
    %v2405 = vsel %vm125, %v2232, -inf
    %2406 = vmax.xlane.f32.xlu0 %v2405
    %v2407 = vpop.xlane.xlu0 %2406
    %v2408 = vsub.f32 %v2205, %v2404
    %v2409 = vsub.f32 %v2232, %v2407
    %v2410 = vmul.f32 %v2408, 1.442695
    %v2411 = vpow.pop %v2410
    %v2412 = vmul.f32 %v2409, 1.442695
    %v2413 = vpow.pop %v2412
    %v2414 = vsel %vm125, %v2411, 0.0
    %2415 = vadd.xlane.f32.xlu0 %v2414
    %v2416 = vpop.xlane.xlu0 %2415
    %v2417 = vsel %vm125, %v2413, 0.0
    %2418 = vadd.xlane.f32.xlu0 %v2417
    %v2419 = vpop.xlane.xlu0 %2418
    %v2420 = vrcp.pop %v2416
    %v2421 = vrcp.pop %v2419
    %v2422 = vmul.f32 %v2411, %v2420
    %v2423 = vmul.f32 %v2413, %v2421
    %2424 = vrot.lane.b32.xlu0 %v2170, 64
    %v2425 = vpop.permute.xlu0 %2424
    %v2428 = vsel %vm125, %v2422, 0
    %2430 = vmatpush.msra.mxu0 0.0
    %2431 = vmatpush.msra.mxu0 0.0
    %2432 = vmatpush.msra.mxu0 0.0
    %2433 = vmatpush.msra.mxu0 0.0
    %2434 = vmatpush.msra.mxu0 0.0
    %2435 = vmatpush.msra.mxu0 0.0
    %2436 = vmatpush.msra.mxu0 0.0
    %2437 = vmatpush.msra.mxu0 0.0
    %2438 = vmatpush.msra.mxu0 0.0
    %2439 = vmatpush.msra.mxu0 0.0
    %2440 = vmatpush.msra.mxu0 0.0
    %2441 = vmatpush.msra.mxu0 0.0
    %2442 = vmatpush.msra.mxu0 0.0
    %2443 = vmatpush.msra.mxu0 0.0
    %2444 = vmatpush.msra.mxu0 0.0
    %2445 = vmatpush.msra.mxu0 %v2425
    %2446 = vmatmul.f32.gmra.mxu0 %v2428
    %v2447 = vpop.f32.mrf.mxu0
    %v2448 = vadd.f32 0.0, %v2447
    %2449 = vdwg.mxu0
    %2450 = vrot.lane.b32.xlu0 %v2173, 64
    %v2451 = vpop.permute.xlu0 %2450
    %v2454 = vsel %vm125, %v2423, 0
    %2456 = vmatpush.msra.mxu0 0.0
    %2457 = vmatpush.msra.mxu0 0.0
    %2458 = vmatpush.msra.mxu0 0.0
    %2459 = vmatpush.msra.mxu0 0.0
    %2460 = vmatpush.msra.mxu0 0.0
    %2461 = vmatpush.msra.mxu0 0.0
    %2462 = vmatpush.msra.mxu0 0.0
    %2463 = vmatpush.msra.mxu0 0.0
    %2464 = vmatpush.msra.mxu0 0.0
    %2465 = vmatpush.msra.mxu0 0.0
    %2466 = vmatpush.msra.mxu0 0.0
    %2467 = vmatpush.msra.mxu0 0.0
    %2468 = vmatpush.msra.mxu0 0.0
    %2469 = vmatpush.msra.mxu0 0.0
    %2470 = vmatpush.msra.mxu0 0.0
    %2471 = vmatpush.msra.mxu0 %v2451
    %2472 = vmatmul.f32.gmra.mxu0 %v2454
    %v2473 = vpop.f32.mrf.mxu0
    %v2474 = vadd.f32 0.0, %v2473
    %2475 = vdwg.mxu0
    %2477 = vrot.lane.b32.xlu0 %v2175, 64
    %v2478 = vpop.permute.xlu0 %2477
    %v2481 = vsel %vm125, %v2448, 0
    %v2484 = vsel %vm125, %v2474, 0
    %2486 = vmatpush.msra.mxu0 0.0
    %2487 = vmatpush.msra.mxu0 0.0
    %2488 = vmatpush.msra.mxu0 0.0
    %2489 = vmatpush.msra.mxu0 0.0
    %2490 = vmatpush.msra.mxu0 0.0
    %2491 = vmatpush.msra.mxu0 0.0
    %2492 = vmatpush.msra.mxu0 0.0
    %2493 = vmatpush.msra.mxu0 0.0
    %2494 = vmatpush.msra.mxu0 0.0
    %2495 = vmatpush.msra.mxu0 0.0
    %2496 = vmatpush.msra.mxu0 0.0
    %2497 = vmatpush.msra.mxu0 0.0
    %2498 = vmatpush.msra.mxu0 0.0
    %2499 = vmatpush.msra.mxu0 0.0
    %2500 = vmatpush.msra.mxu0 0.0
    %2501 = vmatpush.msra.mxu0 %v2478
    %2502 = vmatmul.f32.gmra.mxu0 %v2481
    %v2503 = vpop.f32.mrf.mxu0
    %v2504 = vadd.f32 0.0, %v2503
    %2505 = vmatmul.f32.gmra.mxu0 %v2484
    %v2506 = vpop.f32.mrf.mxu0
    %v2507 = vadd.f32 0.0, %v2506
    %2508 = vdwg.mxu0
    %v2510 = vperm.slane %v2179, 0
    %2514 = vrot.lane.b32.xlu0 %v2504, 32
    %v2515 = vpop.permute.xlu0 %2514
    %2516 = vrot.lane.b32.xlu0 %v2507, 32
    %v2517 = vpop.permute.xlu0 %2516
    %v2520 = vadd.f32 %v2510, %v2515
    %v2521 = vadd.f32 %v2510, %v2517
    %v2522 = vsel %vm125, %v2260, -inf
    %2523 = vmax.xlane.f32.xlu0 %v2522
    %v2524 = vpop.xlane.xlu0 %2523
    %v2525 = vsel %vm125, %v2288, -inf
    %2526 = vmax.xlane.f32.xlu0 %v2525
    %v2527 = vpop.xlane.xlu0 %2526
    %v2528 = vsub.f32 %v2260, %v2524
    %v2529 = vsub.f32 %v2288, %v2527
    %v2530 = vmul.f32 %v2528, 1.442695
    %v2531 = vpow.pop %v2530
    %v2532 = vmul.f32 %v2529, 1.442695
    %v2533 = vpow.pop %v2532
    %v2534 = vsel %vm125, %v2531, 0.0
    %2535 = vadd.xlane.f32.xlu0 %v2534
    %v2536 = vpop.xlane.xlu0 %2535
    %v2537 = vsel %vm125, %v2533, 0.0
    %2538 = vadd.xlane.f32.xlu0 %v2537
    %v2539 = vpop.xlane.xlu0 %2538
    %v2540 = vrcp.pop %v2536
    %v2541 = vrcp.pop %v2539
    %v2542 = vmul.f32 %v2531, %v2540
    %v2543 = vmul.f32 %v2533, %v2541
    %2544 = vrot.lane.b32.xlu0 %v2170, 56
    %v2545 = vpop.permute.xlu0 %2544
    %v2548 = vsel %vm125, %v2542, 0
    %2550 = vmatpush.msra.mxu0 0.0
    %2551 = vmatpush.msra.mxu0 0.0
    %2552 = vmatpush.msra.mxu0 0.0
    %2553 = vmatpush.msra.mxu0 0.0
    %2554 = vmatpush.msra.mxu0 0.0
    %2555 = vmatpush.msra.mxu0 0.0
    %2556 = vmatpush.msra.mxu0 0.0
    %2557 = vmatpush.msra.mxu0 0.0
    %2558 = vmatpush.msra.mxu0 0.0
    %2559 = vmatpush.msra.mxu0 0.0
    %2560 = vmatpush.msra.mxu0 0.0
    %2561 = vmatpush.msra.mxu0 0.0
    %2562 = vmatpush.msra.mxu0 0.0
    %2563 = vmatpush.msra.mxu0 0.0
    %2564 = vmatpush.msra.mxu0 0.0
    %2565 = vmatpush.msra.mxu0 %v2545
    %2566 = vmatmul.f32.gmra.mxu0 %v2548
    %v2567 = vpop.f32.mrf.mxu0
    %v2568 = vadd.f32 0.0, %v2567
    %2569 = vdwg.mxu0
    %2570 = vrot.lane.b32.xlu0 %v2173, 56
    %v2571 = vpop.permute.xlu0 %2570
    %v2574 = vsel %vm125, %v2543, 0
    %2576 = vmatpush.msra.mxu0 0.0
    %2577 = vmatpush.msra.mxu0 0.0
    %2578 = vmatpush.msra.mxu0 0.0
    %2579 = vmatpush.msra.mxu0 0.0
    %2580 = vmatpush.msra.mxu0 0.0
    %2581 = vmatpush.msra.mxu0 0.0
    %2582 = vmatpush.msra.mxu0 0.0
    %2583 = vmatpush.msra.mxu0 0.0
    %2584 = vmatpush.msra.mxu0 0.0
    %2585 = vmatpush.msra.mxu0 0.0
    %2586 = vmatpush.msra.mxu0 0.0
    %2587 = vmatpush.msra.mxu0 0.0
    %2588 = vmatpush.msra.mxu0 0.0
    %2589 = vmatpush.msra.mxu0 0.0
    %2590 = vmatpush.msra.mxu0 0.0
    %2591 = vmatpush.msra.mxu0 %v2571
    %2592 = vmatmul.f32.gmra.mxu0 %v2574
    %v2593 = vpop.f32.mrf.mxu0
    %v2594 = vadd.f32 0.0, %v2593
    %2595 = vdwg.mxu0
    %2597 = vrot.lane.b32.xlu0 %v2176, 64
    %v2598 = vpop.permute.xlu0 %2597
    %v2601 = vsel %vm125, %v2568, 0
    %v2604 = vsel %vm125, %v2594, 0
    %2606 = vmatpush.msra.mxu0 0.0
    %2607 = vmatpush.msra.mxu0 0.0
    %2608 = vmatpush.msra.mxu0 0.0
    %2609 = vmatpush.msra.mxu0 0.0
    %2610 = vmatpush.msra.mxu0 0.0
    %2611 = vmatpush.msra.mxu0 0.0
    %2612 = vmatpush.msra.mxu0 0.0
    %2613 = vmatpush.msra.mxu0 0.0
    %2614 = vmatpush.msra.mxu0 0.0
    %2615 = vmatpush.msra.mxu0 0.0
    %2616 = vmatpush.msra.mxu0 0.0
    %2617 = vmatpush.msra.mxu0 0.0
    %2618 = vmatpush.msra.mxu0 0.0
    %2619 = vmatpush.msra.mxu0 0.0
    %2620 = vmatpush.msra.mxu0 0.0
    %2621 = vmatpush.msra.mxu0 %v2598
    %2622 = vmatmul.f32.gmra.mxu0 %v2601
    %v2623 = vpop.f32.mrf.mxu0
    %v2624 = vadd.f32 0.0, %v2623
    %2625 = vmatmul.f32.gmra.mxu0 %v2604
    %v2626 = vpop.f32.mrf.mxu0
    %v2627 = vadd.f32 0.0, %v2626
    %2628 = vdwg.mxu0
    %2631 = vrot.lane.b32.xlu0 %v2624, 32
    %v2632 = vpop.permute.xlu0 %2631
    %2633 = vrot.lane.b32.xlu0 %v2627, 32
    %v2634 = vpop.permute.xlu0 %2633
    %v2637 = vadd.f32 %v2520, %v2632
    %v2638 = vadd.f32 %v2521, %v2634
    %v2639 = vsel %vm125, %v2316, -inf
    %2640 = vmax.xlane.f32.xlu0 %v2639
    %v2641 = vpop.xlane.xlu0 %2640
    %v2642 = vsel %vm125, %v2344, -inf
    %2643 = vmax.xlane.f32.xlu0 %v2642
    %v2644 = vpop.xlane.xlu0 %2643
    %v2645 = vsub.f32 %v2316, %v2641
    %v2646 = vsub.f32 %v2344, %v2644
    %v2647 = vmul.f32 %v2645, 1.442695
    %v2648 = vpow.pop %v2647
    %v2649 = vmul.f32 %v2646, 1.442695
    %v2650 = vpow.pop %v2649
    %v2651 = vsel %vm125, %v2648, 0.0
    %2652 = vadd.xlane.f32.xlu0 %v2651
    %v2653 = vpop.xlane.xlu0 %2652
    %v2654 = vsel %vm125, %v2650, 0.0
    %2655 = vadd.xlane.f32.xlu0 %v2654
    %v2656 = vpop.xlane.xlu0 %2655
    %v2657 = vrcp.pop %v2653
    %v2658 = vrcp.pop %v2656
    %v2659 = vmul.f32 %v2648, %v2657
    %v2660 = vmul.f32 %v2650, %v2658
    %2661 = vrot.lane.b32.xlu0 %v2170, 48
    %v2662 = vpop.permute.xlu0 %2661
    %v2665 = vsel %vm125, %v2659, 0
    %2667 = vmatpush.msra.mxu0 0.0
    %2668 = vmatpush.msra.mxu0 0.0
    %2669 = vmatpush.msra.mxu0 0.0
    %2670 = vmatpush.msra.mxu0 0.0
    %2671 = vmatpush.msra.mxu0 0.0
    %2672 = vmatpush.msra.mxu0 0.0
    %2673 = vmatpush.msra.mxu0 0.0
    %2674 = vmatpush.msra.mxu0 0.0
    %2675 = vmatpush.msra.mxu0 0.0
    %2676 = vmatpush.msra.mxu0 0.0
    %2677 = vmatpush.msra.mxu0 0.0
    %2678 = vmatpush.msra.mxu0 0.0
    %2679 = vmatpush.msra.mxu0 0.0
    %2680 = vmatpush.msra.mxu0 0.0
    %2681 = vmatpush.msra.mxu0 0.0
    %2682 = vmatpush.msra.mxu0 %v2662
    %2683 = vmatmul.f32.gmra.mxu0 %v2665
    %v2684 = vpop.f32.mrf.mxu0
    %v2685 = vadd.f32 0.0, %v2684
    %2686 = vdwg.mxu0
    %2687 = vrot.lane.b32.xlu0 %v2173, 48
    %v2688 = vpop.permute.xlu0 %2687
    %v2691 = vsel %vm125, %v2660, 0
    %2693 = vmatpush.msra.mxu0 0.0
    %2694 = vmatpush.msra.mxu0 0.0
    %2695 = vmatpush.msra.mxu0 0.0
    %2696 = vmatpush.msra.mxu0 0.0
    %2697 = vmatpush.msra.mxu0 0.0
    %2698 = vmatpush.msra.mxu0 0.0
    %2699 = vmatpush.msra.mxu0 0.0
    %2700 = vmatpush.msra.mxu0 0.0
    %2701 = vmatpush.msra.mxu0 0.0
    %2702 = vmatpush.msra.mxu0 0.0
    %2703 = vmatpush.msra.mxu0 0.0
    %2704 = vmatpush.msra.mxu0 0.0
    %2705 = vmatpush.msra.mxu0 0.0
    %2706 = vmatpush.msra.mxu0 0.0
    %2707 = vmatpush.msra.mxu0 0.0
    %2708 = vmatpush.msra.mxu0 %v2688
    %2709 = vmatmul.f32.gmra.mxu0 %v2691
    %v2710 = vpop.f32.mrf.mxu0
    %v2711 = vadd.f32 0.0, %v2710
    %2712 = vdwg.mxu0
    %2714 = vrot.lane.b32.xlu0 %v2177, 64
    %v2715 = vpop.permute.xlu0 %2714
    %v2718 = vsel %vm125, %v2685, 0
    %v2721 = vsel %vm125, %v2711, 0
    %2723 = vmatpush.msra.mxu0 0.0
    %2724 = vmatpush.msra.mxu0 0.0
    %2725 = vmatpush.msra.mxu0 0.0
    %2726 = vmatpush.msra.mxu0 0.0
    %2727 = vmatpush.msra.mxu0 0.0
    %2728 = vmatpush.msra.mxu0 0.0
    %2729 = vmatpush.msra.mxu0 0.0
    %2730 = vmatpush.msra.mxu0 0.0
    %2731 = vmatpush.msra.mxu0 0.0
    %2732 = vmatpush.msra.mxu0 0.0
    %2733 = vmatpush.msra.mxu0 0.0
    %2734 = vmatpush.msra.mxu0 0.0
    %2735 = vmatpush.msra.mxu0 0.0
    %2736 = vmatpush.msra.mxu0 0.0
    %2737 = vmatpush.msra.mxu0 0.0
    %2738 = vmatpush.msra.mxu0 %v2715
    %2739 = vmatmul.f32.gmra.mxu0 %v2718
    %v2740 = vpop.f32.mrf.mxu0
    %v2741 = vadd.f32 0.0, %v2740
    %2742 = vmatmul.f32.gmra.mxu0 %v2721
    %v2743 = vpop.f32.mrf.mxu0
    %v2744 = vadd.f32 0.0, %v2743
    %2745 = vdwg.mxu0
    %2748 = vrot.lane.b32.xlu0 %v2741, 32
    %v2749 = vpop.permute.xlu0 %2748
    %2750 = vrot.lane.b32.xlu0 %v2744, 32
    %v2751 = vpop.permute.xlu0 %2750
    %v2754 = vadd.f32 %v2637, %v2749
    %v2755 = vadd.f32 %v2638, %v2751
    %v2756 = vsel %vm125, %v2372, -inf
    %2757 = vmax.xlane.f32.xlu0 %v2756
    %v2758 = vpop.xlane.xlu0 %2757
    %v2759 = vsel %vm125, %v2400, -inf
    %2760 = vmax.xlane.f32.xlu0 %v2759
    %v2761 = vpop.xlane.xlu0 %2760
    %v2762 = vsub.f32 %v2372, %v2758
    %v2763 = vsub.f32 %v2400, %v2761
    %v2764 = vmul.f32 %v2762, 1.442695
    %v2765 = vpow.pop %v2764
    %v2766 = vmul.f32 %v2763, 1.442695
    %v2767 = vpow.pop %v2766
    %v2768 = vsel %vm125, %v2765, 0.0
    %2769 = vadd.xlane.f32.xlu0 %v2768
    %v2770 = vpop.xlane.xlu0 %2769
    %v2771 = vsel %vm125, %v2767, 0.0
    %2772 = vadd.xlane.f32.xlu0 %v2771
    %v2773 = vpop.xlane.xlu0 %2772
    %v2774 = vrcp.pop %v2770
    %v2775 = vrcp.pop %v2773
    %v2776 = vmul.f32 %v2765, %v2774
    %v2777 = vmul.f32 %v2767, %v2775
    %2778 = vrot.lane.b32.xlu0 %v2170, 40
    %v2779 = vpop.permute.xlu0 %2778
    %v2782 = vsel %vm125, %v2776, 0
    %2784 = vmatpush.msra.mxu0 0.0
    %2785 = vmatpush.msra.mxu0 0.0
    %2786 = vmatpush.msra.mxu0 0.0
    %2787 = vmatpush.msra.mxu0 0.0
    %2788 = vmatpush.msra.mxu0 0.0
    %2789 = vmatpush.msra.mxu0 0.0
    %2790 = vmatpush.msra.mxu0 0.0
    %2791 = vmatpush.msra.mxu0 0.0
    %2792 = vmatpush.msra.mxu0 0.0
    %2793 = vmatpush.msra.mxu0 0.0
    %2794 = vmatpush.msra.mxu0 0.0
    %2795 = vmatpush.msra.mxu0 0.0
    %2796 = vmatpush.msra.mxu0 0.0
    %2797 = vmatpush.msra.mxu0 0.0
    %2798 = vmatpush.msra.mxu0 0.0
    %2799 = vmatpush.msra.mxu0 %v2779
    %2800 = vmatmul.f32.gmra.mxu0 %v2782
    %v2801 = vpop.f32.mrf.mxu0
    %v2802 = vadd.f32 0.0, %v2801
    %2803 = vdwg.mxu0
    %2804 = vrot.lane.b32.xlu0 %v2173, 40
    %v2805 = vpop.permute.xlu0 %2804
    %v2808 = vsel %vm125, %v2777, 0
    %2810 = vmatpush.msra.mxu0 0.0
    %2811 = vmatpush.msra.mxu0 0.0
    %2812 = vmatpush.msra.mxu0 0.0
    %2813 = vmatpush.msra.mxu0 0.0
    %2814 = vmatpush.msra.mxu0 0.0
    %2815 = vmatpush.msra.mxu0 0.0
    %2816 = vmatpush.msra.mxu0 0.0
    %2817 = vmatpush.msra.mxu0 0.0
    %2818 = vmatpush.msra.mxu0 0.0
    %2819 = vmatpush.msra.mxu0 0.0
    %2820 = vmatpush.msra.mxu0 0.0
    %2821 = vmatpush.msra.mxu0 0.0
    %2822 = vmatpush.msra.mxu0 0.0
    %2823 = vmatpush.msra.mxu0 0.0
    %2824 = vmatpush.msra.mxu0 0.0
    %2825 = vmatpush.msra.mxu0 %v2805
    %2826 = vmatmul.f32.gmra.mxu0 %v2808
    %v2827 = vpop.f32.mrf.mxu0
    %v2828 = vadd.f32 0.0, %v2827
    %2829 = vdwg.mxu0
    %2831 = vrot.lane.b32.xlu0 %v2178, 64
    %v2832 = vpop.permute.xlu0 %2831
    %v2835 = vsel %vm125, %v2802, 0
    %v2838 = vsel %vm125, %v2828, 0
    %2840 = vmatpush.msra.mxu0 0.0
    %2841 = vmatpush.msra.mxu0 0.0
    %2842 = vmatpush.msra.mxu0 0.0
    %2843 = vmatpush.msra.mxu0 0.0
    %2844 = vmatpush.msra.mxu0 0.0
    %2845 = vmatpush.msra.mxu0 0.0
    %2846 = vmatpush.msra.mxu0 0.0
    %2847 = vmatpush.msra.mxu0 0.0
    %2848 = vmatpush.msra.mxu0 0.0
    %2849 = vmatpush.msra.mxu0 0.0
    %2850 = vmatpush.msra.mxu0 0.0
    %2851 = vmatpush.msra.mxu0 0.0
    %2852 = vmatpush.msra.mxu0 0.0
    %2853 = vmatpush.msra.mxu0 0.0
    %2854 = vmatpush.msra.mxu0 0.0
    %2855 = vmatpush.msra.mxu0 %v2832
    %2856 = vmatmul.f32.gmra.mxu0 %v2835
    %v2857 = vpop.f32.mrf.mxu0
    %v2858 = vadd.f32 0.0, %v2857
    %2859 = vmatmul.f32.gmra.mxu0 %v2838
    %v2860 = vpop.f32.mrf.mxu0
    %v2861 = vadd.f32 0.0, %v2860
    %2862 = vdwg.mxu0
    %2865 = vrot.lane.b32.xlu0 %v2858, 32
    %v2866 = vpop.permute.xlu0 %2865
    %2867 = vrot.lane.b32.xlu0 %v2861, 32
    %v2868 = vpop.permute.xlu0 %2867
    %v2871 = vadd.f32 %v2754, %v2866
    %v2872 = vadd.f32 %v2755, %v2868
    %2875 = vrot.lane.b32.xlu0 %v2871, 96
    %v2876 = vpop.permute.xlu0 %2875
    %2877 = vrot.lane.b32.xlu0 %v2872, 96
    %v2878 = vpop.permute.xlu0 %2877
    %v2881 = vadd.f32 %v2129, %v2876
    %v2882 = vadd.f32 %v2130, %v2878
    %v2883 = vsel %vm43, %v2881, 0.0
    %2884 = vadd.xlane.f32.xlu0 %v2883
    %v2885 = vpop.xlane.xlu0 %2884
    %v2886 = vsel %vm43, %v2882, 0.0
    %2887 = vadd.xlane.f32.xlu0 %v2886
    %v2888 = vpop.xlane.xlu0 %2887
    %v2889 = vmul.f32 %v2885, %v838
    %v2890 = vmul.f32 %v2888, %v838
    %v2891 = vsub.f32 %v2881, %v2889
    %v2892 = vsub.f32 %v2882, %v2890
    %v2893 = vmul.f32 %v2891, %v2891
    %v2894 = vmul.f32 %v2892, %v2892
    %v2895 = vsel %vm43, %v2893, 0.0
    %2896 = vadd.xlane.f32.xlu0 %v2895
    %v2897 = vpop.xlane.xlu0 %2896
    %v2898 = vsel %vm43, %v2894, 0.0
    %2899 = vadd.xlane.f32.xlu0 %v2898
    %v2900 = vpop.xlane.xlu0 %2899
    %v2901 = vmul.f32 %v2897, %v838
    %v2902 = vmul.f32 %v2900, %v838
    %v2903 = vadd.f32 %v2901, 1e-05
    %v2904 = vadd.f32 %v2902, 1e-05
    %v2905 = vrsqrt.pop %v2903
    %v2906 = vmul.f32 %v2905, %v2903
    %v2907 = vmul.f32 %v2906, %v2905
    %v2908 = vmul.f32 0.5, %v2907
    %v2909 = vsub.f32 1.5, %v2908
    %v2910 = vmul.f32 %v2905, %v2909
    %vm2911 = vweird.f32 %v2903
    %vm2912 = vweird.f32 %v2905
    %vm2913 = vmor %vm2911, %vm2912
    %v2914 = vsel %vm2913, %v2905, %v2910
    %v2915 = vrsqrt.pop %v2904
    %v2916 = vmul.f32 %v2915, %v2904
    %v2917 = vmul.f32 %v2916, %v2915
    %v2918 = vmul.f32 0.5, %v2917
    %v2919 = vsub.f32 1.5, %v2918
    %v2920 = vmul.f32 %v2915, %v2919
    %vm2921 = vweird.f32 %v2904
    %vm2922 = vweird.f32 %v2915
    %vm2923 = vmor %vm2921, %vm2922
    %v2924 = vsel %vm2923, %v2915, %v2920
    %v2925 = vmul.f32 %v2891, %v2914
    %v2926 = vmul.f32 %v2892, %v2924
    %v2928 = vperm.slane %v2131, 0
    %v2930 = vmul.f32 %v2925, %v2928
    %v2931 = vmul.f32 %v2926, %v2928
    %2932 = vrot.lane.b32.xlu0 %v2928, 96
    %v2933 = vpop.permute.xlu0 %2932
    %v2935 = vadd.f32 %v2930, %v2933
    %v2936 = vadd.f32 %v2931, %v2933
    %v2937 = vld [vmem:[%s3 + $0x18] sm:$0xff]
    %v2938 = vld [vmem:[%s3 + $0x48] sm:$0xff]
    %v2939 = vld [vmem:[%s3 + $0x78] sm:$0xff]
    %v2940 = vld [vmem:[%s3 + $0xa8] sm:$0xff]
    %v2941 = vld [vmem:[%s5 + $0x4] sm:$0x1]
    %v2943 = vperm.slane %v2941, 0
    %2948 = vrot.lane.b32.xlu0 %v2937, 32
    %v2949 = vpop.permute.xlu0 %2948
    %2950 = vrot.lane.b32.xlu0 %v2938, 32
    %v2951 = vpop.permute.xlu0 %2950
    %2952 = vrot.lane.b32.xlu0 %v2939, 32
    %v2953 = vpop.permute.xlu0 %2952
    %2954 = vrot.lane.b32.xlu0 %v2940, 32
    %v2955 = vpop.permute.xlu0 %2954
    %2960 = vrot.lane.b32.xlu0 %v2943, 64
    %v2961 = vpop.permute.xlu0 %2960
    %v2964 = vsel %vm43, %v2935, 0
    %v2967 = vsel %vm43, %v2936, 0
    %2969 = vmatpush.msra.mxu0 0.0
    %2970 = vmatpush.msra.mxu0 0.0
    %2971 = vmatpush.msra.mxu0 0.0
    %2972 = vmatpush.msra.mxu0 0.0
    %2973 = vmatpush.msra.mxu0 0.0
    %2974 = vmatpush.msra.mxu0 0.0
    %2975 = vmatpush.msra.mxu0 0.0
    %2976 = vmatpush.msra.mxu0 0.0
    %2977 = vmatpush.msra.mxu0 0.0
    %2978 = vmatpush.msra.mxu0 0.0
    %2979 = vmatpush.msra.mxu0 0.0
    %2980 = vmatpush.msra.mxu0 0.0
    %2981 = vmatpush.msra.mxu0 %v2955
    %2982 = vmatpush.msra.mxu0 %v2953
    %2983 = vmatpush.msra.mxu0 %v2951
    %2984 = vmatpush.msra.mxu0 %v2949
    %2985 = vmatmul.f32.gmra.mxu0 %v2964
    %v2986 = vpop.f32.mrf.mxu0
    %v2987 = vadd.f32 %v2961, %v2986
    %2988 = vmatmul.f32.gmra.mxu0 %v2967
    %v2989 = vpop.f32.mrf.mxu0
    %v2990 = vadd.f32 %v2961, %v2989
    %2991 = vdwg.mxu0
    %v2992 = vld [vmem:[%s3 + $0x20] sm:$0xff]
    %v2993 = vld [vmem:[%s3 + $0x50] sm:$0xff]
    %v2994 = vld [vmem:[%s3 + $0x80] sm:$0xff]
    %v2995 = vld [vmem:[%s3 + $0xb0] sm:$0xff]
    %v2996 = vld [vmem:[%s5 + $0x5] sm:$0x1]
    %2997 = vst [vmem:[#allocation1] ss:$4 sm:$0xff] %v71
    %s2998 = scalar_lea.vmem [#allocation1], 1
    %2999 = vst [vmem:[%s2998] ss:$4 sm:$0xff] %v952
    %s3000 = scalar_lea.vmem [#allocation1], 2
    %3001 = vst [vmem:[%s3000] ss:$4 sm:$0xff] %v953
    %s3002 = scalar_lea.vmem [#allocation1], 3
    %3003 = vst [vmem:[%s3002] ss:$4 sm:$0xff] %v954
    %s3004 = scalar_lea.vmem [#allocation1], 32
    %3005 = vst [vmem:[%s3004] ss:$4 sm:$0xff] %v74
    %v3006 = vld.sshfl [vmem:[#allocation1] sm:$0xff pattern:$0x73625140]
    %v3007 = vld.sshfl [vmem:[#allocation1 + $0x20] sm:$0xff pattern:$0x73625140]
    %3008 = vrot.lane.b32.xlu0 %v3006, 64
    %v3009 = vpop.permute.xlu0 %3008
    %3010 = vrot.lane.b32.xlu0 %v3007, 64
    %v3011 = vpop.permute.xlu0 %3010
    %v3013 = vsel %vm125, %v2987, 0
    %v3015 = vsel %vm125, %v3009, 0
    %v3017 = vsel %vm125, %v3011, 0
    %3019 = vmatpush.xpose.msra.mxu0 0.0
    %3020 = vmatpush.xpose.msra.mxu0 0.0
    %3021 = vmatpush.xpose.msra.mxu0 0.0
    %3022 = vmatpush.xpose.msra.mxu0 0.0
    %3023 = vmatpush.xpose.msra.mxu0 0.0
    %3024 = vmatpush.xpose.msra.mxu0 0.0
    %3025 = vmatpush.xpose.msra.mxu0 0.0
    %3026 = vmatpush.xpose.msra.mxu0 0.0
    %3027 = vmatpush.xpose.msra.mxu0 0.0
    %3028 = vmatpush.xpose.msra.mxu0 0.0
    %3029 = vmatpush.xpose.msra.mxu0 0.0
    %3030 = vmatpush.xpose.msra.mxu0 0.0
    %3031 = vmatpush.xpose.msra.mxu0 0.0
    %3032 = vmatpush.xpose.msra.mxu0 0.0
    %3033 = vmatpush.xpose.msra.mxu0 %v3017
    %3034 = vmatpush.xpose.msra.mxu0 %v3015
    %3035 = vmatmul.f32.gmra.mxu0 %v3013
    %v3036 = vpop.f32.mrf.mxu0
    %v3037 = vadd.f32 %v961, %v3036
    %3038 = vdwg.mxu0
    %3039 = vst [vmem:[#allocation1] ss:$4 sm:$0xff] %v955
    %s3040 = scalar_lea.vmem [#allocation1], 1
    %3041 = vst [vmem:[%s3040] ss:$4 sm:$0xff] %v956
    %s3042 = scalar_lea.vmem [#allocation1], 2
    %3043 = vst [vmem:[%s3042] ss:$4 sm:$0xff] %v957
    %s3044 = scalar_lea.vmem [#allocation1], 3
    %3045 = vst [vmem:[%s3044] ss:$4 sm:$0xff] %v77
    %s3046 = scalar_lea.vmem [#allocation1], 32
    %3047 = vst [vmem:[%s3046] ss:$4 sm:$0xff] %v958
    %v3048 = vld.sshfl [vmem:[#allocation1] sm:$0xff pattern:$0x73625140]
    %v3049 = vld.sshfl [vmem:[#allocation1 + $0x20] sm:$0xff pattern:$0x73625140]
    %3050 = vrot.lane.b32.xlu0 %v3048, 64
    %v3051 = vpop.permute.xlu0 %3050
    %3052 = vrot.lane.b32.xlu0 %v3049, 64
    %v3053 = vpop.permute.xlu0 %3052
    %v3055 = vsel %vm125, %v2990, 0
    %v3057 = vsel %vm125, %v3051, 0
    %v3059 = vsel %vm125, %v3053, 0
    %3061 = vmatpush.xpose.msra.mxu0 0.0
    %3062 = vmatpush.xpose.msra.mxu0 0.0
    %3063 = vmatpush.xpose.msra.mxu0 0.0
    %3064 = vmatpush.xpose.msra.mxu0 0.0
    %3065 = vmatpush.xpose.msra.mxu0 0.0
    %3066 = vmatpush.xpose.msra.mxu0 0.0
    %3067 = vmatpush.xpose.msra.mxu0 0.0
    %3068 = vmatpush.xpose.msra.mxu0 0.0
    %3069 = vmatpush.xpose.msra.mxu0 0.0
    %3070 = vmatpush.xpose.msra.mxu0 0.0
    %3071 = vmatpush.xpose.msra.mxu0 0.0
    %3072 = vmatpush.xpose.msra.mxu0 0.0
    %3073 = vmatpush.xpose.msra.mxu0 0.0
    %3074 = vmatpush.xpose.msra.mxu0 0.0
    %3075 = vmatpush.xpose.msra.mxu0 %v3059
    %3076 = vmatpush.xpose.msra.mxu0 %v3057
    %3077 = vmatmul.f32.gmra.mxu0 %v3055
    %v3078 = vpop.f32.mrf.mxu0
    %v3079 = vadd.f32 %v962, %v3078
    %3080 = vdwg.mxu0
    %3081 = vrot.lane.b32.xlu0 %v2987, 120
    %v3082 = vpop.permute.xlu0 %3081
    %3083 = vst [vmem:[#allocation1] ss:$4 sm:$0xff] %v71
    %s3084 = scalar_lea.vmem [#allocation1], 1
    %3085 = vst [vmem:[%s3084] ss:$4 sm:$0xff] %v952
    %s3086 = scalar_lea.vmem [#allocation1], 2
    %3087 = vst [vmem:[%s3086] ss:$4 sm:$0xff] %v953
    %s3088 = scalar_lea.vmem [#allocation1], 3
    %3089 = vst [vmem:[%s3088] ss:$4 sm:$0xff] %v954
    %s3090 = scalar_lea.vmem [#allocation1], 32
    %3091 = vst [vmem:[%s3090] ss:$4 sm:$0xff] %v74
    %v3092 = vld.sshfl [vmem:[#allocation1] sm:$0xff pattern:$0x73625140]
    %v3093 = vld.sshfl [vmem:[#allocation1 + $0x20] sm:$0xff pattern:$0x73625140]
    %3094 = vrot.lane.b32.xlu0 %v3092, 56
    %v3095 = vpop.permute.xlu0 %3094
    %3096 = vrot.lane.b32.xlu0 %v3093, 56
    %v3097 = vpop.permute.xlu0 %3096
    %v3098 = vsel %vm125, %v3082, 0
    %v3100 = vsel %vm125, %v3095, 0
    %v3102 = vsel %vm125, %v3097, 0
    %3104 = vmatpush.xpose.msra.mxu0 0.0
    %3105 = vmatpush.xpose.msra.mxu0 0.0
    %3106 = vmatpush.xpose.msra.mxu0 0.0
    %3107 = vmatpush.xpose.msra.mxu0 0.0
    %3108 = vmatpush.xpose.msra.mxu0 0.0
    %3109 = vmatpush.xpose.msra.mxu0 0.0
    %3110 = vmatpush.xpose.msra.mxu0 0.0
    %3111 = vmatpush.xpose.msra.mxu0 0.0
    %3112 = vmatpush.xpose.msra.mxu0 0.0
    %3113 = vmatpush.xpose.msra.mxu0 0.0
    %3114 = vmatpush.xpose.msra.mxu0 0.0
    %3115 = vmatpush.xpose.msra.mxu0 0.0
    %3116 = vmatpush.xpose.msra.mxu0 0.0
    %3117 = vmatpush.xpose.msra.mxu0 0.0
    %3118 = vmatpush.xpose.msra.mxu0 %v3102
    %3119 = vmatpush.xpose.msra.mxu0 %v3100
    %3120 = vmatmul.f32.gmra.mxu0 %v3098
    %v3121 = vpop.f32.mrf.mxu0
    %v3122 = vadd.f32 %v961, %v3121
    %3123 = vdwg.mxu0
    %3124 = vrot.lane.b32.xlu0 %v2990, 120
    %v3125 = vpop.permute.xlu0 %3124
    %3126 = vst [vmem:[#allocation1] ss:$4 sm:$0xff] %v955
    %s3127 = scalar_lea.vmem [#allocation1], 1
    %3128 = vst [vmem:[%s3127] ss:$4 sm:$0xff] %v956
    %s3129 = scalar_lea.vmem [#allocation1], 2
    %3130 = vst [vmem:[%s3129] ss:$4 sm:$0xff] %v957
    %s3131 = scalar_lea.vmem [#allocation1], 3
    %3132 = vst [vmem:[%s3131] ss:$4 sm:$0xff] %v77
    %s3133 = scalar_lea.vmem [#allocation1], 32
    %3134 = vst [vmem:[%s3133] ss:$4 sm:$0xff] %v958
    %v3135 = vld.sshfl [vmem:[#allocation1] sm:$0xff pattern:$0x73625140]
    %v3136 = vld.sshfl [vmem:[#allocation1 + $0x20] sm:$0xff pattern:$0x73625140]
    %3137 = vrot.lane.b32.xlu0 %v3135, 56
    %v3138 = vpop.permute.xlu0 %3137
    %3139 = vrot.lane.b32.xlu0 %v3136, 56
    %v3140 = vpop.permute.xlu0 %3139
    %v3141 = vsel %vm125, %v3125, 0
    %v3143 = vsel %vm125, %v3138, 0
    %v3145 = vsel %vm125, %v3140, 0
    %3147 = vmatpush.xpose.msra.mxu0 0.0
    %3148 = vmatpush.xpose.msra.mxu0 0.0
    %3149 = vmatpush.xpose.msra.mxu0 0.0
    %3150 = vmatpush.xpose.msra.mxu0 0.0
    %3151 = vmatpush.xpose.msra.mxu0 0.0
    %3152 = vmatpush.xpose.msra.mxu0 0.0
    %3153 = vmatpush.xpose.msra.mxu0 0.0
    %3154 = vmatpush.xpose.msra.mxu0 0.0
    %3155 = vmatpush.xpose.msra.mxu0 0.0
    %3156 = vmatpush.xpose.msra.mxu0 0.0
    %3157 = vmatpush.xpose.msra.mxu0 0.0
    %3158 = vmatpush.xpose.msra.mxu0 0.0
    %3159 = vmatpush.xpose.msra.mxu0 0.0
    %3160 = vmatpush.xpose.msra.mxu0 0.0
    %3161 = vmatpush.xpose.msra.mxu0 %v3145
    %3162 = vmatpush.xpose.msra.mxu0 %v3143
    %3163 = vmatmul.f32.gmra.mxu0 %v3141
    %v3164 = vpop.f32.mrf.mxu0
    %v3165 = vadd.f32 %v962, %v3164
    %3166 = vdwg.mxu0
    %3167 = vrot.lane.b32.xlu0 %v2987, 112
    %v3168 = vpop.permute.xlu0 %3167
    %3169 = vst [vmem:[#allocation1] ss:$4 sm:$0xff] %v71
    %s3170 = scalar_lea.vmem [#allocation1], 1
    %3171 = vst [vmem:[%s3170] ss:$4 sm:$0xff] %v952
    %s3172 = scalar_lea.vmem [#allocation1], 2
    %3173 = vst [vmem:[%s3172] ss:$4 sm:$0xff] %v953
    %s3174 = scalar_lea.vmem [#allocation1], 3
    %3175 = vst [vmem:[%s3174] ss:$4 sm:$0xff] %v954
    %s3176 = scalar_lea.vmem [#allocation1], 32
    %3177 = vst [vmem:[%s3176] ss:$4 sm:$0xff] %v74
    %v3178 = vld.sshfl [vmem:[#allocation1] sm:$0xff pattern:$0x73625140]
    %v3179 = vld.sshfl [vmem:[#allocation1 + $0x20] sm:$0xff pattern:$0x73625140]
    %3180 = vrot.lane.b32.xlu0 %v3178, 48
    %v3181 = vpop.permute.xlu0 %3180
    %3182 = vrot.lane.b32.xlu0 %v3179, 48
    %v3183 = vpop.permute.xlu0 %3182
    %v3184 = vsel %vm125, %v3168, 0
    %v3186 = vsel %vm125, %v3181, 0
    %v3188 = vsel %vm125, %v3183, 0
    %3190 = vmatpush.xpose.msra.mxu0 0.0
    %3191 = vmatpush.xpose.msra.mxu0 0.0
    %3192 = vmatpush.xpose.msra.mxu0 0.0
    %3193 = vmatpush.xpose.msra.mxu0 0.0
    %3194 = vmatpush.xpose.msra.mxu0 0.0
    %3195 = vmatpush.xpose.msra.mxu0 0.0
    %3196 = vmatpush.xpose.msra.mxu0 0.0
    %3197 = vmatpush.xpose.msra.mxu0 0.0
    %3198 = vmatpush.xpose.msra.mxu0 0.0
    %3199 = vmatpush.xpose.msra.mxu0 0.0
    %3200 = vmatpush.xpose.msra.mxu0 0.0
    %3201 = vmatpush.xpose.msra.mxu0 0.0
    %3202 = vmatpush.xpose.msra.mxu0 0.0
    %3203 = vmatpush.xpose.msra.mxu0 0.0
    %3204 = vmatpush.xpose.msra.mxu0 %v3188
    %3205 = vmatpush.xpose.msra.mxu0 %v3186
    %3206 = vmatmul.f32.gmra.mxu0 %v3184
    %v3207 = vpop.f32.mrf.mxu0
    %v3208 = vadd.f32 %v961, %v3207
    %3209 = vdwg.mxu0
    %3210 = vrot.lane.b32.xlu0 %v2990, 112
    %v3211 = vpop.permute.xlu0 %3210
    %3212 = vst [vmem:[#allocation1] ss:$4 sm:$0xff] %v955
    %s3213 = scalar_lea.vmem [#allocation1], 1
    %3214 = vst [vmem:[%s3213] ss:$4 sm:$0xff] %v956
    %s3215 = scalar_lea.vmem [#allocation1], 2
    %3216 = vst [vmem:[%s3215] ss:$4 sm:$0xff] %v957
    %s3217 = scalar_lea.vmem [#allocation1], 3
    %3218 = vst [vmem:[%s3217] ss:$4 sm:$0xff] %v77
    %s3219 = scalar_lea.vmem [#allocation1], 32
    %3220 = vst [vmem:[%s3219] ss:$4 sm:$0xff] %v958
    %v3221 = vld.sshfl [vmem:[#allocation1] sm:$0xff pattern:$0x73625140]
    %v3222 = vld.sshfl [vmem:[#allocation1 + $0x20] sm:$0xff pattern:$0x73625140]
    %3223 = vrot.lane.b32.xlu0 %v3221, 48
    %v3224 = vpop.permute.xlu0 %3223
    %3225 = vrot.lane.b32.xlu0 %v3222, 48
    %v3226 = vpop.permute.xlu0 %3225
    %v3227 = vsel %vm125, %v3211, 0
    %v3229 = vsel %vm125, %v3224, 0
    %v3231 = vsel %vm125, %v3226, 0
    %3233 = vmatpush.xpose.msra.mxu0 0.0
    %3234 = vmatpush.xpose.msra.mxu0 0.0
    %3235 = vmatpush.xpose.msra.mxu0 0.0
    %3236 = vmatpush.xpose.msra.mxu0 0.0
    %3237 = vmatpush.xpose.msra.mxu0 0.0
    %3238 = vmatpush.xpose.msra.mxu0 0.0
    %3239 = vmatpush.xpose.msra.mxu0 0.0
    %3240 = vmatpush.xpose.msra.mxu0 0.0
    %3241 = vmatpush.xpose.msra.mxu0 0.0
    %3242 = vmatpush.xpose.msra.mxu0 0.0
    %3243 = vmatpush.xpose.msra.mxu0 0.0
    %3244 = vmatpush.xpose.msra.mxu0 0.0
    %3245 = vmatpush.xpose.msra.mxu0 0.0
    %3246 = vmatpush.xpose.msra.mxu0 0.0
    %3247 = vmatpush.xpose.msra.mxu0 %v3231
    %3248 = vmatpush.xpose.msra.mxu0 %v3229
    %3249 = vmatmul.f32.gmra.mxu0 %v3227
    %v3250 = vpop.f32.mrf.mxu0
    %v3251 = vadd.f32 %v962, %v3250
    %3252 = vdwg.mxu0
    %3253 = vrot.lane.b32.xlu0 %v2987, 104
    %v3254 = vpop.permute.xlu0 %3253
    %3255 = vst [vmem:[#allocation1] ss:$4 sm:$0xff] %v71
    %s3256 = scalar_lea.vmem [#allocation1], 1
    %3257 = vst [vmem:[%s3256] ss:$4 sm:$0xff] %v952
    %s3258 = scalar_lea.vmem [#allocation1], 2
    %3259 = vst [vmem:[%s3258] ss:$4 sm:$0xff] %v953
    %s3260 = scalar_lea.vmem [#allocation1], 3
    %3261 = vst [vmem:[%s3260] ss:$4 sm:$0xff] %v954
    %s3262 = scalar_lea.vmem [#allocation1], 32
    %3263 = vst [vmem:[%s3262] ss:$4 sm:$0xff] %v74
    %v3264 = vld.sshfl [vmem:[#allocation1] sm:$0xff pattern:$0x73625140]
    %v3265 = vld.sshfl [vmem:[#allocation1 + $0x20] sm:$0xff pattern:$0x73625140]
    %3266 = vrot.lane.b32.xlu0 %v3264, 40
    %v3267 = vpop.permute.xlu0 %3266
    %3268 = vrot.lane.b32.xlu0 %v3265, 40
    %v3269 = vpop.permute.xlu0 %3268
    %v3270 = vsel %vm125, %v3254, 0
    %v3272 = vsel %vm125, %v3267, 0
    %v3274 = vsel %vm125, %v3269, 0
    %3276 = vmatpush.xpose.msra.mxu0 0.0
    %3277 = vmatpush.xpose.msra.mxu0 0.0
    %3278 = vmatpush.xpose.msra.mxu0 0.0
    %3279 = vmatpush.xpose.msra.mxu0 0.0
    %3280 = vmatpush.xpose.msra.mxu0 0.0
    %3281 = vmatpush.xpose.msra.mxu0 0.0
    %3282 = vmatpush.xpose.msra.mxu0 0.0
    %3283 = vmatpush.xpose.msra.mxu0 0.0
    %3284 = vmatpush.xpose.msra.mxu0 0.0
    %3285 = vmatpush.xpose.msra.mxu0 0.0
    %3286 = vmatpush.xpose.msra.mxu0 0.0
    %3287 = vmatpush.xpose.msra.mxu0 0.0
    %3288 = vmatpush.xpose.msra.mxu0 0.0
    %3289 = vmatpush.xpose.msra.mxu0 0.0
    %3290 = vmatpush.xpose.msra.mxu0 %v3274
    %3291 = vmatpush.xpose.msra.mxu0 %v3272
    %3292 = vmatmul.f32.gmra.mxu0 %v3270
    %v3293 = vpop.f32.mrf.mxu0
    %v3294 = vadd.f32 %v961, %v3293
    %3295 = vdwg.mxu0
    %3296 = vrot.lane.b32.xlu0 %v2990, 104
    %v3297 = vpop.permute.xlu0 %3296
    %3298 = vst [vmem:[#allocation1] ss:$4 sm:$0xff] %v955
    %s3299 = scalar_lea.vmem [#allocation1], 1
    %3300 = vst [vmem:[%s3299] ss:$4 sm:$0xff] %v956
    %s3301 = scalar_lea.vmem [#allocation1], 2
    %3302 = vst [vmem:[%s3301] ss:$4 sm:$0xff] %v957
    %s3303 = scalar_lea.vmem [#allocation1], 3
    %3304 = vst [vmem:[%s3303] ss:$4 sm:$0xff] %v77
    %s3305 = scalar_lea.vmem [#allocation1], 32
    %3306 = vst [vmem:[%s3305] ss:$4 sm:$0xff] %v958
    %v3307 = vld.sshfl [vmem:[#allocation1] sm:$0xff pattern:$0x73625140]
    %v3308 = vld.sshfl [vmem:[#allocation1 + $0x20] sm:$0xff pattern:$0x73625140]
    %3309 = vrot.lane.b32.xlu0 %v3307, 40
    %v3310 = vpop.permute.xlu0 %3309
    %3311 = vrot.lane.b32.xlu0 %v3308, 40
    %v3312 = vpop.permute.xlu0 %3311
    %v3313 = vsel %vm125, %v3297, 0
    %v3315 = vsel %vm125, %v3310, 0
    %v3317 = vsel %vm125, %v3312, 0
    %3319 = vmatpush.xpose.msra.mxu0 0.0
    %3320 = vmatpush.xpose.msra.mxu0 0.0
    %3321 = vmatpush.xpose.msra.mxu0 0.0
    %3322 = vmatpush.xpose.msra.mxu0 0.0
    %3323 = vmatpush.xpose.msra.mxu0 0.0
    %3324 = vmatpush.xpose.msra.mxu0 0.0
    %3325 = vmatpush.xpose.msra.mxu0 0.0
    %3326 = vmatpush.xpose.msra.mxu0 0.0
    %3327 = vmatpush.xpose.msra.mxu0 0.0
    %3328 = vmatpush.xpose.msra.mxu0 0.0
    %3329 = vmatpush.xpose.msra.mxu0 0.0
    %3330 = vmatpush.xpose.msra.mxu0 0.0
    %3331 = vmatpush.xpose.msra.mxu0 0.0
    %3332 = vmatpush.xpose.msra.mxu0 0.0
    %3333 = vmatpush.xpose.msra.mxu0 %v3317
    %3334 = vmatpush.xpose.msra.mxu0 %v3315
    %3335 = vmatmul.f32.gmra.mxu0 %v3313
    %v3336 = vpop.f32.mrf.mxu0
    %v3337 = vadd.f32 %v962, %v3336
    %3338 = vdwg.mxu0
    %v3339 = vsel %vm1299, %v3037, -inf
    %3340 = vmax.xlane.f32.xlu0 %v3339
    %v3341 = vpop.xlane.xlu0 %3340
    %v3342 = vsel %vm1299, %v3079, -inf
    %3343 = vmax.xlane.f32.xlu0 %v3342
    %v3344 = vpop.xlane.xlu0 %3343
    %v3345 = vsub.f32 %v3037, %v3341
    %v3346 = vsub.f32 %v3079, %v3344
    %v3347 = vmul.f32 %v3345, 1.442695
    %v3348 = vpow.pop %v3347
    %v3349 = vmul.f32 %v3346, 1.442695
    %v3350 = vpow.pop %v3349
    %v3351 = vsel %vm1299, %v3348, 0.0
    %3352 = vadd.xlane.f32.xlu0 %v3351
    %v3353 = vpop.xlane.xlu0 %3352
    %v3354 = vsel %vm1299, %v3350, 0.0
    %3355 = vadd.xlane.f32.xlu0 %v3354
    %v3356 = vpop.xlane.xlu0 %3355
    %v3357 = vrcp.pop %v3353
    %v3358 = vrcp.pop %v3356
    %v3359 = vmul.f32 %v3348, %v3357
    %v3360 = vmul.f32 %v3350, %v3358
    %3361 = vst.msk [vmem:[#allocation2] sm:$0xff] %vm1299, %v3359
    %3362 = vst.msk [vmem:[#allocation2 + $0x20] sm:$0xff] %vm1299, %v3360
    %3363 = vst [vmem:[#allocation1] ss:$4 sm:$0xff] %v71
    %s3364 = scalar_lea.vmem [#allocation1], 1
    %3365 = vst [vmem:[%s3364] ss:$4 sm:$0xff] %v952
    %s3366 = scalar_lea.vmem [#allocation1], 2
    %3367 = vst [vmem:[%s3366] ss:$4 sm:$0xff] %v953
    %s3368 = scalar_lea.vmem [#allocation1], 3
    %3369 = vst [vmem:[%s3368] ss:$4 sm:$0xff] %v954
    %s3370 = scalar_lea.vmem [#allocation1], 32
    %3371 = vst [vmem:[%s3370] ss:$4 sm:$0xff] %v74
    %v3372 = vld.sshfl [vmem:[#allocation1] sm:$0xff pattern:$0x73625140]
    %v3373 = vld.sshfl [vmem:[#allocation1 + $0x20] sm:$0xff pattern:$0x73625140]
    %3374 = vrot.lane.b32.xlu0 %v3372, 32
    %v3375 = vpop.permute.xlu0 %3374
    %3376 = vrot.lane.b32.xlu0 %v3373, 32
    %v3377 = vpop.permute.xlu0 %3376
    %v3380 = vsel %vm1299, %v3359, 0
    %v3382 = vsel %vm1341, %v3377, 0
    %3384 = vmatpush.msra.mxu0 0.0
    %3385 = vmatpush.msra.mxu0 0.0
    %3386 = vmatpush.msra.mxu0 0.0
    %3387 = vmatpush.msra.mxu0 0.0
    %3388 = vmatpush.msra.mxu0 0.0
    %3389 = vmatpush.msra.mxu0 0.0
    %3390 = vmatpush.msra.mxu0 0.0
    %3391 = vmatpush.msra.mxu0 0.0
    %3392 = vmatpush.msra.mxu0 0.0
    %3393 = vmatpush.msra.mxu0 0.0
    %3394 = vmatpush.msra.mxu0 0.0
    %3395 = vmatpush.msra.mxu0 0.0
    %3396 = vmatpush.msra.mxu0 0.0
    %3397 = vmatpush.msra.mxu0 0.0
    %3398 = vmatpush.msra.mxu0 %v3382
    %3399 = vmatpush.msra.mxu0 %v3375
    %3400 = vmatmul.f32.gmra.mxu0 %v3380
    %v3401 = vpop.f32.mrf.mxu0
    %v3402 = vadd.f32 0.0, %v3401
    %3403 = vdwg.mxu0
    %3404 = vst [vmem:[#allocation1] ss:$4 sm:$0xff] %v955
    %s3405 = scalar_lea.vmem [#allocation1], 1
    %3406 = vst [vmem:[%s3405] ss:$4 sm:$0xff] %v956
    %s3407 = scalar_lea.vmem [#allocation1], 2
    %3408 = vst [vmem:[%s3407] ss:$4 sm:$0xff] %v957
    %s3409 = scalar_lea.vmem [#allocation1], 3
    %3410 = vst [vmem:[%s3409] ss:$4 sm:$0xff] %v77
    %s3411 = scalar_lea.vmem [#allocation1], 32
    %3412 = vst [vmem:[%s3411] ss:$4 sm:$0xff] %v958
    %v3413 = vld.sshfl [vmem:[#allocation1] sm:$0xff pattern:$0x73625140]
    %v3414 = vld.sshfl [vmem:[#allocation1 + $0x20] sm:$0xff pattern:$0x73625140]
    %3415 = vrot.lane.b32.xlu0 %v3413, 32
    %v3416 = vpop.permute.xlu0 %3415
    %3417 = vrot.lane.b32.xlu0 %v3414, 32
    %v3418 = vpop.permute.xlu0 %3417
    %v3421 = vsel %vm1299, %v3360, 0
    %v3423 = vsel %vm1341, %v3418, 0
    %3425 = vmatpush.msra.mxu0 0.0
    %3426 = vmatpush.msra.mxu0 0.0
    %3427 = vmatpush.msra.mxu0 0.0
    %3428 = vmatpush.msra.mxu0 0.0
    %3429 = vmatpush.msra.mxu0 0.0
    %3430 = vmatpush.msra.mxu0 0.0
    %3431 = vmatpush.msra.mxu0 0.0
    %3432 = vmatpush.msra.mxu0 0.0
    %3433 = vmatpush.msra.mxu0 0.0
    %3434 = vmatpush.msra.mxu0 0.0
    %3435 = vmatpush.msra.mxu0 0.0
    %3436 = vmatpush.msra.mxu0 0.0
    %3437 = vmatpush.msra.mxu0 0.0
    %3438 = vmatpush.msra.mxu0 0.0
    %3439 = vmatpush.msra.mxu0 %v3423
    %3440 = vmatpush.msra.mxu0 %v3416
    %3441 = vmatmul.f32.gmra.mxu0 %v3421
    %v3442 = vpop.f32.mrf.mxu0
    %v3443 = vadd.f32 0.0, %v3442
    %3444 = vdwg.mxu0
    %3446 = vrot.lane.b32.xlu0 %v2992, 32
    %v3447 = vpop.permute.xlu0 %3446
    %v3450 = vsel %vm125, %v3402, 0
    %v3453 = vsel %vm125, %v3443, 0
    %3455 = vmatpush.msra.mxu0 0.0
    %3456 = vmatpush.msra.mxu0 0.0
    %3457 = vmatpush.msra.mxu0 0.0
    %3458 = vmatpush.msra.mxu0 0.0
    %3459 = vmatpush.msra.mxu0 0.0
    %3460 = vmatpush.msra.mxu0 0.0
    %3461 = vmatpush.msra.mxu0 0.0
    %3462 = vmatpush.msra.mxu0 0.0
    %3463 = vmatpush.msra.mxu0 0.0
    %3464 = vmatpush.msra.mxu0 0.0
    %3465 = vmatpush.msra.mxu0 0.0
    %3466 = vmatpush.msra.mxu0 0.0
    %3467 = vmatpush.msra.mxu0 0.0
    %3468 = vmatpush.msra.mxu0 0.0
    %3469 = vmatpush.msra.mxu0 0.0
    %3470 = vmatpush.msra.mxu0 %v3447
    %3471 = vmatmul.f32.gmra.mxu0 %v3450
    %v3472 = vpop.f32.mrf.mxu0
    %v3473 = vadd.f32 0.0, %v3472
    %3474 = vmatmul.f32.gmra.mxu0 %v3453
    %v3475 = vpop.f32.mrf.mxu0
    %v3476 = vadd.f32 0.0, %v3475
    %3477 = vdwg.mxu0
    %v3479 = vperm.slane %v2996, 0
    %3483 = vrot.lane.b32.xlu0 %v3473, 64
    %v3484 = vpop.permute.xlu0 %3483
    %3485 = vrot.lane.b32.xlu0 %v3476, 64
    %v3486 = vpop.permute.xlu0 %3485
    %v3489 = vadd.f32 %v3479, %v3484
    %v3490 = vadd.f32 %v3479, %v3486
    %v3491 = vsel %vm1299, %v3122, -inf
    %3492 = vmax.xlane.f32.xlu0 %v3491
    %v3493 = vpop.xlane.xlu0 %3492
    %v3494 = vsel %vm1299, %v3165, -inf
    %3495 = vmax.xlane.f32.xlu0 %v3494
    %v3496 = vpop.xlane.xlu0 %3495
    %v3497 = vsub.f32 %v3122, %v3493
    %v3498 = vsub.f32 %v3165, %v3496
    %v3499 = vmul.f32 %v3497, 1.442695
    %v3500 = vpow.pop %v3499
    %v3501 = vmul.f32 %v3498, 1.442695
    %v3502 = vpow.pop %v3501
    %v3503 = vsel %vm1299, %v3500, 0.0
    %3504 = vadd.xlane.f32.xlu0 %v3503
    %v3505 = vpop.xlane.xlu0 %3504
    %v3506 = vsel %vm1299, %v3502, 0.0
    %3507 = vadd.xlane.f32.xlu0 %v3506
    %v3508 = vpop.xlane.xlu0 %3507
    %v3509 = vrcp.pop %v3505
    %v3510 = vrcp.pop %v3508
    %v3511 = vmul.f32 %v3500, %v3509
    %v3512 = vmul.f32 %v3502, %v3510
    %s3513 = scalar_lea.vmem [#allocation2], 8
    %3514 = vst.msk [vmem:[%s3513] sm:$0xff] %vm1299, %v3511
    %3515 = vst.msk [vmem:[%s3513 + $0x20] sm:$0xff] %vm1299, %v3512
    %3516 = vst [vmem:[#allocation1] ss:$4 sm:$0xff] %v71
    %s3517 = scalar_lea.vmem [#allocation1], 1
    %3518 = vst [vmem:[%s3517] ss:$4 sm:$0xff] %v952
    %s3519 = scalar_lea.vmem [#allocation1], 2
    %3520 = vst [vmem:[%s3519] ss:$4 sm:$0xff] %v953
    %s3521 = scalar_lea.vmem [#allocation1], 3
    %3522 = vst [vmem:[%s3521] ss:$4 sm:$0xff] %v954
    %s3523 = scalar_lea.vmem [#allocation1], 32
    %3524 = vst [vmem:[%s3523] ss:$4 sm:$0xff] %v74
    %v3525 = vld.sshfl [vmem:[#allocation1] sm:$0xff pattern:$0x73625140]
    %v3526 = vld.sshfl [vmem:[#allocation1 + $0x20] sm:$0xff pattern:$0x73625140]
    %3527 = vrot.lane.b32.xlu0 %v3525, 24
    %v3528 = vpop.permute.xlu0 %3527
    %3529 = vrot.lane.b32.xlu0 %v3526, 24
    %v3530 = vpop.permute.xlu0 %3529
    %v3533 = vsel %vm1299, %v3511, 0
    %v3535 = vsel %vm1341, %v3530, 0
    %3537 = vmatpush.msra.mxu0 0.0
    %3538 = vmatpush.msra.mxu0 0.0
    %3539 = vmatpush.msra.mxu0 0.0
    %3540 = vmatpush.msra.mxu0 0.0
    %3541 = vmatpush.msra.mxu0 0.0
    %3542 = vmatpush.msra.mxu0 0.0
    %3543 = vmatpush.msra.mxu0 0.0
    %3544 = vmatpush.msra.mxu0 0.0
    %3545 = vmatpush.msra.mxu0 0.0
    %3546 = vmatpush.msra.mxu0 0.0
    %3547 = vmatpush.msra.mxu0 0.0
    %3548 = vmatpush.msra.mxu0 0.0
    %3549 = vmatpush.msra.mxu0 0.0
    %3550 = vmatpush.msra.mxu0 0.0
    %3551 = vmatpush.msra.mxu0 %v3535
    %3552 = vmatpush.msra.mxu0 %v3528
    %3553 = vmatmul.f32.gmra.mxu0 %v3533
    %v3554 = vpop.f32.mrf.mxu0
    %v3555 = vadd.f32 0.0, %v3554
    %3556 = vdwg.mxu0
    %3557 = vst [vmem:[#allocation1] ss:$4 sm:$0xff] %v955
    %s3558 = scalar_lea.vmem [#allocation1], 1
    %3559 = vst [vmem:[%s3558] ss:$4 sm:$0xff] %v956
    %s3560 = scalar_lea.vmem [#allocation1], 2
    %3561 = vst [vmem:[%s3560] ss:$4 sm:$0xff] %v957
    %s3562 = scalar_lea.vmem [#allocation1], 3
    %3563 = vst [vmem:[%s3562] ss:$4 sm:$0xff] %v77
    %s3564 = scalar_lea.vmem [#allocation1], 32
    %3565 = vst [vmem:[%s3564] ss:$4 sm:$0xff] %v958
    %v3566 = vld.sshfl [vmem:[#allocation1] sm:$0xff pattern:$0x73625140]
    %v3567 = vld.sshfl [vmem:[#allocation1 + $0x20] sm:$0xff pattern:$0x73625140]
    %3568 = vrot.lane.b32.xlu0 %v3566, 24
    %v3569 = vpop.permute.xlu0 %3568
    %3570 = vrot.lane.b32.xlu0 %v3567, 24
    %v3571 = vpop.permute.xlu0 %3570
    %v3574 = vsel %vm1299, %v3512, 0
    %v3576 = vsel %vm1341, %v3571, 0
    %3578 = vmatpush.msra.mxu0 0.0
    %3579 = vmatpush.msra.mxu0 0.0
    %3580 = vmatpush.msra.mxu0 0.0
    %3581 = vmatpush.msra.mxu0 0.0
    %3582 = vmatpush.msra.mxu0 0.0
    %3583 = vmatpush.msra.mxu0 0.0
    %3584 = vmatpush.msra.mxu0 0.0
    %3585 = vmatpush.msra.mxu0 0.0
    %3586 = vmatpush.msra.mxu0 0.0
    %3587 = vmatpush.msra.mxu0 0.0
    %3588 = vmatpush.msra.mxu0 0.0
    %3589 = vmatpush.msra.mxu0 0.0
    %3590 = vmatpush.msra.mxu0 0.0
    %3591 = vmatpush.msra.mxu0 0.0
    %3592 = vmatpush.msra.mxu0 %v3576
    %3593 = vmatpush.msra.mxu0 %v3569
    %3594 = vmatmul.f32.gmra.mxu0 %v3574
    %v3595 = vpop.f32.mrf.mxu0
    %v3596 = vadd.f32 0.0, %v3595
    %3597 = vdwg.mxu0
    %3599 = vrot.lane.b32.xlu0 %v2993, 32
    %v3600 = vpop.permute.xlu0 %3599
    %v3603 = vsel %vm125, %v3555, 0
    %v3606 = vsel %vm125, %v3596, 0
    %3608 = vmatpush.msra.mxu0 0.0
    %3609 = vmatpush.msra.mxu0 0.0
    %3610 = vmatpush.msra.mxu0 0.0
    %3611 = vmatpush.msra.mxu0 0.0
    %3612 = vmatpush.msra.mxu0 0.0
    %3613 = vmatpush.msra.mxu0 0.0
    %3614 = vmatpush.msra.mxu0 0.0
    %3615 = vmatpush.msra.mxu0 0.0
    %3616 = vmatpush.msra.mxu0 0.0
    %3617 = vmatpush.msra.mxu0 0.0
    %3618 = vmatpush.msra.mxu0 0.0
    %3619 = vmatpush.msra.mxu0 0.0
    %3620 = vmatpush.msra.mxu0 0.0
    %3621 = vmatpush.msra.mxu0 0.0
    %3622 = vmatpush.msra.mxu0 0.0
    %3623 = vmatpush.msra.mxu0 %v3600
    %3624 = vmatmul.f32.gmra.mxu0 %v3603
    %v3625 = vpop.f32.mrf.mxu0
    %v3626 = vadd.f32 0.0, %v3625
    %3627 = vmatmul.f32.gmra.mxu0 %v3606
    %v3628 = vpop.f32.mrf.mxu0
    %v3629 = vadd.f32 0.0, %v3628
    %3630 = vdwg.mxu0
    %3633 = vrot.lane.b32.xlu0 %v3626, 64
    %v3634 = vpop.permute.xlu0 %3633
    %3635 = vrot.lane.b32.xlu0 %v3629, 64
    %v3636 = vpop.permute.xlu0 %3635
    %v3639 = vadd.f32 %v3489, %v3634
    %v3640 = vadd.f32 %v3490, %v3636
    %v3641 = vsel %vm1299, %v3208, -inf
    %3642 = vmax.xlane.f32.xlu0 %v3641
    %v3643 = vpop.xlane.xlu0 %3642
    %v3644 = vsel %vm1299, %v3251, -inf
    %3645 = vmax.xlane.f32.xlu0 %v3644
    %v3646 = vpop.xlane.xlu0 %3645
    %v3647 = vsub.f32 %v3208, %v3643
    %v3648 = vsub.f32 %v3251, %v3646
    %v3649 = vmul.f32 %v3647, 1.442695
    %v3650 = vpow.pop %v3649
    %v3651 = vmul.f32 %v3648, 1.442695
    %v3652 = vpow.pop %v3651
    %v3653 = vsel %vm1299, %v3650, 0.0
    %3654 = vadd.xlane.f32.xlu0 %v3653
    %v3655 = vpop.xlane.xlu0 %3654
    %v3656 = vsel %vm1299, %v3652, 0.0
    %3657 = vadd.xlane.f32.xlu0 %v3656
    %v3658 = vpop.xlane.xlu0 %3657
    %v3659 = vrcp.pop %v3655
    %v3660 = vrcp.pop %v3658
    %v3661 = vmul.f32 %v3650, %v3659
    %v3662 = vmul.f32 %v3652, %v3660
    %s3663 = scalar_lea.vmem [#allocation2], 16
    %3664 = vst.msk [vmem:[%s3663] sm:$0xff] %vm1299, %v3661
    %3665 = vst.msk [vmem:[%s3663 + $0x20] sm:$0xff] %vm1299, %v3662
    %3666 = vst [vmem:[#allocation1] ss:$4 sm:$0xff] %v71
    %s3667 = scalar_lea.vmem [#allocation1], 1
    %3668 = vst [vmem:[%s3667] ss:$4 sm:$0xff] %v952
    %s3669 = scalar_lea.vmem [#allocation1], 2
    %3670 = vst [vmem:[%s3669] ss:$4 sm:$0xff] %v953
    %s3671 = scalar_lea.vmem [#allocation1], 3
    %3672 = vst [vmem:[%s3671] ss:$4 sm:$0xff] %v954
    %s3673 = scalar_lea.vmem [#allocation1], 32
    %3674 = vst [vmem:[%s3673] ss:$4 sm:$0xff] %v74
    %v3675 = vld.sshfl [vmem:[#allocation1] sm:$0xff pattern:$0x73625140]
    %v3676 = vld.sshfl [vmem:[#allocation1 + $0x20] sm:$0xff pattern:$0x73625140]
    %3677 = vrot.lane.b32.xlu0 %v3675, 16
    %v3678 = vpop.permute.xlu0 %3677
    %3679 = vrot.lane.b32.xlu0 %v3676, 16
    %v3680 = vpop.permute.xlu0 %3679
    %v3683 = vsel %vm1299, %v3661, 0
    %v3685 = vsel %vm1341, %v3680, 0
    %3687 = vmatpush.msra.mxu0 0.0
    %3688 = vmatpush.msra.mxu0 0.0
    %3689 = vmatpush.msra.mxu0 0.0
    %3690 = vmatpush.msra.mxu0 0.0
    %3691 = vmatpush.msra.mxu0 0.0
    %3692 = vmatpush.msra.mxu0 0.0
    %3693 = vmatpush.msra.mxu0 0.0
    %3694 = vmatpush.msra.mxu0 0.0
    %3695 = vmatpush.msra.mxu0 0.0
    %3696 = vmatpush.msra.mxu0 0.0
    %3697 = vmatpush.msra.mxu0 0.0
    %3698 = vmatpush.msra.mxu0 0.0
    %3699 = vmatpush.msra.mxu0 0.0
    %3700 = vmatpush.msra.mxu0 0.0
    %3701 = vmatpush.msra.mxu0 %v3685
    %3702 = vmatpush.msra.mxu0 %v3678
    %3703 = vmatmul.f32.gmra.mxu0 %v3683
    %v3704 = vpop.f32.mrf.mxu0
    %v3705 = vadd.f32 0.0, %v3704
    %3706 = vdwg.mxu0
    %3707 = vst [vmem:[#allocation1] ss:$4 sm:$0xff] %v955
    %s3708 = scalar_lea.vmem [#allocation1], 1
    %3709 = vst [vmem:[%s3708] ss:$4 sm:$0xff] %v956
    %s3710 = scalar_lea.vmem [#allocation1], 2
    %3711 = vst [vmem:[%s3710] ss:$4 sm:$0xff] %v957
    %s3712 = scalar_lea.vmem [#allocation1], 3
    %3713 = vst [vmem:[%s3712] ss:$4 sm:$0xff] %v77
    %s3714 = scalar_lea.vmem [#allocation1], 32
    %3715 = vst [vmem:[%s3714] ss:$4 sm:$0xff] %v958
    %v3716 = vld.sshfl [vmem:[#allocation1] sm:$0xff pattern:$0x73625140]
    %v3717 = vld.sshfl [vmem:[#allocation1 + $0x20] sm:$0xff pattern:$0x73625140]
    %3718 = vrot.lane.b32.xlu0 %v3716, 16
    %v3719 = vpop.permute.xlu0 %3718
    %3720 = vrot.lane.b32.xlu0 %v3717, 16
    %v3721 = vpop.permute.xlu0 %3720
    %v3724 = vsel %vm1299, %v3662, 0
    %v3726 = vsel %vm1341, %v3721, 0
    %3728 = vmatpush.msra.mxu0 0.0
    %3729 = vmatpush.msra.mxu0 0.0
    %3730 = vmatpush.msra.mxu0 0.0
    %3731 = vmatpush.msra.mxu0 0.0
    %3732 = vmatpush.msra.mxu0 0.0
    %3733 = vmatpush.msra.mxu0 0.0
    %3734 = vmatpush.msra.mxu0 0.0
    %3735 = vmatpush.msra.mxu0 0.0
    %3736 = vmatpush.msra.mxu0 0.0
    %3737 = vmatpush.msra.mxu0 0.0
    %3738 = vmatpush.msra.mxu0 0.0
    %3739 = vmatpush.msra.mxu0 0.0
    %3740 = vmatpush.msra.mxu0 0.0
    %3741 = vmatpush.msra.mxu0 0.0
    %3742 = vmatpush.msra.mxu0 %v3726
    %3743 = vmatpush.msra.mxu0 %v3719
    %3744 = vmatmul.f32.gmra.mxu0 %v3724
    %v3745 = vpop.f32.mrf.mxu0
    %v3746 = vadd.f32 0.0, %v3745
    %3747 = vdwg.mxu0
    %3749 = vrot.lane.b32.xlu0 %v2994, 32
    %v3750 = vpop.permute.xlu0 %3749
    %v3753 = vsel %vm125, %v3705, 0
    %v3756 = vsel %vm125, %v3746, 0
    %3758 = vmatpush.msra.mxu0 0.0
    %3759 = vmatpush.msra.mxu0 0.0
    %3760 = vmatpush.msra.mxu0 0.0
    %3761 = vmatpush.msra.mxu0 0.0
    %3762 = vmatpush.msra.mxu0 0.0
    %3763 = vmatpush.msra.mxu0 0.0
    %3764 = vmatpush.msra.mxu0 0.0
    %3765 = vmatpush.msra.mxu0 0.0
    %3766 = vmatpush.msra.mxu0 0.0
    %3767 = vmatpush.msra.mxu0 0.0
    %3768 = vmatpush.msra.mxu0 0.0
    %3769 = vmatpush.msra.mxu0 0.0
    %3770 = vmatpush.msra.mxu0 0.0
    %3771 = vmatpush.msra.mxu0 0.0
    %3772 = vmatpush.msra.mxu0 0.0
    %3773 = vmatpush.msra.mxu0 %v3750
    %3774 = vmatmul.f32.gmra.mxu0 %v3753
    %v3775 = vpop.f32.mrf.mxu0
    %v3776 = vadd.f32 0.0, %v3775
    %3777 = vmatmul.f32.gmra.mxu0 %v3756
    %v3778 = vpop.f32.mrf.mxu0
    %v3779 = vadd.f32 0.0, %v3778
    %3780 = vdwg.mxu0
    %3783 = vrot.lane.b32.xlu0 %v3776, 64
    %v3784 = vpop.permute.xlu0 %3783
    %3785 = vrot.lane.b32.xlu0 %v3779, 64
    %v3786 = vpop.permute.xlu0 %3785
    %v3789 = vadd.f32 %v3639, %v3784
    %v3790 = vadd.f32 %v3640, %v3786
    %v3791 = vsel %vm1299, %v3294, -inf
    %3792 = vmax.xlane.f32.xlu0 %v3791
    %v3793 = vpop.xlane.xlu0 %3792
    %v3794 = vsel %vm1299, %v3337, -inf
    %3795 = vmax.xlane.f32.xlu0 %v3794
    %v3796 = vpop.xlane.xlu0 %3795
    %v3797 = vsub.f32 %v3294, %v3793
    %v3798 = vsub.f32 %v3337, %v3796
    %v3799 = vmul.f32 %v3797, 1.442695
    %v3800 = vpow.pop %v3799
    %v3801 = vmul.f32 %v3798, 1.442695
    %v3802 = vpow.pop %v3801
    %v3803 = vsel %vm1299, %v3800, 0.0
    %3804 = vadd.xlane.f32.xlu0 %v3803
    %v3805 = vpop.xlane.xlu0 %3804
    %v3806 = vsel %vm1299, %v3802, 0.0
    %3807 = vadd.xlane.f32.xlu0 %v3806
    %v3808 = vpop.xlane.xlu0 %3807
    %v3809 = vrcp.pop %v3805
    %v3810 = vrcp.pop %v3808
    %v3811 = vmul.f32 %v3800, %v3809
    %v3812 = vmul.f32 %v3802, %v3810
    %s3813 = scalar_lea.vmem [#allocation2], 24
    %3814 = vst.msk [vmem:[%s3813] sm:$0xff] %vm1299, %v3811
    %3815 = vst.msk [vmem:[%s3813 + $0x20] sm:$0xff] %vm1299, %v3812
    %3816 = vst [vmem:[#allocation1] ss:$4 sm:$0xff] %v71
    %s3817 = scalar_lea.vmem [#allocation1], 1
    %3818 = vst [vmem:[%s3817] ss:$4 sm:$0xff] %v952
    %s3819 = scalar_lea.vmem [#allocation1], 2
    %3820 = vst [vmem:[%s3819] ss:$4 sm:$0xff] %v953
    %s3821 = scalar_lea.vmem [#allocation1], 3
    %3822 = vst [vmem:[%s3821] ss:$4 sm:$0xff] %v954
    %s3823 = scalar_lea.vmem [#allocation1], 32
    %3824 = vst [vmem:[%s3823] ss:$4 sm:$0xff] %v74
    %v3825 = vld.sshfl [vmem:[#allocation1] sm:$0xff pattern:$0x73625140]
    %v3826 = vld.sshfl [vmem:[#allocation1 + $0x20] sm:$0xff pattern:$0x73625140]
    %3827 = vrot.lane.b32.xlu0 %v3825, 8
    %v3828 = vpop.permute.xlu0 %3827
    %3829 = vrot.lane.b32.xlu0 %v3826, 8
    %v3830 = vpop.permute.xlu0 %3829
    %v3833 = vsel %vm1299, %v3811, 0
    %v3835 = vsel %vm1341, %v3830, 0
    %3837 = vmatpush.msra.mxu0 0.0
    %3838 = vmatpush.msra.mxu0 0.0
    %3839 = vmatpush.msra.mxu0 0.0
    %3840 = vmatpush.msra.mxu0 0.0
    %3841 = vmatpush.msra.mxu0 0.0
    %3842 = vmatpush.msra.mxu0 0.0
    %3843 = vmatpush.msra.mxu0 0.0
    %3844 = vmatpush.msra.mxu0 0.0
    %3845 = vmatpush.msra.mxu0 0.0
    %3846 = vmatpush.msra.mxu0 0.0
    %3847 = vmatpush.msra.mxu0 0.0
    %3848 = vmatpush.msra.mxu0 0.0
    %3849 = vmatpush.msra.mxu0 0.0
    %3850 = vmatpush.msra.mxu0 0.0
    %3851 = vmatpush.msra.mxu0 %v3835
    %3852 = vmatpush.msra.mxu0 %v3828
    %3853 = vmatmul.f32.gmra.mxu0 %v3833
    %v3854 = vpop.f32.mrf.mxu0
    %v3855 = vadd.f32 0.0, %v3854
    %3856 = vdwg.mxu0
    %3857 = vst [vmem:[#allocation1] ss:$4 sm:$0xff] %v955
    %s3858 = scalar_lea.vmem [#allocation1], 1
    %3859 = vst [vmem:[%s3858] ss:$4 sm:$0xff] %v956
    %s3860 = scalar_lea.vmem [#allocation1], 2
    %3861 = vst [vmem:[%s3860] ss:$4 sm:$0xff] %v957
    %s3862 = scalar_lea.vmem [#allocation1], 3
    %3863 = vst [vmem:[%s3862] ss:$4 sm:$0xff] %v77
    %s3864 = scalar_lea.vmem [#allocation1], 32
    %3865 = vst [vmem:[%s3864] ss:$4 sm:$0xff] %v958
    %v3866 = vld.sshfl [vmem:[#allocation1] sm:$0xff pattern:$0x73625140]
    %v3867 = vld.sshfl [vmem:[#allocation1 + $0x20] sm:$0xff pattern:$0x73625140]
    %3868 = vrot.lane.b32.xlu0 %v3866, 8
    %v3869 = vpop.permute.xlu0 %3868
    %3870 = vrot.lane.b32.xlu0 %v3867, 8
    %v3871 = vpop.permute.xlu0 %3870
    %v3874 = vsel %vm1299, %v3812, 0
    %v3876 = vsel %vm1341, %v3871, 0
    %3878 = vmatpush.msra.mxu0 0.0
    %3879 = vmatpush.msra.mxu0 0.0
    %3880 = vmatpush.msra.mxu0 0.0
    %3881 = vmatpush.msra.mxu0 0.0
    %3882 = vmatpush.msra.mxu0 0.0
    %3883 = vmatpush.msra.mxu0 0.0
    %3884 = vmatpush.msra.mxu0 0.0
    %3885 = vmatpush.msra.mxu0 0.0
    %3886 = vmatpush.msra.mxu0 0.0
    %3887 = vmatpush.msra.mxu0 0.0
    %3888 = vmatpush.msra.mxu0 0.0
    %3889 = vmatpush.msra.mxu0 0.0
    %3890 = vmatpush.msra.mxu0 0.0
    %3891 = vmatpush.msra.mxu0 0.0
    %3892 = vmatpush.msra.mxu0 %v3876
    %3893 = vmatpush.msra.mxu0 %v3869
    %3894 = vmatmul.f32.gmra.mxu0 %v3874
    %v3895 = vpop.f32.mrf.mxu0
    %v3896 = vadd.f32 0.0, %v3895
    %3897 = vdwg.mxu0
    %3899 = vrot.lane.b32.xlu0 %v2995, 32
    %v3900 = vpop.permute.xlu0 %3899
    %v3903 = vsel %vm125, %v3855, 0
    %v3906 = vsel %vm125, %v3896, 0
    %3908 = vmatpush.msra.mxu0 0.0
    %3909 = vmatpush.msra.mxu0 0.0
    %3910 = vmatpush.msra.mxu0 0.0
    %3911 = vmatpush.msra.mxu0 0.0
    %3912 = vmatpush.msra.mxu0 0.0
    %3913 = vmatpush.msra.mxu0 0.0
    %3914 = vmatpush.msra.mxu0 0.0
    %3915 = vmatpush.msra.mxu0 0.0
    %3916 = vmatpush.msra.mxu0 0.0
    %3917 = vmatpush.msra.mxu0 0.0
    %3918 = vmatpush.msra.mxu0 0.0
    %3919 = vmatpush.msra.mxu0 0.0
    %3920 = vmatpush.msra.mxu0 0.0
    %3921 = vmatpush.msra.mxu0 0.0
    %3922 = vmatpush.msra.mxu0 0.0
    %3923 = vmatpush.msra.mxu0 %v3900
    %3924 = vmatmul.f32.gmra.mxu0 %v3903
    %v3925 = vpop.f32.mrf.mxu0
    %v3926 = vadd.f32 0.0, %v3925
    %3927 = vmatmul.f32.gmra.mxu0 %v3906
    %v3928 = vpop.f32.mrf.mxu0
    %v3929 = vadd.f32 0.0, %v3928
    %3930 = vdwg.mxu0
    %3933 = vrot.lane.b32.xlu0 %v3926, 64
    %v3934 = vpop.permute.xlu0 %3933
    %3935 = vrot.lane.b32.xlu0 %v3929, 64
    %v3936 = vpop.permute.xlu0 %3935
    %v3939 = vadd.f32 %v3789, %v3934
    %v3940 = vadd.f32 %v3790, %v3936
    %3943 = vrot.lane.b32.xlu0 %v3939, 64
    %v3944 = vpop.permute.xlu0 %3943
    %3945 = vrot.lane.b32.xlu0 %v3940, 64
    %v3946 = vpop.permute.xlu0 %3945
    %v3949 = vadd.f32 %v2935, %v3944
    %v3950 = vadd.f32 %v2936, %v3946
    %v3951 = vsel %vm43, %v3949, 0.0
    %3952 = vadd.xlane.f32.xlu0 %v3951
    %v3953 = vpop.xlane.xlu0 %3952
    %v3954 = vsel %vm43, %v3950, 0.0
    %3955 = vadd.xlane.f32.xlu0 %v3954
    %v3956 = vpop.xlane.xlu0 %3955
    %v3957 = vmul.f32 %v3953, %v838
    %v3958 = vmul.f32 %v3956, %v838
    %v3959 = vsub.f32 %v3949, %v3957
    %v3960 = vsub.f32 %v3950, %v3958
    %v3961 = vmul.f32 %v3959, %v3959
    %v3962 = vmul.f32 %v3960, %v3960
    %v3963 = vsel %vm43, %v3961, 0.0
    %3964 = vadd.xlane.f32.xlu0 %v3963
    %v3965 = vpop.xlane.xlu0 %3964
    %v3966 = vsel %vm43, %v3962, 0.0
    %3967 = vadd.xlane.f32.xlu0 %v3966
    %v3968 = vpop.xlane.xlu0 %3967
    %v3969 = vmul.f32 %v3965, %v838
    %v3970 = vmul.f32 %v3968, %v838
    %v3971 = vadd.f32 %v3969, 1e-05
    %v3972 = vadd.f32 %v3970, 1e-05
    %v3973 = vrsqrt.pop %v3971
    %v3974 = vmul.f32 %v3973, %v3971
    %v3975 = vmul.f32 %v3974, %v3973
    %v3976 = vmul.f32 0.5, %v3975
    %v3977 = vsub.f32 1.5, %v3976
    %v3978 = vmul.f32 %v3973, %v3977
    %vm3979 = vweird.f32 %v3971
    %vm3980 = vweird.f32 %v3973
    %vm3981 = vmor %vm3979, %vm3980
    %v3982 = vsel %vm3981, %v3973, %v3978
    %v3983 = vrsqrt.pop %v3972
    %v3984 = vmul.f32 %v3983, %v3972
    %v3985 = vmul.f32 %v3984, %v3983
    %v3986 = vmul.f32 0.5, %v3985
    %v3987 = vsub.f32 1.5, %v3986
    %v3988 = vmul.f32 %v3983, %v3987
    %vm3989 = vweird.f32 %v3972
    %vm3990 = vweird.f32 %v3983
    %vm3991 = vmor %vm3989, %vm3990
    %v3992 = vsel %vm3991, %v3983, %v3988
    %v3993 = vmul.f32 %v3959, %v3982
    %v3994 = vmul.f32 %v3960, %v3992
    %v3995 = vmul.f32 %v3993, %v2928
    %v3996 = vmul.f32 %v3994, %v2928
    %v3997 = vadd.f32 %v3995, %v2933
    %v3998 = vadd.f32 %v3996, %v2933
    %v3999 = vld [vmem:[%s3 + $0x20] sm:$0xff]
    %v4000 = vld [vmem:[%s3 + $0x50] sm:$0xff]
    %v4001 = vld [vmem:[%s3 + $0x80] sm:$0xff]
    %v4002 = vld [vmem:[%s3 + $0xb0] sm:$0xff]
    %v4003 = vld [vmem:[%s5 + $0x4] sm:$0x3]
    %v4005 = vperm.slane %v4003, 0
    %v4006 = vperm.slane %v4003, 1
    %4007 = vrot.lane.b32.xlu0 %v4005, 32
    %v4008 = vpop.permute.xlu0 %4007
    %4009 = vrot.lane.b32.xlu0 %v4006, 32
    %v4010 = vpop.permute.xlu0 %4009
    %v4011 = vsel %vm43, %v4008, %v4010
    %v4014 = vsel %vm43, %v3997, 0
    %v4017 = vsel %vm43, %v3998, 0
    %4019 = vmatpush.msra.mxu0 0.0
    %4020 = vmatpush.msra.mxu0 0.0
    %4021 = vmatpush.msra.mxu0 0.0
    %4022 = vmatpush.msra.mxu0 0.0
    %4023 = vmatpush.msra.mxu0 0.0
    %4024 = vmatpush.msra.mxu0 0.0
    %4025 = vmatpush.msra.mxu0 0.0
    %4026 = vmatpush.msra.mxu0 0.0
    %4027 = vmatpush.msra.mxu0 0.0
    %4028 = vmatpush.msra.mxu0 0.0
    %4029 = vmatpush.msra.mxu0 0.0
    %4030 = vmatpush.msra.mxu0 0.0
    %4031 = vmatpush.msra.mxu0 %v4002
    %4032 = vmatpush.msra.mxu0 %v4001
    %4033 = vmatpush.msra.mxu0 %v4000
    %4034 = vmatpush.msra.mxu0 %v3999
    %4035 = vmatmul.f32.gmra.mxu0 %v4014
    %v4036 = vpop.f32.mrf.mxu0
    %v4037 = vadd.f32 %v4011, %v4036
    %4038 = vmatmul.f32.gmra.mxu0 %v4017
    %v4039 = vpop.f32.mrf.mxu0
    %v4040 = vadd.f32 %v4011, %v4039
    %4041 = vdwg.mxu0
    %v4042 = vmul.f32 %v4037, 0.5
    %v4043 = vmul.f32 %v4040, 0.5
    %v4044 = vmul.f32 %v4037, 0.70710677
    %v4045 = vmul.f32 %v4040, 0.70710677
    %vm4046 = vcmp.ge.f32.partialorder %v4044, 0.0
    %vm4047 = vcmp.ge.f32.partialorder %v4045, 0.0
    %v4048 = vsel %vm4046, 1.0, -1.0
    %v4049 = vsel %vm4047, 1.0, -1.0
    %v4050 = vmul.f32 %v4044, %v4048
    %v4051 = vmul.f32 %v4045, %v4049
    %v4052 = vmul.f32 %v4050, 0.3275911
    %v4053 = vmul.f32 %v4051, 0.3275911
    %v4054 = vadd.f32 %v4052, 1.0
    %v4055 = vadd.f32 %v4053, 1.0
    %v4056 = vrcp.pop %v4054
    %v4057 = vrcp.pop %v4055
    %v4058 = vmul.f32 %v4056, 1.0614054
    %v4059 = vmul.f32 %v4057, 1.0614054
    %v4060 = vadd.f32 %v4058, -1.4531521
    %v4061 = vadd.f32 %v4059, -1.4531521
    %v4062 = vmul.f32 %v4060, %v4056
    %v4063 = vmul.f32 %v4061, %v4057
    %v4064 = vadd.f32 %v4062, 1.4214138
    %v4065 = vadd.f32 %v4063, 1.4214138
    %v4066 = vmul.f32 %v4064, %v4056
    %v4067 = vmul.f32 %v4065, %v4057
    %v4068 = vadd.f32 %v4066, -0.28449672
    %v4069 = vadd.f32 %v4067, -0.28449672
    %v4070 = vmul.f32 %v4068, %v4056
    %v4071 = vmul.f32 %v4069, %v4057
    %v4072 = vadd.f32 %v4070, 0.2548296
    %v4073 = vadd.f32 %v4071, 0.2548296
    %v4074 = vmul.f32 %v4072, %v4056
    %v4075 = vmul.f32 %v4073, %v4057
    %v4076 = vsub.f32 0.0, %v4050
    %v4077 = vsub.f32 0.0, %v4051
    %v4078 = vmul.f32 %v4076, %v4050
    %v4079 = vmul.f32 %v4077, %v4051
    %v4080 = vmul.f32 %v4078, 1.442695
    %v4081 = vpow.pop %v4080
    %v4082 = vmul.f32 %v4079, 1.442695
    %v4083 = vpow.pop %v4082
    %v4084 = vmul.f32 %v4074, %v4081
    %v4085 = vmul.f32 %v4075, %v4083
    %v4086 = vsub.f32 1.0, %v4084
    %v4087 = vsub.f32 1.0, %v4085
    %v4088 = vmul.f32 %v4048, %v4086
    %v4089 = vmul.f32 %v4049, %v4087
    %v4090 = vadd.f32 %v4088, 1.0
    %v4091 = vadd.f32 %v4089, 1.0
    %v4092 = vmul.f32 %v4042, %v4090
    %v4093 = vmul.f32 %v4043, %v4091
    %v4094 = vld [vmem:[%s4] sm:$0xff]
    %v4095 = vld [vmem:[%s4 + $0x8] sm:$0xff]
    %v4096 = vld [vmem:[%s4 + $0x10] sm:$0xff]
    %v4097 = vld [vmem:[%s4 + $0x18] sm:$0xff]
    %v4098 = vld [vmem:[%s4 + $0x20] sm:$0xff]
    %v4099 = vld [vmem:[%s4 + $0x28] sm:$0xff]
    %v4100 = vld [vmem:[%s4 + $0x30] sm:$0xff]
    %v4101 = vld [vmem:[%s4 + $0x38] sm:$0xff]
    %v4102 = vld [vmem:[%s5 + $0x5] sm:$0x1]
    %v4104 = vperm.slane %v4102, 0
    %4113 = vrot.lane.b32.xlu0 %v4094, 96
    %v4114 = vpop.permute.xlu0 %4113
    %4115 = vrot.lane.b32.xlu0 %v4095, 96
    %v4116 = vpop.permute.xlu0 %4115
    %4117 = vrot.lane.b32.xlu0 %v4096, 96
    %v4118 = vpop.permute.xlu0 %4117
    %4119 = vrot.lane.b32.xlu0 %v4097, 96
    %v4120 = vpop.permute.xlu0 %4119
    %4121 = vrot.lane.b32.xlu0 %v4098, 96
    %v4122 = vpop.permute.xlu0 %4121
    %4123 = vrot.lane.b32.xlu0 %v4099, 96
    %v4124 = vpop.permute.xlu0 %4123
    %4125 = vrot.lane.b32.xlu0 %v4100, 96
    %v4126 = vpop.permute.xlu0 %4125
    %4127 = vrot.lane.b32.xlu0 %v4101, 96
    %v4128 = vpop.permute.xlu0 %4127
    %4137 = vrot.lane.b32.xlu0 %v4104, 32
    %v4138 = vpop.permute.xlu0 %4137
    %v4141 = vsel %vm2051, %v4092, 0
    %v4144 = vsel %vm2051, %v4093, 0
    %4146 = vmatpush.msra.mxu0 0.0
    %4147 = vmatpush.msra.mxu0 0.0
    %4148 = vmatpush.msra.mxu0 0.0
    %4149 = vmatpush.msra.mxu0 0.0
    %4150 = vmatpush.msra.mxu0 0.0
    %4151 = vmatpush.msra.mxu0 0.0
    %4152 = vmatpush.msra.mxu0 0.0
    %4153 = vmatpush.msra.mxu0 0.0
    %4154 = vmatpush.msra.mxu0 %v4128
    %4155 = vmatpush.msra.mxu0 %v4126
    %4156 = vmatpush.msra.mxu0 %v4124
    %4157 = vmatpush.msra.mxu0 %v4122
    %4158 = vmatpush.msra.mxu0 %v4120
    %4159 = vmatpush.msra.mxu0 %v4118
    %4160 = vmatpush.msra.mxu0 %v4116
    %4161 = vmatpush.msra.mxu0 %v4114
    %4162 = vmatmul.f32.gmra.mxu0 %v4141
    %v4163 = vpop.f32.mrf.mxu0
    %v4164 = vadd.f32 %v4138, %v4163
    %4165 = vmatmul.f32.gmra.mxu0 %v4144
    %v4166 = vpop.f32.mrf.mxu0
    %v4167 = vadd.f32 %v4138, %v4166
    %4168 = vdwg.mxu0
    %v4169 = vadd.f32 %v3997, %v4164
    %v4170 = vadd.f32 %v3998, %v4167
    %v4171 = vsel %vm43, %v4169, 0.0
    %4172 = vadd.xlane.f32.xlu0 %v4171
    %v4173 = vpop.xlane.xlu0 %4172
    %v4174 = vsel %vm43, %v4170, 0.0
    %4175 = vadd.xlane.f32.xlu0 %v4174
    %v4176 = vpop.xlane.xlu0 %4175
    %v4177 = vmul.f32 %v4173, %v838
    %v4178 = vmul.f32 %v4176, %v838
    %v4179 = vsub.f32 %v4169, %v4177
    %v4180 = vsub.f32 %v4170, %v4178
    %v4181 = vmul.f32 %v4179, %v4179
    %v4182 = vmul.f32 %v4180, %v4180
    %v4183 = vsel %vm43, %v4181, 0.0
    %4184 = vadd.xlane.f32.xlu0 %v4183
    %v4185 = vpop.xlane.xlu0 %4184
    %v4186 = vsel %vm43, %v4182, 0.0
    %4187 = vadd.xlane.f32.xlu0 %v4186
    %v4188 = vpop.xlane.xlu0 %4187
    %v4189 = vmul.f32 %v4185, %v838
    %v4190 = vmul.f32 %v4188, %v838
    %v4191 = vadd.f32 %v4189, 1e-05
    %v4192 = vadd.f32 %v4190, 1e-05
    %v4193 = vrsqrt.pop %v4191
    %v4194 = vmul.f32 %v4193, %v4191
    %v4195 = vmul.f32 %v4194, %v4193
    %v4196 = vmul.f32 0.5, %v4195
    %v4197 = vsub.f32 1.5, %v4196
    %v4198 = vmul.f32 %v4193, %v4197
    %vm4199 = vweird.f32 %v4191
    %vm4200 = vweird.f32 %v4193
    %vm4201 = vmor %vm4199, %vm4200
    %v4202 = vsel %vm4201, %v4193, %v4198
    %v4203 = vrsqrt.pop %v4192
    %v4204 = vmul.f32 %v4203, %v4192
    %v4205 = vmul.f32 %v4204, %v4203
    %v4206 = vmul.f32 0.5, %v4205
    %v4207 = vsub.f32 1.5, %v4206
    %v4208 = vmul.f32 %v4203, %v4207
    %vm4209 = vweird.f32 %v4192
    %vm4210 = vweird.f32 %v4203
    %vm4211 = vmor %vm4209, %vm4210
    %v4212 = vsel %vm4211, %v4203, %v4208
    %v4213 = vmul.f32 %v4179, %v4202
    %v4214 = vmul.f32 %v4180, %v4212
    %v4215 = vmul.f32 %v4213, %v2928
    %v4216 = vmul.f32 %v4214, %v2928
    %v4217 = vadd.f32 %v4215, %v2933
    %v4218 = vadd.f32 %v4216, %v2933
    %v4219 = vld [vmem:[%s3 + $0x28] sm:$0xff]
    %v4220 = vld [vmem:[%s3 + $0x58] sm:$0xff]
    %v4221 = vld [vmem:[%s3 + $0x88] sm:$0xff]
    %v4222 = vld [vmem:[%s3 + $0xb8] sm:$0xff]
    %v4223 = vld [vmem:[%s5 + $0x6] sm:$0x3]
    %v4225 = vperm.slane %v4223, 0
    %v4226 = vperm.slane %v4223, 1
    %4227 = vrot.lane.b32.xlu0 %v4225, 64
    %v4228 = vpop.permute.xlu0 %4227
    %4229 = vrot.lane.b32.xlu0 %v4226, 64
    %v4230 = vpop.permute.xlu0 %4229
    %v4231 = vsel %vm2051, %v4228, %v4230
    %v4234 = vsel %vm43, %v4217, 0
    %v4237 = vsel %vm43, %v4218, 0
    %4239 = vmatpush.msra.mxu0 0.0
    %4240 = vmatpush.msra.mxu0 0.0
    %4241 = vmatpush.msra.mxu0 0.0
    %4242 = vmatpush.msra.mxu0 0.0
    %4243 = vmatpush.msra.mxu0 0.0
    %4244 = vmatpush.msra.mxu0 0.0
    %4245 = vmatpush.msra.mxu0 0.0
    %4246 = vmatpush.msra.mxu0 0.0
    %4247 = vmatpush.msra.mxu0 0.0
    %4248 = vmatpush.msra.mxu0 0.0
    %4249 = vmatpush.msra.mxu0 0.0
    %4250 = vmatpush.msra.mxu0 0.0
    %4251 = vmatpush.msra.mxu0 %v4222
    %4252 = vmatpush.msra.mxu0 %v4221
    %4253 = vmatpush.msra.mxu0 %v4220
    %4254 = vmatpush.msra.mxu0 %v4219
    %4255 = vmatmul.f32.gmra.mxu0 %v4234
    %v4256 = vpop.f32.mrf.mxu0
    %v4257 = vadd.f32 %v4231, %v4256
    %4258 = vmatmul.f32.gmra.mxu0 %v4237
    %v4259 = vpop.f32.mrf.mxu0
    %v4260 = vadd.f32 %v4231, %v4259
    %4261 = vdwg.mxu0
    %4262 = vst [vmem:[%s6] sm:$0xff] %v4257
    %4263 = vst [vmem:[%s6 + $0x8] sm:$0xff] %v4260
    // Predicated region
    $region26: #{decoder_forward.1} parent=1 // pred_check
      _
    $region27: #{decoder_forward.1} parent=1 // pred_check_branch
      %4265 = sbr.rel (0) target = $region29
    $region28: #{decoder_forward.1} parent=1 // pred_region
      _
    $region29: #{decoder_forward.1} parent=1 // pred_fallthru
      _
    // Predicated region
    $region30: #{decoder_forward.1} parent=1 // pred_check
      _
    $region31: #{decoder_forward.1} parent=1 // pred_check_branch
      %4267 = sbr.rel (0) target = $region33
    $region32: #{decoder_forward.1} parent=1 // pred_region
      %4269 = vsyncadd [#allocation3], 0
      %s4270 = sshll.u32 [#allocation2], 4
      %s4271 = int_to_ptr.vmem [resolvable:$true] %s4270
      %s4272 = sshll.u32 %s7, 4
      %s4273 = int_to_ptr.hbm [resolvable:$true] %s4272
      %4278 = dma.vmem_to_hbm [thread:$0]  %s4271, 1024, %s4273, [#allocation3], 128, 128, 8
    $region33: #{decoder_forward.1} parent=1 // pred_fallthru
      _
    // Predicated region
    $region34: #{decoder_forward.1} parent=1 // pred_check
      _
    $region35: #{decoder_forward.1} parent=1 // pred_check_branch
      %4280 = sbr.rel (0) target = $region37
    $region36: #{decoder_forward.1} parent=1 // pred_region
      _
    $region37: #{decoder_forward.1} parent=1 // pred_fallthru
      _
    // Predicated region
    $region38: #{decoder_forward.1} parent=1 // pred_check
      _
    $region39: #{decoder_forward.1} parent=1 // pred_check_branch
      %4282 = sbr.rel (0) target = $region41
    $region40: #{decoder_forward.1} parent=1 // pred_region
      %4284 = dma.done [#allocation3], 1024
    $region41: #{decoder_forward.1} parent=1 // pred_fallthru
      _
    %4285 = vsyncpa [#allocation3], 1

</llo_original>
